<compile_context>
chip_gen: v5e
topology: v5e:2x2
jax: 0.10.0
libtpu: 0.0.40
codegen_flags: <defaults>
</compile_context>

<pallas_src>
import functools

import jax
import jax.numpy as jnp
import numpy as np
from jax.experimental import pallas as pl
from jax.experimental.pallas import tpu as pltpu


# ----------------------------- fused kernel ----------------------------------


def region_head_kernel(p_ref, w1_ref, bias1_ref, w2_ref, b2_ref, tab_ref,
                       coord_ref, out_ref, *, n_classes, silu_bf16):
    """Fused 3x3 conv (+folded BN) + SiLU + 1x1 conv + YOLO box decode.

    One grid step processes `row_tile` output cells; all intermediates stay in
    VMEM.  p_ref holds lane-dense im2col patches so the 3x3 conv is a single
    MXU matmul.
    """
    cpad = out_ref.shape[-1]

    # ---- 3x3 conv (+folded BN scale): ONE bf16 MXU matmul, f32 accumulate ---
    acc = jnp.dot(p_ref[...], w1_ref[...], preferred_element_type=jnp.float32)
    y = acc + bias1_ref[...]                         # folded BN shift
    if silu_bf16:
        y = y.astype(jnp.bfloat16)                   # bf16 EUP/VPU (v6e/v7x)
    feat = y * jax.nn.sigmoid(y)                     # SiLU
    feat = feat.astype(jnp.bfloat16)

    # ---- 1x1 conv (output channels zero-padded to cpad lanes) ----
    logits = jnp.dot(feat, w2_ref[...],
                     preferred_element_type=jnp.float32) + b2_ref[...]

    a_sig = tab_ref[0:1, :]     # 1/W, 1/H on bx/by lanes; 1 on obj lane
    a_exp = tab_ref[1:2, :]     # anchor w / h on bw/bh lanes
    cmask = tab_ref[2:3, :]     # 1.0 on class lanes
    emask = tab_ref[3:4, :]     # 1.0 on lanes whose exp is actually consumed

    sig = jax.nn.sigmoid(logits)                     # EUP

    # ---- numerically-stable per-anchor softmax shift (lane-window max) ----
    # Class lanes of one anchor sit within +-(n_classes-1) lanes of each other
    # and >= 6 lanes away from the next anchor's classes (5 box/obj lanes gap),
    # so a centred sliding-window max/sum equals the per-anchor class max/sum.
    # (Validity asserted in the wrapper: n_classes <= 6.)
    neg = jnp.float32(-1e30)
    masked = jnp.where(cmask > 0, logits, neg)
    gmax = masked
    for s in range(1, n_classes):                    # static unrolled rolls (XLU)
        gmax = jnp.maximum(gmax, pltpu.roll(masked, s, 1))
        gmax = jnp.maximum(gmax, pltpu.roll(masked, cpad - s, 1))

    shift = jnp.where(cmask > 0, gmax, 0.0)          # 0 on bw/bh lanes -> raw exp
    arg = jnp.where(emask > 0, logits - shift, 0.0)  # keep unused lanes finite
    ex = jnp.exp(arg)                                # ONE EUP exp pass

    ex_cls = ex * cmask
    denom = ex_cls
    for s in range(1, n_classes):
        denom = denom + pltpu.roll(ex_cls, s, 1)
        denom = denom + pltpu.roll(ex_cls, cpad - s, 1)
    cls_part = ex_cls * pl.reciprocal(denom + (1.0 - cmask), approx=True)

    # one lane-dense decoded slab; constant cell-coordinate term precomputed
    out_ref[...] = a_sig * sig + a_exp * ex + cls_part + coord_ref[...]


# ----------------------------- wrapper ---------------------------------------


def region_output_layer(x_nchw, params, *, n_obj, n_classes,
                        row_tile=None, silu_bf16=True):
    """NCHW input -> (boxes, objectiviness, classes), matching the PyTorch module."""
    x = jnp.transpose(x_nchw, (0, 2, 3, 1)).astype(jnp.float32)   # NCHW -> NHWC
    B, H, W, Cin = x.shape
    hidden = 512
    d = 5 + n_classes
    cout = n_obj * d
    cpad = ((cout + 127) // 128) * 128              # lane-dense padded channels
    HW = H * W
    K = 9 * Cin
    Kp = ((K + 127) // 128) * 128                   # lane-dense im2col depth

    # Roll-window softmax validity (per review correctness concern).
    assert n_classes <= 6, "lane-window softmax requires n_classes <= 6"
    assert cout <= cpad - (n_classes - 1), "class window would wrap into data"
    # TODO(synk): n_classes > 6 needs a group-membership-matmul softmax path.

    # Per-step row tile: keeps VMEM bounded for large feature maps (v7x 64 MiB)
    # and guarantees >= 2 grid steps so both v7x TensorCores get work.
    if row_tile is None:
        row_tile = min(HW, 2048)
        if B == 1 and HW % 16 == 0 and HW >= 16:
            row_tile = HW // 2
    assert HW % row_tile == 0 and row_tile % 8 == 0, "bad row_tile"
    tiles = HW // row_tile

    # ---- parameter prep (trace-time glue) ----
    # Fold eval-mode BatchNorm: scale into conv1 weights, shift into a bias.
    w1 = params["w1"] * params["bn_scale"].reshape(1, 1, 1, hidden)
    w1 = w1.reshape(K, hidden)
    w1 = jnp.pad(w1, ((0, Kp - K), (0, 0))).astype(jnp.bfloat16)
    bias1 = params["bn_shift"].reshape(1, hidden).astype(jnp.float32)

    w2p = jnp.pad(params["w2"], ((0, 0), (0, cpad - cout))).astype(jnp.bfloat16)
    b2p = jnp.pad(params["b2"], (0, cpad - cout)).reshape(1, cpad).astype(jnp.float32)

    # Per-output-channel decode coefficient tables, stacked to (4, cpad).
    c = jnp.arange(cpad)
    j = c % d
    ai = jnp.minimum(c // d, n_obj - 1)
    valid = c < cout
    a_sig = jnp.where(valid & (j == 0), 1.0 / W, 0.0) \
        + jnp.where(valid & (j == 1), 1.0 / H, 0.0) \
        + jnp.where(valid & (j == 4), 1.0, 0.0)
    a_exp = jnp.where(valid & (j == 2), params["anchors"][ai, 0], 0.0) \
        + jnp.where(valid & (j == 3), params["anchors"][ai, 1], 0.0)
    cmask = jnp.where(valid & (j >= 5), 1.0, 0.0)
    emask = jnp.where(valid & ((j == 2) | (j == 3) | (j >= 5)), 1.0, 0.0)
    tables = jnp.stack([a_sig, a_exp, cmask, emask]).astype(jnp.float32)

    # Constant per-cell coordinate term (x/W on bx lanes, y/H on by lanes).
    xs = (jnp.arange(HW) % W).astype(jnp.float32).reshape(HW, 1)
    ys = (jnp.arange(HW) // W).astype(jnp.float32).reshape(HW, 1)
    coord = (jnp.where(valid & (j == 0), xs * (1.0 / W), 0.0)
             + jnp.where(valid & (j == 1), ys * (1.0 / H), 0.0)).astype(jnp.float32)

    # Wrapper-side im2col: lane-dense (B*HW, Kp) bf16 patches for the MXU.
    xp = jnp.pad(x, ((0, 0), (1, 1), (1, 1), (0, 0)))
    patches = jnp.concatenate(
        [xp[:, dy:dy + H, dx:dx + W, :] for dy in range(3) for dx in range(3)],
        axis=-1).reshape(B * HW, K)
    patches = jnp.pad(patches, ((0, 0), (0, Kp - K))).astype(jnp.bfloat16)

    kernel = functools.partial(region_head_kernel,
                               n_classes=n_classes, silu_bf16=silu_bf16)
    dec = pl.pallas_call(
        kernel,
        out_shape=jax.ShapeDtypeStruct((B * HW, cpad), jnp.float32),
        grid=(B, tiles),
        in_specs=[
            pl.BlockSpec((row_tile, Kp), lambda b, r: (b * tiles + r, 0)),
            pl.BlockSpec((Kp, hidden), lambda b, r: (0, 0)),
            pl.BlockSpec((1, hidden), lambda b, r: (0, 0)),
            pl.BlockSpec((hidden, cpad), lambda b, r: (0, 0)),
            pl.BlockSpec((1, cpad), lambda b, r: (0, 0)),
            pl.BlockSpec((4, cpad), lambda b, r: (0, 0)),
            pl.BlockSpec((row_tile, cpad), lambda b, r: (r, 0)),
        ],
        out_specs=pl.BlockSpec((row_tile, cpad), lambda b, r: (b * tiles + r, 0)),
        compiler_params=pltpu.CompilerParams(
            dimension_semantics=("parallel", "parallel"),
            vmem_limit_bytes=32 * 1024 * 1024),
    )(patches, w1, bias1, w2p, b2p, tables, coord)

    dec = dec.reshape(B, H, W, cpad)[..., :cout].reshape(B, H, W, n_obj, d)
    boxes = dec[..., 0:4]
    objectiviness = dec[..., 4]
    classes = dec[..., 5:]
    return boxes, objectiviness, classes


# ----------------------------- pure-JAX reference ----------------------------


def _im2col_3x3(x_nhwc):
    """3x3 / stride 1 / pad 1 patch extraction (reference only)."""
    B, H, W, Cin = x_nhwc.shape
    xp = jnp.pad(x_nhwc, ((0, 0), (1, 1), (1, 1), (0, 0)))
    patches = jnp.concatenate(
        [xp[:, dy:dy + H, dx:dx + W, :] for dy in range(3) for dx in range(3)],
        axis=-1,
    )
    return patches.reshape(B * H * W, 9 * Cin)


def reference(x_nchw, params, *, n_obj, n_classes):
    x = jnp.transpose(x_nchw, (0, 2, 3, 1)).astype(jnp.float32)
    B, H, W, Cin = x.shape
    hidden = 512
    d = 5 + n_classes

    patches = _im2col_3x3(x)
    y = jnp.dot(patches, params["w1"].reshape(9 * Cin, hidden),
                precision=jax.lax.Precision.HIGHEST)
    y = y * params["bn_scale"] + params["bn_shift"]
    y = y * jax.nn.sigmoid(y)
    logits = jnp.dot(y, params["w2"],
                     precision=jax.lax.Precision.HIGHEST) + params["b2"]
    logits = logits.reshape(B, H, W, n_obj, d)

    xs = jnp.arange(W, dtype=jnp.float32).reshape(1, 1, W, 1)
    ys = jnp.arange(H, dtype=jnp.float32).reshape(1, H, 1, 1)
    bx = (xs + jax.nn.sigmoid(logits[..., 0])) / W
    by = (ys + jax.nn.sigmoid(logits[..., 1])) / H
    bw = params["anchors"][:, 0] * jnp.exp(logits[..., 2])
    bh = params["anchors"][:, 1] * jnp.exp(logits[..., 3])
    boxes = jnp.stack([bx, by, bw, bh], axis=-1)
    objectiviness = jax.nn.sigmoid(logits[..., 4])
    classes = jax.nn.softmax(logits[..., 5:], axis=-1)
    return boxes, objectiviness, classes


# ----------------------------- main -------------------------------------------


if __name__ == "__main__":
    # module config: n_objects_per_cell=5 (matches the 5 fixed anchors),
    # n_inputs=4, n_classes=3, SiLU activation.
    B, Cin, H, W = 2, 4, 16, 16
    n_obj, n_classes = 5, 3
    hidden = 512
    cout = n_obj * (5 + n_classes)

    key = jax.random.PRNGKey(0)
    ks = jax.random.split(key, 8)

    x = jax.random.normal(ks[0], (B, Cin, H, W), jnp.float32)

    # deterministic synthetic parameters (shapes per module __init__)
    w1 = 0.05 * jax.random.normal(ks[1], (3, 3, Cin, hidden), jnp.float32)
    gamma = 1.0 + 0.1 * jax.random.normal(ks[2], (hidden,), jnp.float32)
    beta = 0.1 * jax.random.normal(ks[3], (hidden,), jnp.float32)
    run_mean = 0.1 * jax.random.normal(ks[4], (hidden,), jnp.float32)
    run_var = jax.random.uniform(ks[5], (hidden,), jnp.float32, 0.5, 1.5)
    eps = 1e-5
    bn_scale = gamma / jnp.sqrt(run_var + eps)
    bn_shift = beta - run_mean * bn_scale

    w2 = 0.02 * jax.random.normal(ks[6], (hidden, cout), jnp.float32)
    b2 = 0.01 * jax.random.normal(ks[7], (cout,), jnp.float32)

    anchors = jnp.array(
        [[47.0, 43.0], [94.0, 105.0], [210.0, 207.0],
         [361.0, 283.0], [442.0, 425.0]], dtype=jnp.float32) / 512.0

    params = dict(w1=w1, bn_scale=bn_scale, bn_shift=bn_shift,
                  w2=w2, b2=b2, anchors=anchors)

    fwd = jax.jit(functools.partial(region_output_layer,
                                    n_obj=n_obj, n_classes=n_classes))
    boxes, objectiviness, classes = jax.block_until_ready(fwd(x, params))

    rb, ro, rc = reference(x, params, n_obj=n_obj, n_classes=n_classes)
    # bf16 MXU operands + bf16 SiLU + approx reciprocal vs f32 HIGHEST reference.
    np.testing.assert_allclose(np.asarray(boxes), np.asarray(rb), rtol=1e-2, atol=2e-3)
    np.testing.assert_allclose(np.asarray(objectiviness), np.asarray(ro), rtol=1e-2, atol=2e-3)
    np.testing.assert_allclose(np.asarray(classes), np.asarray(rc), rtol=1e-2, atol=2e-3)

    assert boxes.shape == (B, H, W, n_obj, 4)
    assert objectiviness.shape == (B, H, W, n_obj)
    assert classes.shape == (B, H, W, n_obj, n_classes)

    print("KERNEL_OK")
</pallas_src>

<mosaic_0001>
module attributes {stable_mosaic.version = 11 : i64} {
  func.func @region_head_kernel(%arg0: i32, %arg1: i32, %arg2: memref<256x128xbf16, #tpu.memory_space<vmem>>, %arg3: memref<128x512xbf16, #tpu.memory_space<vmem>>, %arg4: memref<1x512xf32, #tpu.memory_space<vmem>>, %arg5: memref<512x128xbf16, #tpu.memory_space<vmem>>, %arg6: memref<1x128xf32, #tpu.memory_space<vmem>>, %arg7: memref<4x128xf32, #tpu.memory_space<vmem>>, %arg8: memref<256x128xf32, #tpu.memory_space<vmem>>, %arg9: memref<256x128xf32, #tpu.memory_space<vmem>>) attributes {dimension_semantics = [#tpu.dimension_semantics<parallel>, #tpu.dimension_semantics<parallel>], iteration_bounds = array<i64: 2, 1>, scalar_prefetch = 0 : i64, scratch_operands = 0 : i64, tpu.core_type = #tpu.core_type<tc>, window_params = [{transform_indices = @transform_0, window_bounds = array<i64: 256, 128>}, {pipeline_mode = #tpu.pipeline_mode<synchronous>, transform_indices = @transform_1, window_bounds = array<i64: 128, 512>}, {pipeline_mode = #tpu.pipeline_mode<synchronous>, transform_indices = @transform_2, window_bounds = array<i64: 1, 512>}, {pipeline_mode = #tpu.pipeline_mode<synchronous>, transform_indices = @transform_3, window_bounds = array<i64: 512, 128>}, {pipeline_mode = #tpu.pipeline_mode<synchronous>, transform_indices = @transform_4, window_bounds = array<i64: 1, 128>}, {pipeline_mode = #tpu.pipeline_mode<synchronous>, transform_indices = @transform_5, window_bounds = array<i64: 4, 128>}, {transform_indices = @transform_6, window_bounds = array<i64: 256, 128>}, {transform_indices = @transform_7, window_bounds = array<i64: 256, 128>}]} {
    %c0 = arith.constant 0 : index
    %c0_0 = arith.constant 0 : index
    %0 = vector.load %arg2[%c0, %c0_0] : memref<256x128xbf16, #tpu.memory_space<vmem>>, vector<256x128xbf16>
    %c0_1 = arith.constant 0 : index
    %c0_2 = arith.constant 0 : index
    %1 = vector.load %arg3[%c0_1, %c0_2] : memref<128x512xbf16, #tpu.memory_space<vmem>>, vector<128x512xbf16>
    %cst = arith.constant dense<0.000000e+00> : vector<256x512xf32>
    %2 = tpu.matmul %0, %1, %cst {dimension_numbers = #tpu.dot_dimension_numbers<[1], [0], [0], [1], [0, 0, 1, 1], [], []>} : vector<256x128xbf16>, vector<128x512xbf16>, vector<256x512xf32> -> vector<256x512xf32>
    %c0_3 = arith.constant 0 : index
    %c0_4 = arith.constant 0 : index
    %3 = vector.load %arg4[%c0_3, %c0_4] : memref<1x512xf32, #tpu.memory_space<vmem>>, vector<1x512xf32>
    %4 = vector.broadcast %3 : vector<1x512xf32> to vector<256x512xf32>
    %5 = arith.addf %2, %4 : vector<256x512xf32>
    %6 = arith.truncf %5 : vector<256x512xf32> to vector<256x512xbf16>
    %7 = arith.negf %6 : vector<256x512xbf16>
    %8 = math.exp %7 : vector<256x512xbf16>
    %cst_5 = arith.constant 1.000000e+00 : bf16
    %9 = vector.broadcast %cst_5 : bf16 to vector<256x512xbf16>
    %10 = arith.addf %9, %8 : vector<256x512xbf16>
    %11 = arith.divf %9, %10 : vector<256x512xbf16>
    %12 = arith.mulf %6, %11 : vector<256x512xbf16>
    %c0_6 = arith.constant 0 : index
    %c0_7 = arith.constant 0 : index
    %13 = vector.load %arg5[%c0_6, %c0_7] : memref<512x128xbf16, #tpu.memory_space<vmem>>, vector<512x128xbf16>
    %cst_8 = arith.constant dense<0.000000e+00> : vector<256x128xf32>
    %14 = tpu.matmul %12, %13, %cst_8 {dimension_numbers = #tpu.dot_dimension_numbers<[1], [0], [0], [1], [0, 0, 1, 1], [], []>} : vector<256x512xbf16>, vector<512x128xbf16>, vector<256x128xf32> -> vector<256x128xf32>
    %c0_9 = arith.constant 0 : index
    %c0_10 = arith.constant 0 : index
    %15 = vector.load %arg6[%c0_9, %c0_10] : memref<1x128xf32, #tpu.memory_space<vmem>>, vector<1x128xf32>
    %16 = vector.broadcast %15 : vector<1x128xf32> to vector<256x128xf32>
    %17 = arith.addf %14, %16 : vector<256x128xf32>
    %c0_11 = arith.constant 0 : index
    %c0_12 = arith.constant 0 : index
    %18 = vector.load %arg7[%c0_11, %c0_12] : memref<4x128xf32, #tpu.memory_space<vmem>>, vector<1x128xf32>
    %c1 = arith.constant 1 : index
    %c0_13 = arith.constant 0 : index
    %19 = vector.load %arg7[%c1, %c0_13] : memref<4x128xf32, #tpu.memory_space<vmem>>, vector<1x128xf32>
    %c2 = arith.constant 2 : index
    %c0_14 = arith.constant 0 : index
    %20 = vector.load %arg7[%c2, %c0_14] : memref<4x128xf32, #tpu.memory_space<vmem>>, vector<1x128xf32>
    %c3 = arith.constant 3 : index
    %c0_15 = arith.constant 0 : index
    %21 = vector.load %arg7[%c3, %c0_15] : memref<4x128xf32, #tpu.memory_space<vmem>>, vector<1x128xf32>
    %22 = arith.negf %17 : vector<256x128xf32>
    %23 = math.exp %22 : vector<256x128xf32>
    %cst_16 = arith.constant 1.000000e+00 : f32
    %24 = vector.broadcast %cst_16 : f32 to vector<256x128xf32>
    %25 = arith.addf %24, %23 : vector<256x128xf32>
    %26 = arith.divf %24, %25 : vector<256x128xf32>
    %cst_17 = arith.constant 0.000000e+00 : f32
    %27 = vector.broadcast %cst_17 : f32 to vector<1x128xf32>
    %28 = arith.cmpf ogt, %20, %27 : vector<1x128xf32>
    %cst_18 = arith.constant -1.000000e+30 : f32
    %29 = vector.shape_cast %28 : vector<1x128xi1> to vector<1x128xi1>
    %30 = vector.broadcast %29 : vector<1x128xi1> to vector<256x128xi1>
    %31 = vector.broadcast %cst_18 : f32 to vector<256x128xf32>
    %32 = arith.select %30, %17, %31 : vector<256x128xi1>, vector<256x128xf32>
    %c1_i32 = arith.constant 1 : i32
    %33 = tpu.dynamic_rotate %32 by %c1_i32 dim 1 : vector<256x128xf32>, i32 -> vector<256x128xf32>
    %34 = arith.maximumf %32, %33 : vector<256x128xf32>
    %c127_i32 = arith.constant 127 : i32
    %35 = tpu.dynamic_rotate %32 by %c127_i32 dim 1 : vector<256x128xf32>, i32 -> vector<256x128xf32>
    %36 = arith.maximumf %34, %35 : vector<256x128xf32>
    %c2_i32 = arith.constant 2 : i32
    %37 = tpu.dynamic_rotate %32 by %c2_i32 dim 1 : vector<256x128xf32>, i32 -> vector<256x128xf32>
    %38 = arith.maximumf %36, %37 : vector<256x128xf32>
    %c126_i32 = arith.constant 126 : i32
    %39 = tpu.dynamic_rotate %32 by %c126_i32 dim 1 : vector<256x128xf32>, i32 -> vector<256x128xf32>
    %40 = arith.maximumf %38, %39 : vector<256x128xf32>
    %cst_19 = arith.constant 0.000000e+00 : f32
    %41 = vector.broadcast %cst_19 : f32 to vector<1x128xf32>
    %42 = arith.cmpf ogt, %20, %41 : vector<1x128xf32>
    %cst_20 = arith.constant 0.000000e+00 : f32
    %43 = vector.shape_cast %42 : vector<1x128xi1> to vector<1x128xi1>
    %44 = vector.broadcast %43 : vector<1x128xi1> to vector<256x128xi1>
    %45 = vector.broadcast %cst_20 : f32 to vector<256x128xf32>
    %46 = arith.select %44, %40, %45 : vector<256x128xi1>, vector<256x128xf32>
    %cst_21 = arith.constant 0.000000e+00 : f32
    %47 = vector.broadcast %cst_21 : f32 to vector<1x128xf32>
    %48 = arith.cmpf ogt, %21, %47 : vector<1x128xf32>
    %49 = arith.subf %17, %46 : vector<256x128xf32>
    %cst_22 = arith.constant 0.000000e+00 : f32
    %50 = vector.shape_cast %48 : vector<1x128xi1> to vector<1x128xi1>
    %51 = vector.broadcast %50 : vector<1x128xi1> to vector<256x128xi1>
    %52 = vector.broadcast %cst_22 : f32 to vector<256x128xf32>
    %53 = arith.select %51, %49, %52 : vector<256x128xi1>, vector<256x128xf32>
    %54 = math.exp %53 : vector<256x128xf32>
    %55 = vector.broadcast %20 : vector<1x128xf32> to vector<256x128xf32>
    %56 = arith.mulf %54, %55 : vector<256x128xf32>
    %c1_i32_23 = arith.constant 1 : i32
    %57 = tpu.dynamic_rotate %56 by %c1_i32_23 dim 1 : vector<256x128xf32>, i32 -> vector<256x128xf32>
    %58 = arith.addf %56, %57 : vector<256x128xf32>
    %c127_i32_24 = arith.constant 127 : i32
    %59 = tpu.dynamic_rotate %56 by %c127_i32_24 dim 1 : vector<256x128xf32>, i32 -> vector<256x128xf32>
    %60 = arith.addf %58, %59 : vector<256x128xf32>
    %c2_i32_25 = arith.constant 2 : i32
    %61 = tpu.dynamic_rotate %56 by %c2_i32_25 dim 1 : vector<256x128xf32>, i32 -> vector<256x128xf32>
    %62 = arith.addf %60, %61 : vector<256x128xf32>
    %c126_i32_26 = arith.constant 126 : i32
    %63 = tpu.dynamic_rotate %56 by %c126_i32_26 dim 1 : vector<256x128xf32>, i32 -> vector<256x128xf32>
    %64 = arith.addf %62, %63 : vector<256x128xf32>
    %cst_27 = arith.constant 1.000000e+00 : f32
    %65 = vector.broadcast %cst_27 : f32 to vector<1x128xf32>
    %66 = arith.subf %65, %20 : vector<1x128xf32>
    %67 = vector.broadcast %66 : vector<1x128xf32> to vector<256x128xf32>
    %68 = arith.addf %64, %67 : vector<256x128xf32>
    %69 = tpu.reciprocal %68 {approx = true} : vector<256x128xf32> -> vector<256x128xf32>
    %70 = arith.mulf %56, %69 : vector<256x128xf32>
    %71 = vector.broadcast %18 : vector<1x128xf32> to vector<256x128xf32>
    %72 = arith.mulf %71, %26 : vector<256x128xf32>
    %73 = vector.broadcast %19 : vector<1x128xf32> to vector<256x128xf32>
    %74 = arith.mulf %73, %54 : vector<256x128xf32>
    %75 = arith.addf %72, %74 : vector<256x128xf32>
    %76 = arith.addf %75, %70 : vector<256x128xf32>
    %c0_28 = arith.constant 0 : index
    %c0_29 = arith.constant 0 : index
    %77 = vector.load %arg8[%c0_28, %c0_29] : memref<256x128xf32, #tpu.memory_space<vmem>>, vector<256x128xf32>
    %78 = arith.addf %76, %77 : vector<256x128xf32>
    %c0_30 = arith.constant 0 : index
    %c0_31 = arith.constant 0 : index
    %79 = vector.load %arg9[%c0_30, %c0_31] : memref<256x128xf32, #tpu.memory_space<vmem>>, vector<256x128xf32>
    tpu.vector_store %arg9[%c0_30, %c0_31], %78 {strides = array<i32>} : memref<256x128xf32, #tpu.memory_space<vmem>>, vector<256x128xf32>,
    return
  }
  func.func @transform_0(%arg0: i32, %arg1: i32) -> (i32, i32) {
    %c1_i32 = arith.constant 1 : i32
    %0 = arith.muli %arg0, %c1_i32 : i32
    %1 = arith.addi %0, %arg1 : i32
    %c0_i32 = arith.constant 0 : i32
    %c0_i32_0 = arith.constant 0 : i32
    return %1, %c0_i32 : i32, i32
  }
  func.func @transform_1(%arg0: i32, %arg1: i32) -> (i32, i32) {
    %c0_i32 = arith.constant 0 : i32
    %c0_i32_0 = arith.constant 0 : i32
    %c0_i32_1 = arith.constant 0 : i32
    return %c0_i32, %c0_i32_0 : i32, i32
  }
  func.func @transform_2(%arg0: i32, %arg1: i32) -> (i32, i32) {
    %c0_i32 = arith.constant 0 : i32
    %c0_i32_0 = arith.constant 0 : i32
    %c0_i32_1 = arith.constant 0 : i32
    return %c0_i32, %c0_i32_0 : i32, i32
  }
  func.func @transform_3(%arg0: i32, %arg1: i32) -> (i32, i32) {
    %c0_i32 = arith.constant 0 : i32
    %c0_i32_0 = arith.constant 0 : i32
    %c0_i32_1 = arith.constant 0 : i32
    return %c0_i32, %c0_i32_0 : i32, i32
  }
  func.func @transform_4(%arg0: i32, %arg1: i32) -> (i32, i32) {
    %c0_i32 = arith.constant 0 : i32
    %c0_i32_0 = arith.constant 0 : i32
    %c0_i32_1 = arith.constant 0 : i32
    return %c0_i32, %c0_i32_0 : i32, i32
  }
  func.func @transform_5(%arg0: i32, %arg1: i32) -> (i32, i32) {
    %c0_i32 = arith.constant 0 : i32
    %c0_i32_0 = arith.constant 0 : i32
    %c0_i32_1 = arith.constant 0 : i32
    return %c0_i32, %c0_i32_0 : i32, i32
  }
  func.func @transform_6(%arg0: i32, %arg1: i32) -> (i32, i32) {
    %c0_i32 = arith.constant 0 : i32
    %c0_i32_0 = arith.constant 0 : i32
    return %arg1, %c0_i32 : i32, i32
  }
  func.func @transform_7(%arg0: i32, %arg1: i32) -> (i32, i32) {
    %c1_i32 = arith.constant 1 : i32
    %0 = arith.muli %arg0, %c1_i32 : i32
    %1 = arith.addi %0, %arg1 : i32
    %c0_i32 = arith.constant 0 : i32
    %c0_i32_0 = arith.constant 0 : i32
    return %1, %c0_i32 : i32, i32
  }
}

</mosaic_0001>

<llo_original>
// kernel: region_output_layer.1
$region0: #{region_output_layer.1}
  #allocation0 [shape = 'u32[]', space=smem, size = 0x4, offset = 0x4, fixed_abs, tag = 'smem constant byte address 0x4 - core index']
  #allocation1 [shape = 'u32[72,128]{1,0:T(1,128)}', space=vmem, size = 0x9000, scoped, tag = 'internal scratch']
  %s0 = inlined_call_operand.vmem [shape: bf16[512,128], index: 0, kind: input, shape index: {}]
  %s1 = inlined_call_operand.vmem [shape: bf16[128,512], index: 1, kind: input, shape index: {}]
  %s2 = inlined_call_operand.vmem [shape: f32[1,512], index: 2, kind: input, shape index: {}]
  %s3 = inlined_call_operand.vmem [shape: bf16[512,128], index: 3, kind: input, shape index: {}]
  %s4 = inlined_call_operand.vmem [shape: f32[1,128], index: 4, kind: input, shape index: {}]
  %s5 = inlined_call_operand.vmem [shape: f32[4,128], index: 5, kind: input, shape index: {}]
  %s6 = inlined_call_operand.vmem [shape: f32[256,128], index: 6, kind: input, shape index: {}]
  %s7 = inlined_call_operand.vmem [shape: f32[512,128], index: 7, kind: output, shape index: {}]
  %s8 = sld [smem:[#allocation0]]
  $region61: #{region_output_layer.1} parent=0
    _
  %s10 = ssub.s32 1, %s8
  %s11 = scalar_select 0, %s10, %s8
  loop: start=0, step=1, limit=4
  $region2: #{region_output_layer.1} parent=0 // loop_pre_header
    _
  $region3: #{region_output_layer.1} parent=0 // loop_header
    %s13 = sphi 0, %s17
    %p14 = scmp.ge.s32.totalorder %s13, 4
    %s20 = sphi 0, %s32
    %s21 = sphi 0, %s28
    %s22 = sphi 0, %s20
    %s23 = sphi 0, %s21
    %s24 = sphi 0, %s22
    %s25 = sphi 0, %s23
    %s37 = sphi 0, %s39
    %s40 = sphi 0, %s37
    %s41 = sphi 0, %s40
    %s57 = sphi 0, %s41
    %s61 = sphi 0, %s61
    %s63 = sphi 0, %s61
    %s64 = sphi 0, %s63
    %s78 = sphi 0, %s64
    %s82 = sphi 0, %s82
    %s84 = sphi 0, %s82
    %s85 = sphi 0, %s84
    %s99 = sphi 0, %s85
    %s103 = sphi 0, %s103
    %s105 = sphi 0, %s103
    %s106 = sphi 0, %s105
    %s120 = sphi 0, %s106
    %s124 = sphi 0, %s124
    %s126 = sphi 0, %s124
    %s127 = sphi 0, %s126
    %s141 = sphi 0, %s127
    %s145 = sphi 0, %s145
    %s147 = sphi 0, %s145
    %s148 = sphi 0, %s147
    %s162 = sphi 0, %s148
    %s168 = sphi 0, %s170
    %s171 = sphi 0, %s168
    %s172 = sphi 0, %s171
    %s188 = sphi 0, %s172
    %s196 = sphi 0, %s198
    %s199 = sphi 0, %s196
    %s200 = sphi 0, %s199
    %s216 = sphi 0, %s200
  $region4: #{region_output_layer.1} parent=0 // loop_header_branch
    %16 = sbr.rel (%p14) target = $region8
  $region5: #{region_output_layer.1} parent=0 // loop_body
    %s18 = ssub.s32 %s13, 1
    %s19 = ssub.s32 %s13, 2
    %s26 = sadd.s32 1, %s21
    %p27 = scmp.ge.s32.totalorder %s26, 1
    %s28 = scalar_select %p27, 0, %s26
    %s29 = sadd.s32 1, %s20
    %s30 = scalar_select %p27, %s29, %s20
    %p31 = scmp.ge.s32.totalorder %s30, 2
    %s32 = scalar_select %p31, 0, %s30
    %s33 = sadd.s32 %s20, %s21
    %s34 = sadd.s32 %s32, %s28
    %s35 = ssub.s32 %s33, %s34
    %p36 = scmp.eq.s32.totalorder %s35, 0
    %s38 = sadd.s32 %s37, 1
    %s39 = scalar_select %p36, %s37, %s38
    %p42 = pneg %p36
    %p43 = scmp.eq.s32.totalorder %s13, 1
    %p44 = por %p42, %p43
    %p45 = scmp.ne.s32.totalorder %s37, %s40
    %p46 = scmp.eq.s32.totalorder %s13, 0
    %p47 = por %p45, %p46
    %p48 = scmp.ne.s32.totalorder %s37, %s40
    %p49 = scmp.eq.s32.totalorder %s18, 1
    %p50 = por %p48, %p49
    %p51 = scmp.ne.s32.totalorder %s40, %s41
    %p52 = scmp.eq.s32.totalorder %s18, 0
    %p53 = por %p51, %p52
    %p54 = scmp.ne.s32.totalorder %s40, %s41
    %p55 = scmp.eq.s32.totalorder %s19, 1
    %p56 = por %p54, %p55
    %p58 = scmp.ne.s32.totalorder %s41, %s57
    %p59 = scmp.eq.s32.totalorder %s19, 0
    %p60 = por %p58, %p59
    %s62 = sadd.s32 %s61, 1
    %p65 = scmp.eq.s32.totalorder %s13, 1
    %p66 = scmp.ne.s32.totalorder %s61, %s63
    %p67 = scmp.eq.s32.totalorder %s13, 0
    %p68 = por %p66, %p67
    %p69 = scmp.ne.s32.totalorder %s61, %s63
    %p70 = scmp.eq.s32.totalorder %s18, 1
    %p71 = por %p69, %p70
    %p72 = scmp.ne.s32.totalorder %s63, %s64
    %p73 = scmp.eq.s32.totalorder %s18, 0
    %p74 = por %p72, %p73
    %p75 = scmp.ne.s32.totalorder %s63, %s64
    %p76 = scmp.eq.s32.totalorder %s19, 1
    %p77 = por %p75, %p76
    %p79 = scmp.ne.s32.totalorder %s64, %s78
    %p80 = scmp.eq.s32.totalorder %s19, 0
    %p81 = por %p79, %p80
    %s83 = sadd.s32 %s82, 1
    %p86 = scmp.eq.s32.totalorder %s13, 1
    %p87 = scmp.ne.s32.totalorder %s82, %s84
    %p88 = scmp.eq.s32.totalorder %s13, 0
    %p89 = por %p87, %p88
    %p90 = scmp.ne.s32.totalorder %s82, %s84
    %p91 = scmp.eq.s32.totalorder %s18, 1
    %p92 = por %p90, %p91
    %p93 = scmp.ne.s32.totalorder %s84, %s85
    %p94 = scmp.eq.s32.totalorder %s18, 0
    %p95 = por %p93, %p94
    %p96 = scmp.ne.s32.totalorder %s84, %s85
    %p97 = scmp.eq.s32.totalorder %s19, 1
    %p98 = por %p96, %p97
    %p100 = scmp.ne.s32.totalorder %s85, %s99
    %p101 = scmp.eq.s32.totalorder %s19, 0
    %p102 = por %p100, %p101
    %s104 = sadd.s32 %s103, 1
    %p107 = scmp.eq.s32.totalorder %s13, 1
    %p108 = scmp.ne.s32.totalorder %s103, %s105
    %p109 = scmp.eq.s32.totalorder %s13, 0
    %p110 = por %p108, %p109
    %p111 = scmp.ne.s32.totalorder %s103, %s105
    %p112 = scmp.eq.s32.totalorder %s18, 1
    %p113 = por %p111, %p112
    %p114 = scmp.ne.s32.totalorder %s105, %s106
    %p115 = scmp.eq.s32.totalorder %s18, 0
    %p116 = por %p114, %p115
    %p117 = scmp.ne.s32.totalorder %s105, %s106
    %p118 = scmp.eq.s32.totalorder %s19, 1
    %p119 = por %p117, %p118
    %p121 = scmp.ne.s32.totalorder %s106, %s120
    %p122 = scmp.eq.s32.totalorder %s19, 0
    %p123 = por %p121, %p122
    %s125 = sadd.s32 %s124, 1
    %p128 = scmp.eq.s32.totalorder %s13, 1
    %p129 = scmp.ne.s32.totalorder %s124, %s126
    %p130 = scmp.eq.s32.totalorder %s13, 0
    %p131 = por %p129, %p130
    %p132 = scmp.ne.s32.totalorder %s124, %s126
    %p133 = scmp.eq.s32.totalorder %s18, 1
    %p134 = por %p132, %p133
    %p135 = scmp.ne.s32.totalorder %s126, %s127
    %p136 = scmp.eq.s32.totalorder %s18, 0
    %p137 = por %p135, %p136
    %p138 = scmp.ne.s32.totalorder %s126, %s127
    %p139 = scmp.eq.s32.totalorder %s19, 1
    %p140 = por %p138, %p139
    %p142 = scmp.ne.s32.totalorder %s127, %s141
    %p143 = scmp.eq.s32.totalorder %s19, 0
    %p144 = por %p142, %p143
    %s146 = sadd.s32 %s145, 1
    %p149 = scmp.eq.s32.totalorder %s13, 1
    %p150 = scmp.ne.s32.totalorder %s145, %s147
    %p151 = scmp.eq.s32.totalorder %s13, 0
    %p152 = por %p150, %p151
    %p153 = scmp.ne.s32.totalorder %s145, %s147
    %p154 = scmp.eq.s32.totalorder %s18, 1
    %p155 = por %p153, %p154
    %p156 = scmp.ne.s32.totalorder %s147, %s148
    %p157 = scmp.eq.s32.totalorder %s18, 0
    %p158 = por %p156, %p157
    %p159 = scmp.ne.s32.totalorder %s147, %s148
    %p160 = scmp.eq.s32.totalorder %s19, 1
    %p161 = por %p159, %p160
    %p163 = scmp.ne.s32.totalorder %s148, %s162
    %p164 = scmp.eq.s32.totalorder %s19, 0
    %p165 = por %p163, %p164
    %s166 = ssub.s32 %s21, %s28
    %p167 = scmp.eq.s32.totalorder %s166, 0
    %s169 = sadd.s32 %s168, 1
    %s170 = scalar_select %p167, %s168, %s169
    %p173 = pneg %p167
    %p174 = scmp.eq.s32.totalorder %s13, 1
    %p175 = por %p173, %p174
    %p176 = scmp.ne.s32.totalorder %s168, %s171
    %p177 = scmp.eq.s32.totalorder %s13, 0
    %p178 = por %p176, %p177
    %p179 = scmp.ne.s32.totalorder %s168, %s171
    %p180 = scmp.eq.s32.totalorder %s18, 1
    %p181 = por %p179, %p180
    %p182 = scmp.ne.s32.totalorder %s171, %s172
    %p183 = scmp.eq.s32.totalorder %s18, 0
    %p184 = por %p182, %p183
    %p185 = scmp.ne.s32.totalorder %s171, %s172
    %p186 = scmp.eq.s32.totalorder %s19, 1
    %p187 = por %p185, %p186
    %p189 = scmp.ne.s32.totalorder %s172, %s188
    %p190 = scmp.eq.s32.totalorder %s19, 0
    %p191 = por %p189, %p190
    %s192 = sadd.s32 %s20, %s21
    %s193 = sadd.s32 %s32, %s28
    %s194 = ssub.s32 %s192, %s193
    %p195 = scmp.eq.s32.totalorder %s194, 0
    %s197 = sadd.s32 %s196, 1
    %s198 = scalar_select %p195, %s196, %s197
    %p201 = pneg %p195
    %p202 = scmp.eq.s32.totalorder %s13, 1
    %p203 = por %p201, %p202
    %p204 = scmp.ne.s32.totalorder %s196, %s199
    %p205 = scmp.eq.s32.totalorder %s13, 0
    %p206 = por %p204, %p205
    %p207 = scmp.ne.s32.totalorder %s196, %s199
    %p208 = scmp.eq.s32.totalorder %s18, 1
    %p209 = por %p207, %p208
    %p210 = scmp.ne.s32.totalorder %s199, %s200
    %p211 = scmp.eq.s32.totalorder %s18, 0
    %p212 = por %p210, %p211
    %p213 = scmp.ne.s32.totalorder %s199, %s200
    %p214 = scmp.eq.s32.totalorder %s19, 1
    %p215 = por %p213, %p214
    %p217 = scmp.ne.s32.totalorder %s200, %s216
    %p218 = scmp.eq.s32.totalorder %s19, 0
    %p219 = por %p217, %p218
    %p220 = scmp.le.s32.totalorder 1, %s13
    %p221 = scmp.lt.s32.totalorder %s13, 3
    %p222 = pnand %p220, %p221
    %p223 = pneg %p222
    // Predicated region
    $region9: #{region_output_layer.1} parent=5 // pred_check
      _
    $region10: #{region_output_layer.1} parent=5 // pred_check_branch
      %225 = sbr.rel (%p222) target = $region12
    $region11: #{region_output_layer.1} parent=5 // pred_region
      %s226 = ssub.s32 %s13, 1
      // Predicated region
      $region13: #{region_output_layer.1} parent=11 // pred_check
        %p227 = pneg %p74
      $region14: #{region_output_layer.1} parent=11 // pred_check_branch
        %229 = sbr.rel (%p227) target = $region16
      $region15: #{region_output_layer.1} parent=11 // pred_region
        _
      $region16: #{region_output_layer.1} parent=11 // pred_fallthru
        _
      // Predicated region
      $region17: #{region_output_layer.1} parent=11 // pred_check
        %p230 = pneg %p95
      $region18: #{region_output_layer.1} parent=11 // pred_check_branch
        %232 = sbr.rel (%p230) target = $region20
      $region19: #{region_output_layer.1} parent=11 // pred_region
        _
      $region20: #{region_output_layer.1} parent=11 // pred_fallthru
        _
      // Predicated region
      $region21: #{region_output_layer.1} parent=11 // pred_check
        %p233 = pneg %p116
      $region22: #{region_output_layer.1} parent=11 // pred_check_branch
        %235 = sbr.rel (%p233) target = $region24
      $region23: #{region_output_layer.1} parent=11 // pred_region
        _
      $region24: #{region_output_layer.1} parent=11 // pred_fallthru
        _
      // Predicated region
      $region25: #{region_output_layer.1} parent=11 // pred_check
        %p236 = pneg %p137
      $region26: #{region_output_layer.1} parent=11 // pred_check_branch
        %238 = sbr.rel (%p236) target = $region28
      $region27: #{region_output_layer.1} parent=11 // pred_region
        _
      $region28: #{region_output_layer.1} parent=11 // pred_fallthru
        _
      // Predicated region
      $region29: #{region_output_layer.1} parent=11 // pred_check
        %p239 = pneg %p158
      $region30: #{region_output_layer.1} parent=11 // pred_check_branch
        %241 = sbr.rel (%p239) target = $region32
      $region31: #{region_output_layer.1} parent=11 // pred_region
        _
      $region32: #{region_output_layer.1} parent=11 // pred_fallthru
        _
      // Predicated region
      $region33: #{region_output_layer.1} parent=11 // pred_check
        %p242 = pneg %p184
      $region34: #{region_output_layer.1} parent=11 // pred_check_branch
        %244 = sbr.rel (%p242) target = $region36
      $region35: #{region_output_layer.1} parent=11 // pred_region
        %s245 = smul.u32 32, %s23
        %p246 = scmp.lt.s32.totalorder %s245, 31
        %s247 = scalar_select %p246, %s245, 31
        %s248 = smul.addr %s247, 8
        %s249 = scalar_lea.vmem %s6, %s248
        %s250 = smul.u32 32, %s23
      $region36: #{region_output_layer.1} parent=11 // pred_fallthru
        _
    $region12: #{region_output_layer.1} parent=5 // pred_fallthru
      _
    %p251 = scmp.lt.s32.totalorder %s13, 2
    // Predicated region
    $region37: #{region_output_layer.1} parent=5 // pred_check
      %p252 = pneg %p251
    $region38: #{region_output_layer.1} parent=5 // pred_check_branch
      %254 = sbr.rel (%p252) target = $region40
    $region39: #{region_output_layer.1} parent=5 // pred_region
      // Predicated region
      $region41: #{region_output_layer.1} parent=39 // pred_check
        %p255 = pneg %p47
      $region42: #{region_output_layer.1} parent=39 // pred_check_branch
        %257 = sbr.rel (%p255) target = $region44
      $region43: #{region_output_layer.1} parent=39 // pred_region
        %s258 = sadd.s32 %s20, %s21
        %s259 = smul.u32 32, %s258
        %p260 = scmp.lt.s32.totalorder %s259, 63
        %s261 = scalar_select %p260, %s259, 63
        %s262 = smul.addr %s261, 4
        %s263 = scalar_lea.vmem %s0, %s262
        %s264 = sadd.s32 %s20, %s21
        %s265 = smul.u32 32, %s264
      $region44: #{region_output_layer.1} parent=39 // pred_fallthru
        _
    $region40: #{region_output_layer.1} parent=5 // pred_fallthru
      _
    %p266 = scmp.le.s32.totalorder 1, %s13
    %p267 = scmp.lt.s32.totalorder %s13, 3
    %p268 = pnand %p266, %p267
    %p269 = pneg %p268
    // Predicated region
    $region45: #{region_output_layer.1} parent=5 // pred_check
      _
    $region46: #{region_output_layer.1} parent=5 // pred_check_branch
      %271 = sbr.rel (%p268) target = $region48
    $region47: #{region_output_layer.1} parent=5 // pred_region
      %s272 = ssub.s32 %s13, 1
      %s273 = sadd.s32 %s22, %s23
      %s274 = smul.u32 32, %s273
      %p275 = scmp.lt.s32.totalorder %s274, 63
      %s276 = scalar_select %p275, %s274, 63
      %s277 = smul.addr %s276, 4
      %s278 = scalar_lea.vmem %s0, %s277
      %p279 = pneg %p53
      %p280 = pneg %p50
      %p281 = pneg %p74
      %p282 = pneg %p71
      %p283 = pneg %p95
      %p284 = pneg %p92
      %p285 = pneg %p116
      %p286 = pneg %p113
      %p287 = pneg %p137
      %p288 = pneg %p134
      %p289 = pneg %p158
      %p290 = pneg %p155
      %s291 = smul.u32 32, %s23
      %p292 = scmp.lt.s32.totalorder %s291, 31
      %s293 = scalar_select %p292, %s291, 31
      %s294 = smul.addr %s293, 8
      %s295 = scalar_lea.vmem %s6, %s294
      %p296 = pneg %p184
      %p297 = pneg %p181
      %p298 = pneg %p212
      %p299 = pneg %p209
      %s300 = sadd.s32 %s22, %s23
      %s301 = smul.u32 32, %s300
      %p302 = scmp.lt.s32.totalorder %s301, 63
      %s303 = scalar_select %p302, %s301, 63
      %s304 = smul.addr %s303, 8
      %s305 = scalar_lea.vmem %s7, %s304
      %s306 = sadd.s32 %s22, %s23
      %s307 = smul.u32 32, %s306
      %p308 = scmp.lt.s32.totalorder %s307, 63
      %s309 = scalar_select %p308, %s307, 63
      %s310 = smul.addr %s309, 4
      %s311 = scalar_lea.vmem %s0, %s310
      %s312 = sadd.s32 %s22, %s23
      %s313 = smul.u32 32, %s312
      %s314 = smul.u32 32, %s23
      %p315 = scmp.lt.s32.totalorder %s314, 31
      %s316 = scalar_select %p315, %s314, 31
      %s317 = smul.addr %s316, 8
      %s318 = scalar_lea.vmem %s6, %s317
      %s319 = smul.u32 32, %s23
      %s320 = sadd.s32 %s22, %s23
      %s321 = smul.u32 32, %s320
      %p322 = scmp.lt.s32.totalorder %s321, 63
      %s323 = scalar_select %p322, %s321, 63
      %s324 = smul.addr %s323, 8
      %s325 = scalar_lea.vmem %s7, %s324
      %s326 = sadd.s32 %s22, %s23
      %s327 = smul.u32 32, %s326
      %v329 = vld [vmem:[%s311] sm:$0xf]
      %v330 = vld [vmem:[%s311 + $0x4] sm:$0xf]
      %v331 = vld [vmem:[%s311 + $0x8] sm:$0xf]
      %v332 = vld [vmem:[%s311 + $0xc] sm:$0xf]
      %v333 = vld [vmem:[%s311 + $0x10] sm:$0xf]
      %v334 = vld [vmem:[%s311 + $0x14] sm:$0xf]
      %v335 = vld [vmem:[%s311 + $0x18] sm:$0xf]
      %v336 = vld [vmem:[%s311 + $0x1c] sm:$0xf]
      %v337 = vld [vmem:[%s311 + $0x20] sm:$0xf]
      %v338 = vld [vmem:[%s311 + $0x24] sm:$0xf]
      %v339 = vld [vmem:[%s311 + $0x28] sm:$0xf]
      %v340 = vld [vmem:[%s311 + $0x2c] sm:$0xf]
      %v341 = vld [vmem:[%s311 + $0x30] sm:$0xf]
      %v342 = vld [vmem:[%s311 + $0x34] sm:$0xf]
      %v343 = vld [vmem:[%s311 + $0x38] sm:$0xf]
      %v344 = vld [vmem:[%s311 + $0x3c] sm:$0xf]
      %v345 = vld [vmem:[%s311 + $0x40] sm:$0xf]
      %v346 = vld [vmem:[%s311 + $0x44] sm:$0xf]
      %v347 = vld [vmem:[%s311 + $0x48] sm:$0xf]
      %v348 = vld [vmem:[%s311 + $0x4c] sm:$0xf]
      %v349 = vld [vmem:[%s311 + $0x50] sm:$0xf]
      %v350 = vld [vmem:[%s311 + $0x54] sm:$0xf]
      %v351 = vld [vmem:[%s311 + $0x58] sm:$0xf]
      %v352 = vld [vmem:[%s311 + $0x5c] sm:$0xf]
      %v353 = vld [vmem:[%s311 + $0x60] sm:$0xf]
      %v354 = vld [vmem:[%s311 + $0x64] sm:$0xf]
      %v355 = vld [vmem:[%s311 + $0x68] sm:$0xf]
      %v356 = vld [vmem:[%s311 + $0x6c] sm:$0xf]
      %v357 = vld [vmem:[%s311 + $0x70] sm:$0xf]
      %v358 = vld [vmem:[%s311 + $0x74] sm:$0xf]
      %v359 = vld [vmem:[%s311 + $0x78] sm:$0xf]
      %v360 = vld [vmem:[%s311 + $0x7c] sm:$0xf]
      %v361 = vld [vmem:[%s1] sm:$0xff]
      %v362 = vld [vmem:[%s1 + $0x8] sm:$0xff]
      %v363 = vld [vmem:[%s1 + $0x10] sm:$0xff]
      %v364 = vld [vmem:[%s1 + $0x18] sm:$0xff]
      %v365 = vld [vmem:[%s1 + $0x20] sm:$0xff]
      %v366 = vld [vmem:[%s1 + $0x28] sm:$0xff]
      %v367 = vld [vmem:[%s1 + $0x30] sm:$0xff]
      %v368 = vld [vmem:[%s1 + $0x38] sm:$0xff]
      %v369 = vld [vmem:[%s1 + $0x40] sm:$0xff]
      %v370 = vld [vmem:[%s1 + $0x48] sm:$0xff]
      %v371 = vld [vmem:[%s1 + $0x50] sm:$0xff]
      %v372 = vld [vmem:[%s1 + $0x58] sm:$0xff]
      %v373 = vld [vmem:[%s1 + $0x60] sm:$0xff]
      %v374 = vld [vmem:[%s1 + $0x68] sm:$0xff]
      %v375 = vld [vmem:[%s1 + $0x70] sm:$0xff]
      %v376 = vld [vmem:[%s1 + $0x78] sm:$0xff]
      %v377 = vld [vmem:[%s1 + $0x80] sm:$0xff]
      %v378 = vld [vmem:[%s1 + $0x88] sm:$0xff]
      %v379 = vld [vmem:[%s1 + $0x90] sm:$0xff]
      %v380 = vld [vmem:[%s1 + $0x98] sm:$0xff]
      %v381 = vld [vmem:[%s1 + $0xa0] sm:$0xff]
      %v382 = vld [vmem:[%s1 + $0xa8] sm:$0xff]
      %v383 = vld [vmem:[%s1 + $0xb0] sm:$0xff]
      %v384 = vld [vmem:[%s1 + $0xb8] sm:$0xff]
      %v385 = vld [vmem:[%s1 + $0xc0] sm:$0xff]
      %v386 = vld [vmem:[%s1 + $0xc8] sm:$0xff]
      %v387 = vld [vmem:[%s1 + $0xd0] sm:$0xff]
      %v388 = vld [vmem:[%s1 + $0xd8] sm:$0xff]
      %v389 = vld [vmem:[%s1 + $0xe0] sm:$0xff]
      %v390 = vld [vmem:[%s1 + $0xe8] sm:$0xff]
      %v391 = vld [vmem:[%s1 + $0xf0] sm:$0xff]
      %v392 = vld [vmem:[%s1 + $0xf8] sm:$0xff]
      %v393 = vld [vmem:[%s2] sm:$0xf]
      %v395 = vperm.slane %v393, 0
      %v396 = vperm.slane %v393, 1
      %v397 = vperm.slane %v393, 2
      %v398 = vperm.slane %v393, 3
      %v435 = vunpack.c.l.b16 %v329
      %v436 = vunpack.c.l.b16 %v330
      %v437 = vunpack.c.l.b16 %v331
      %v438 = vunpack.c.l.b16 %v332
      %v439 = vunpack.c.l.b16 %v333
      %v440 = vunpack.c.l.b16 %v334
      %v441 = vunpack.c.l.b16 %v335
      %v442 = vunpack.c.l.b16 %v336
      %v443 = vunpack.c.l.b16 %v337
      %v444 = vunpack.c.l.b16 %v338
      %v445 = vunpack.c.l.b16 %v339
      %v446 = vunpack.c.l.b16 %v340
      %v447 = vunpack.c.l.b16 %v341
      %v448 = vunpack.c.l.b16 %v342
      %v449 = vunpack.c.l.b16 %v343
      %v450 = vunpack.c.l.b16 %v344
      %v451 = vunpack.c.l.b16 %v345
      %v452 = vunpack.c.l.b16 %v346
      %v453 = vunpack.c.l.b16 %v347
      %v454 = vunpack.c.l.b16 %v348
      %v455 = vunpack.c.l.b16 %v349
      %v456 = vunpack.c.l.b16 %v350
      %v457 = vunpack.c.l.b16 %v351
      %v458 = vunpack.c.l.b16 %v352
      %v459 = vunpack.c.l.b16 %v353
      %v460 = vunpack.c.l.b16 %v354
      %v461 = vunpack.c.l.b16 %v355
      %v462 = vunpack.c.l.b16 %v356
      %v463 = vunpack.c.l.b16 %v357
      %v464 = vunpack.c.l.b16 %v358
      %v465 = vunpack.c.l.b16 %v359
      %v466 = vunpack.c.l.b16 %v360
      %v467 = vpack.c.b16 %v436, %v435
      %v468 = vpack.c.b16 %v438, %v437
      %v469 = vpack.c.b16 %v440, %v439
      %v470 = vpack.c.b16 %v442, %v441
      %v471 = vpack.c.b16 %v444, %v443
      %v472 = vpack.c.b16 %v446, %v445
      %v473 = vpack.c.b16 %v448, %v447
      %v474 = vpack.c.b16 %v450, %v449
      %v475 = vpack.c.b16 %v452, %v451
      %v476 = vpack.c.b16 %v454, %v453
      %v477 = vpack.c.b16 %v456, %v455
      %v478 = vpack.c.b16 %v458, %v457
      %v479 = vpack.c.b16 %v460, %v459
      %v480 = vpack.c.b16 %v462, %v461
      %v481 = vpack.c.b16 %v464, %v463
      %v482 = vpack.c.b16 %v466, %v465
      %v531 = vunpack.c.l.b16 %v361
      %v532 = vunpack.c.h.b16 %v361
      %v533 = vunpack.c.l.b16 %v362
      %v534 = vunpack.c.h.b16 %v362
      %v535 = vunpack.c.l.b16 %v363
      %v536 = vunpack.c.h.b16 %v363
      %v537 = vunpack.c.l.b16 %v364
      %v538 = vunpack.c.h.b16 %v364
      %v539 = vunpack.c.l.b16 %v365
      %v540 = vunpack.c.h.b16 %v365
      %v541 = vunpack.c.l.b16 %v366
      %v542 = vunpack.c.h.b16 %v366
      %v543 = vunpack.c.l.b16 %v367
      %v544 = vunpack.c.h.b16 %v367
      %v545 = vunpack.c.l.b16 %v368
      %v546 = vunpack.c.h.b16 %v368
      %v547 = vunpack.c.l.b16 %v369
      %v548 = vunpack.c.h.b16 %v369
      %v549 = vunpack.c.l.b16 %v370
      %v550 = vunpack.c.h.b16 %v370
      %v551 = vunpack.c.l.b16 %v371
      %v552 = vunpack.c.h.b16 %v371
      %v553 = vunpack.c.l.b16 %v372
      %v554 = vunpack.c.h.b16 %v372
      %v555 = vunpack.c.l.b16 %v373
      %v556 = vunpack.c.h.b16 %v373
      %v557 = vunpack.c.l.b16 %v374
      %v558 = vunpack.c.h.b16 %v374
      %v559 = vunpack.c.l.b16 %v375
      %v560 = vunpack.c.h.b16 %v375
      %v561 = vunpack.c.l.b16 %v376
      %v562 = vunpack.c.h.b16 %v376
      %v563 = vunpack.c.l.b16 %v377
      %v564 = vunpack.c.h.b16 %v377
      %v565 = vunpack.c.l.b16 %v378
      %v566 = vunpack.c.h.b16 %v378
      %v567 = vunpack.c.l.b16 %v379
      %v568 = vunpack.c.h.b16 %v379
      %v569 = vunpack.c.l.b16 %v380
      %v570 = vunpack.c.h.b16 %v380
      %v571 = vunpack.c.l.b16 %v381
      %v572 = vunpack.c.h.b16 %v381
      %v573 = vunpack.c.l.b16 %v382
      %v574 = vunpack.c.h.b16 %v382
      %v575 = vunpack.c.l.b16 %v383
      %v576 = vunpack.c.h.b16 %v383
      %v577 = vunpack.c.l.b16 %v384
      %v578 = vunpack.c.h.b16 %v384
      %v579 = vunpack.c.l.b16 %v385
      %v580 = vunpack.c.h.b16 %v385
      %v581 = vunpack.c.l.b16 %v386
      %v582 = vunpack.c.h.b16 %v386
      %v583 = vunpack.c.l.b16 %v387
      %v584 = vunpack.c.h.b16 %v387
      %v585 = vunpack.c.l.b16 %v388
      %v586 = vunpack.c.h.b16 %v388
      %v587 = vunpack.c.l.b16 %v389
      %v588 = vunpack.c.h.b16 %v389
      %v589 = vunpack.c.l.b16 %v390
      %v590 = vunpack.c.h.b16 %v390
      %v591 = vunpack.c.l.b16 %v391
      %v592 = vunpack.c.h.b16 %v391
      %v593 = vunpack.c.l.b16 %v392
      %v594 = vunpack.c.h.b16 %v392
      %v595 = vpack.c.b16 %v535, %v531
      %v596 = vpack.c.b16 %v536, %v532
      %v597 = vpack.c.b16 %v537, %v533
      %v598 = vpack.c.b16 %v538, %v534
      %v599 = vpack.c.b16 %v543, %v539
      %v600 = vpack.c.b16 %v544, %v540
      %v601 = vpack.c.b16 %v545, %v541
      %v602 = vpack.c.b16 %v546, %v542
      %v603 = vpack.c.b16 %v551, %v547
      %v604 = vpack.c.b16 %v552, %v548
      %v605 = vpack.c.b16 %v553, %v549
      %v606 = vpack.c.b16 %v554, %v550
      %v607 = vpack.c.b16 %v559, %v555
      %v608 = vpack.c.b16 %v560, %v556
      %v609 = vpack.c.b16 %v561, %v557
      %v610 = vpack.c.b16 %v562, %v558
      %v611 = vpack.c.b16 %v567, %v563
      %v612 = vpack.c.b16 %v568, %v564
      %v613 = vpack.c.b16 %v569, %v565
      %v614 = vpack.c.b16 %v570, %v566
      %v615 = vpack.c.b16 %v575, %v571
      %v616 = vpack.c.b16 %v576, %v572
      %v617 = vpack.c.b16 %v577, %v573
      %v618 = vpack.c.b16 %v578, %v574
      %v619 = vpack.c.b16 %v583, %v579
      %v620 = vpack.c.b16 %v584, %v580
      %v621 = vpack.c.b16 %v585, %v581
      %v622 = vpack.c.b16 %v586, %v582
      %v623 = vpack.c.b16 %v591, %v587
      %v624 = vpack.c.b16 %v592, %v588
      %v625 = vpack.c.b16 %v593, %v589
      %v626 = vpack.c.b16 %v594, %v590
      %659 = vmatpush.bf16.msra.mxu0 %v623
      %660 = vmatpush.bf16.msra.mxu0 %v619
      %661 = vmatpush.bf16.msra.mxu0 %v615
      %662 = vmatpush.bf16.msra.mxu0 %v611
      %663 = vmatpush.bf16.msra.mxu0 %v607
      %664 = vmatpush.bf16.msra.mxu0 %v603
      %665 = vmatpush.bf16.msra.mxu0 %v599
      %666 = vmatpush.bf16.msra.mxu0 %v595
      %667 = vmatmul.bf16.gmra.mxu0 %v467
      %v668 = vpop.f32.mrf.mxu0
      %v669 = vadd.f32 %v395, %v668
      %v670 = vpop.f32.mrf.mxu0
      %v671 = vadd.f32 %v395, %v670
      %672 = vmatmul.bf16.gmra.mxu0 %v468
      %v673 = vpop.f32.mrf.mxu0
      %v674 = vadd.f32 %v395, %v673
      %v675 = vpop.f32.mrf.mxu0
      %v676 = vadd.f32 %v395, %v675
      %677 = vmatmul.bf16.gmra.mxu0 %v469
      %v678 = vpop.f32.mrf.mxu0
      %v679 = vadd.f32 %v395, %v678
      %v680 = vpop.f32.mrf.mxu0
      %v681 = vadd.f32 %v395, %v680
      %682 = vmatmul.bf16.gmra.mxu0 %v470
      %v683 = vpop.f32.mrf.mxu0
      %v684 = vadd.f32 %v395, %v683
      %v685 = vpop.f32.mrf.mxu0
      %v686 = vadd.f32 %v395, %v685
      %687 = vmatmul.bf16.gmra.mxu0 %v471
      %v688 = vpop.f32.mrf.mxu0
      %v689 = vadd.f32 %v395, %v688
      %v690 = vpop.f32.mrf.mxu0
      %v691 = vadd.f32 %v395, %v690
      %692 = vmatmul.bf16.gmra.mxu0 %v472
      %v693 = vpop.f32.mrf.mxu0
      %v694 = vadd.f32 %v395, %v693
      %v695 = vpop.f32.mrf.mxu0
      %v696 = vadd.f32 %v395, %v695
      %697 = vmatmul.bf16.gmra.mxu0 %v473
      %v698 = vpop.f32.mrf.mxu0
      %v699 = vadd.f32 %v395, %v698
      %v700 = vpop.f32.mrf.mxu0
      %v701 = vadd.f32 %v395, %v700
      %702 = vmatmul.bf16.gmra.mxu0 %v474
      %v703 = vpop.f32.mrf.mxu0
      %v704 = vadd.f32 %v395, %v703
      %v705 = vpop.f32.mrf.mxu0
      %v706 = vadd.f32 %v395, %v705
      %707 = vmatmul.bf16.gmra.mxu0 %v475
      %v708 = vpop.f32.mrf.mxu0
      %v709 = vadd.f32 %v395, %v708
      %v710 = vpop.f32.mrf.mxu0
      %v711 = vadd.f32 %v395, %v710
      %712 = vmatmul.bf16.gmra.mxu0 %v476
      %v713 = vpop.f32.mrf.mxu0
      %v714 = vadd.f32 %v395, %v713
      %v715 = vpop.f32.mrf.mxu0
      %v716 = vadd.f32 %v395, %v715
      %717 = vmatmul.bf16.gmra.mxu0 %v477
      %v718 = vpop.f32.mrf.mxu0
      %v719 = vadd.f32 %v395, %v718
      %v720 = vpop.f32.mrf.mxu0
      %v721 = vadd.f32 %v395, %v720
      %722 = vmatmul.bf16.gmra.mxu0 %v478
      %v723 = vpop.f32.mrf.mxu0
      %v724 = vadd.f32 %v395, %v723
      %v725 = vpop.f32.mrf.mxu0
      %v726 = vadd.f32 %v395, %v725
      %727 = vmatmul.bf16.gmra.mxu0 %v479
      %v728 = vpop.f32.mrf.mxu0
      %v729 = vadd.f32 %v395, %v728
      %v730 = vpop.f32.mrf.mxu0
      %v731 = vadd.f32 %v395, %v730
      %732 = vmatmul.bf16.gmra.mxu0 %v480
      %v733 = vpop.f32.mrf.mxu0
      %v734 = vadd.f32 %v395, %v733
      %v735 = vpop.f32.mrf.mxu0
      %v736 = vadd.f32 %v395, %v735
      %737 = vmatmul.bf16.gmra.mxu0 %v481
      %v738 = vpop.f32.mrf.mxu0
      %v739 = vadd.f32 %v395, %v738
      %v740 = vpop.f32.mrf.mxu0
      %v741 = vadd.f32 %v395, %v740
      %742 = vmatmul.bf16.gmra.mxu0 %v482
      %v743 = vpop.f32.mrf.mxu0
      %v744 = vadd.f32 %v395, %v743
      %v745 = vpop.f32.mrf.mxu0
      %v746 = vadd.f32 %v395, %v745
      %747 = vdwg.mxu0
      %748 = vmatpush.bf16.msra.mxu0 %v624
      %749 = vmatpush.bf16.msra.mxu0 %v620
      %750 = vmatpush.bf16.msra.mxu0 %v616
      %751 = vmatpush.bf16.msra.mxu0 %v612
      %752 = vmatpush.bf16.msra.mxu0 %v608
      %753 = vmatpush.bf16.msra.mxu0 %v604
      %754 = vmatpush.bf16.msra.mxu0 %v600
      %755 = vmatpush.bf16.msra.mxu0 %v596
      %756 = vmatmul.bf16.gmra.mxu0 %v467
      %v757 = vpop.f32.mrf.mxu0
      %v758 = vadd.f32 %v396, %v757
      %v759 = vpop.f32.mrf.mxu0
      %v760 = vadd.f32 %v396, %v759
      %761 = vmatmul.bf16.gmra.mxu0 %v468
      %v762 = vpop.f32.mrf.mxu0
      %v763 = vadd.f32 %v396, %v762
      %v764 = vpop.f32.mrf.mxu0
      %v765 = vadd.f32 %v396, %v764
      %766 = vmatmul.bf16.gmra.mxu0 %v469
      %v767 = vpop.f32.mrf.mxu0
      %v768 = vadd.f32 %v396, %v767
      %v769 = vpop.f32.mrf.mxu0
      %v770 = vadd.f32 %v396, %v769
      %771 = vmatmul.bf16.gmra.mxu0 %v470
      %v772 = vpop.f32.mrf.mxu0
      %v773 = vadd.f32 %v396, %v772
      %v774 = vpop.f32.mrf.mxu0
      %v775 = vadd.f32 %v396, %v774
      %776 = vmatmul.bf16.gmra.mxu0 %v471
      %v777 = vpop.f32.mrf.mxu0
      %v778 = vadd.f32 %v396, %v777
      %v779 = vpop.f32.mrf.mxu0
      %v780 = vadd.f32 %v396, %v779
      %781 = vmatmul.bf16.gmra.mxu0 %v472
      %v782 = vpop.f32.mrf.mxu0
      %v783 = vadd.f32 %v396, %v782
      %v784 = vpop.f32.mrf.mxu0
      %v785 = vadd.f32 %v396, %v784
      %786 = vmatmul.bf16.gmra.mxu0 %v473
      %v787 = vpop.f32.mrf.mxu0
      %v788 = vadd.f32 %v396, %v787
      %v789 = vpop.f32.mrf.mxu0
      %v790 = vadd.f32 %v396, %v789
      %791 = vmatmul.bf16.gmra.mxu0 %v474
      %v792 = vpop.f32.mrf.mxu0
      %v793 = vadd.f32 %v396, %v792
      %v794 = vpop.f32.mrf.mxu0
      %v795 = vadd.f32 %v396, %v794
      %796 = vmatmul.bf16.gmra.mxu0 %v475
      %v797 = vpop.f32.mrf.mxu0
      %v798 = vadd.f32 %v396, %v797
      %v799 = vpop.f32.mrf.mxu0
      %v800 = vadd.f32 %v396, %v799
      %801 = vmatmul.bf16.gmra.mxu0 %v476
      %v802 = vpop.f32.mrf.mxu0
      %v803 = vadd.f32 %v396, %v802
      %v804 = vpop.f32.mrf.mxu0
      %v805 = vadd.f32 %v396, %v804
      %806 = vmatmul.bf16.gmra.mxu0 %v477
      %v807 = vpop.f32.mrf.mxu0
      %v808 = vadd.f32 %v396, %v807
      %v809 = vpop.f32.mrf.mxu0
      %v810 = vadd.f32 %v396, %v809
      %811 = vmatmul.bf16.gmra.mxu0 %v478
      %v812 = vpop.f32.mrf.mxu0
      %v813 = vadd.f32 %v396, %v812
      %v814 = vpop.f32.mrf.mxu0
      %v815 = vadd.f32 %v396, %v814
      %816 = vmatmul.bf16.gmra.mxu0 %v479
      %v817 = vpop.f32.mrf.mxu0
      %v818 = vadd.f32 %v396, %v817
      %v819 = vpop.f32.mrf.mxu0
      %v820 = vadd.f32 %v396, %v819
      %821 = vmatmul.bf16.gmra.mxu0 %v480
      %v822 = vpop.f32.mrf.mxu0
      %v823 = vadd.f32 %v396, %v822
      %v824 = vpop.f32.mrf.mxu0
      %v825 = vadd.f32 %v396, %v824
      %826 = vmatmul.bf16.gmra.mxu0 %v481
      %v827 = vpop.f32.mrf.mxu0
      %v828 = vadd.f32 %v396, %v827
      %v829 = vpop.f32.mrf.mxu0
      %v830 = vadd.f32 %v396, %v829
      %831 = vmatmul.bf16.gmra.mxu0 %v482
      %v832 = vpop.f32.mrf.mxu0
      %v833 = vadd.f32 %v396, %v832
      %v834 = vpop.f32.mrf.mxu0
      %v835 = vadd.f32 %v396, %v834
      %836 = vdwg.mxu0
      %837 = vmatpush.bf16.msra.mxu0 %v625
      %838 = vmatpush.bf16.msra.mxu0 %v621
      %839 = vmatpush.bf16.msra.mxu0 %v617
      %840 = vmatpush.bf16.msra.mxu0 %v613
      %841 = vmatpush.bf16.msra.mxu0 %v609
      %842 = vmatpush.bf16.msra.mxu0 %v605
      %843 = vmatpush.bf16.msra.mxu0 %v601
      %844 = vmatpush.bf16.msra.mxu0 %v597
      %845 = vmatmul.bf16.gmra.mxu0 %v467
      %v846 = vpop.f32.mrf.mxu0
      %v847 = vadd.f32 %v397, %v846
      %v848 = vpop.f32.mrf.mxu0
      %v849 = vadd.f32 %v397, %v848
      %850 = vmatmul.bf16.gmra.mxu0 %v468
      %v851 = vpop.f32.mrf.mxu0
      %v852 = vadd.f32 %v397, %v851
      %v853 = vpop.f32.mrf.mxu0
      %v854 = vadd.f32 %v397, %v853
      %855 = vmatmul.bf16.gmra.mxu0 %v469
      %v856 = vpop.f32.mrf.mxu0
      %v857 = vadd.f32 %v397, %v856
      %v858 = vpop.f32.mrf.mxu0
      %v859 = vadd.f32 %v397, %v858
      %860 = vmatmul.bf16.gmra.mxu0 %v470
      %v861 = vpop.f32.mrf.mxu0
      %v862 = vadd.f32 %v397, %v861
      %v863 = vpop.f32.mrf.mxu0
      %v864 = vadd.f32 %v397, %v863
      %865 = vmatmul.bf16.gmra.mxu0 %v471
      %v866 = vpop.f32.mrf.mxu0
      %v867 = vadd.f32 %v397, %v866
      %v868 = vpop.f32.mrf.mxu0
      %v869 = vadd.f32 %v397, %v868
      %870 = vmatmul.bf16.gmra.mxu0 %v472
      %v871 = vpop.f32.mrf.mxu0
      %v872 = vadd.f32 %v397, %v871
      %v873 = vpop.f32.mrf.mxu0
      %v874 = vadd.f32 %v397, %v873
      %875 = vmatmul.bf16.gmra.mxu0 %v473
      %v876 = vpop.f32.mrf.mxu0
      %v877 = vadd.f32 %v397, %v876
      %v878 = vpop.f32.mrf.mxu0
      %v879 = vadd.f32 %v397, %v878
      %880 = vmatmul.bf16.gmra.mxu0 %v474
      %v881 = vpop.f32.mrf.mxu0
      %v882 = vadd.f32 %v397, %v881
      %v883 = vpop.f32.mrf.mxu0
      %v884 = vadd.f32 %v397, %v883
      %885 = vmatmul.bf16.gmra.mxu0 %v475
      %v886 = vpop.f32.mrf.mxu0
      %v887 = vadd.f32 %v397, %v886
      %v888 = vpop.f32.mrf.mxu0
      %v889 = vadd.f32 %v397, %v888
      %890 = vmatmul.bf16.gmra.mxu0 %v476
      %v891 = vpop.f32.mrf.mxu0
      %v892 = vadd.f32 %v397, %v891
      %v893 = vpop.f32.mrf.mxu0
      %v894 = vadd.f32 %v397, %v893
      %895 = vmatmul.bf16.gmra.mxu0 %v477
      %v896 = vpop.f32.mrf.mxu0
      %v897 = vadd.f32 %v397, %v896
      %v898 = vpop.f32.mrf.mxu0
      %v899 = vadd.f32 %v397, %v898
      %900 = vmatmul.bf16.gmra.mxu0 %v478
      %v901 = vpop.f32.mrf.mxu0
      %v902 = vadd.f32 %v397, %v901
      %v903 = vpop.f32.mrf.mxu0
      %v904 = vadd.f32 %v397, %v903
      %905 = vmatmul.bf16.gmra.mxu0 %v479
      %v906 = vpop.f32.mrf.mxu0
      %v907 = vadd.f32 %v397, %v906
      %v908 = vpop.f32.mrf.mxu0
      %v909 = vadd.f32 %v397, %v908
      %910 = vmatmul.bf16.gmra.mxu0 %v480
      %v911 = vpop.f32.mrf.mxu0
      %v912 = vadd.f32 %v397, %v911
      %v913 = vpop.f32.mrf.mxu0
      %v914 = vadd.f32 %v397, %v913
      %915 = vmatmul.bf16.gmra.mxu0 %v481
      %v916 = vpop.f32.mrf.mxu0
      %v917 = vadd.f32 %v397, %v916
      %v918 = vpop.f32.mrf.mxu0
      %v919 = vadd.f32 %v397, %v918
      %920 = vmatmul.bf16.gmra.mxu0 %v482
      %v921 = vpop.f32.mrf.mxu0
      %v922 = vadd.f32 %v397, %v921
      %v923 = vpop.f32.mrf.mxu0
      %v924 = vadd.f32 %v397, %v923
      %925 = vdwg.mxu0
      %926 = vmatpush.bf16.msra.mxu0 %v626
      %927 = vmatpush.bf16.msra.mxu0 %v622
      %928 = vmatpush.bf16.msra.mxu0 %v618
      %929 = vmatpush.bf16.msra.mxu0 %v614
      %930 = vmatpush.bf16.msra.mxu0 %v610
      %931 = vmatpush.bf16.msra.mxu0 %v606
      %932 = vmatpush.bf16.msra.mxu0 %v602
      %933 = vmatpush.bf16.msra.mxu0 %v598
      %934 = vmatmul.bf16.gmra.mxu0 %v467
      %v935 = vpop.f32.mrf.mxu0
      %v936 = vadd.f32 %v398, %v935
      %v937 = vpop.f32.mrf.mxu0
      %v938 = vadd.f32 %v398, %v937
      %939 = vmatmul.bf16.gmra.mxu0 %v468
      %v940 = vpop.f32.mrf.mxu0
      %v941 = vadd.f32 %v398, %v940
      %v942 = vpop.f32.mrf.mxu0
      %v943 = vadd.f32 %v398, %v942
      %944 = vmatmul.bf16.gmra.mxu0 %v469
      %v945 = vpop.f32.mrf.mxu0
      %v946 = vadd.f32 %v398, %v945
      %v947 = vpop.f32.mrf.mxu0
      %v948 = vadd.f32 %v398, %v947
      %949 = vmatmul.bf16.gmra.mxu0 %v470
      %v950 = vpop.f32.mrf.mxu0
      %v951 = vadd.f32 %v398, %v950
      %v952 = vpop.f32.mrf.mxu0
      %v953 = vadd.f32 %v398, %v952
      %954 = vmatmul.bf16.gmra.mxu0 %v471
      %v955 = vpop.f32.mrf.mxu0
      %v956 = vadd.f32 %v398, %v955
      %v957 = vpop.f32.mrf.mxu0
      %v958 = vadd.f32 %v398, %v957
      %959 = vmatmul.bf16.gmra.mxu0 %v472
      %v960 = vpop.f32.mrf.mxu0
      %v961 = vadd.f32 %v398, %v960
      %v962 = vpop.f32.mrf.mxu0
      %v963 = vadd.f32 %v398, %v962
      %964 = vmatmul.bf16.gmra.mxu0 %v473
      %v965 = vpop.f32.mrf.mxu0
      %v966 = vadd.f32 %v398, %v965
      %v967 = vpop.f32.mrf.mxu0
      %v968 = vadd.f32 %v398, %v967
      %969 = vmatmul.bf16.gmra.mxu0 %v474
      %v970 = vpop.f32.mrf.mxu0
      %v971 = vadd.f32 %v398, %v970
      %v972 = vpop.f32.mrf.mxu0
      %v973 = vadd.f32 %v398, %v972
      %974 = vmatmul.bf16.gmra.mxu0 %v475
      %v975 = vpop.f32.mrf.mxu0
      %v976 = vadd.f32 %v398, %v975
      %v977 = vpop.f32.mrf.mxu0
      %v978 = vadd.f32 %v398, %v977
      %979 = vmatmul.bf16.gmra.mxu0 %v476
      %v980 = vpop.f32.mrf.mxu0
      %v981 = vadd.f32 %v398, %v980
      %v982 = vpop.f32.mrf.mxu0
      %v983 = vadd.f32 %v398, %v982
      %984 = vmatmul.bf16.gmra.mxu0 %v477
      %v985 = vpop.f32.mrf.mxu0
      %v986 = vadd.f32 %v398, %v985
      %v987 = vpop.f32.mrf.mxu0
      %v988 = vadd.f32 %v398, %v987
      %989 = vmatmul.bf16.gmra.mxu0 %v478
      %v990 = vpop.f32.mrf.mxu0
      %v991 = vadd.f32 %v398, %v990
      %v992 = vpop.f32.mrf.mxu0
      %v993 = vadd.f32 %v398, %v992
      %994 = vmatmul.bf16.gmra.mxu0 %v479
      %v995 = vpop.f32.mrf.mxu0
      %v996 = vadd.f32 %v398, %v995
      %v997 = vpop.f32.mrf.mxu0
      %v998 = vadd.f32 %v398, %v997
      %999 = vmatmul.bf16.gmra.mxu0 %v480
      %v1000 = vpop.f32.mrf.mxu0
      %v1001 = vadd.f32 %v398, %v1000
      %v1002 = vpop.f32.mrf.mxu0
      %v1003 = vadd.f32 %v398, %v1002
      %1004 = vmatmul.bf16.gmra.mxu0 %v481
      %v1005 = vpop.f32.mrf.mxu0
      %v1006 = vadd.f32 %v398, %v1005
      %v1007 = vpop.f32.mrf.mxu0
      %v1008 = vadd.f32 %v398, %v1007
      %1009 = vmatmul.bf16.gmra.mxu0 %v482
      %v1010 = vpop.f32.mrf.mxu0
      %v1011 = vadd.f32 %v398, %v1010
      %v1012 = vpop.f32.mrf.mxu0
      %v1013 = vadd.f32 %v398, %v1012
      %1014 = vdwg.mxu0
      %v1015 = vpack.c.bf16 %v758, %v669
      %v1016 = vpack.c.bf16 %v936, %v847
      %v1017 = vpack.c.bf16 %v760, %v671
      %v1018 = vpack.c.bf16 %v938, %v849
      %v1019 = vpack.c.bf16 %v763, %v674
      %v1020 = vpack.c.bf16 %v941, %v852
      %v1021 = vpack.c.bf16 %v765, %v676
      %v1022 = vpack.c.bf16 %v943, %v854
      %v1023 = vpack.c.bf16 %v768, %v679
      %v1024 = vpack.c.bf16 %v946, %v857
      %v1025 = vpack.c.bf16 %v770, %v681
      %v1026 = vpack.c.bf16 %v948, %v859
      %v1027 = vpack.c.bf16 %v773, %v684
      %v1028 = vpack.c.bf16 %v951, %v862
      %v1029 = vpack.c.bf16 %v775, %v686
      %v1030 = vpack.c.bf16 %v953, %v864
      %v1031 = vpack.c.bf16 %v778, %v689
      %v1032 = vpack.c.bf16 %v956, %v867
      %v1033 = vpack.c.bf16 %v780, %v691
      %v1034 = vpack.c.bf16 %v958, %v869
      %v1035 = vpack.c.bf16 %v783, %v694
      %v1036 = vpack.c.bf16 %v961, %v872
      %v1037 = vpack.c.bf16 %v785, %v696
      %v1038 = vpack.c.bf16 %v963, %v874
      %v1039 = vpack.c.bf16 %v788, %v699
      %v1040 = vpack.c.bf16 %v966, %v877
      %v1041 = vpack.c.bf16 %v790, %v701
      %v1042 = vpack.c.bf16 %v968, %v879
      %v1043 = vpack.c.bf16 %v793, %v704
      %v1044 = vpack.c.bf16 %v971, %v882
      %v1045 = vpack.c.bf16 %v795, %v706
      %v1046 = vpack.c.bf16 %v973, %v884
      %v1047 = vpack.c.bf16 %v798, %v709
      %v1048 = vpack.c.bf16 %v976, %v887
      %v1049 = vpack.c.bf16 %v800, %v711
      %v1050 = vpack.c.bf16 %v978, %v889
      %v1051 = vpack.c.bf16 %v803, %v714
      %v1052 = vpack.c.bf16 %v981, %v892
      %v1053 = vpack.c.bf16 %v805, %v716
      %v1054 = vpack.c.bf16 %v983, %v894
      %v1055 = vpack.c.bf16 %v808, %v719
      %v1056 = vpack.c.bf16 %v986, %v897
      %v1057 = vpack.c.bf16 %v810, %v721
      %v1058 = vpack.c.bf16 %v988, %v899
      %v1059 = vpack.c.bf16 %v813, %v724
      %v1060 = vpack.c.bf16 %v991, %v902
      %v1061 = vpack.c.bf16 %v815, %v726
      %v1062 = vpack.c.bf16 %v993, %v904
      %v1063 = vpack.c.bf16 %v818, %v729
      %v1064 = vpack.c.bf16 %v996, %v907
      %v1065 = vpack.c.bf16 %v820, %v731
      %v1066 = vpack.c.bf16 %v998, %v909
      %v1067 = vpack.c.bf16 %v823, %v734
      %v1068 = vpack.c.bf16 %v1001, %v912
      %v1069 = vpack.c.bf16 %v825, %v736
      %v1070 = vpack.c.bf16 %v1003, %v914
      %v1071 = vpack.c.bf16 %v828, %v739
      %v1072 = vpack.c.bf16 %v1006, %v917
      %v1073 = vpack.c.bf16 %v830, %v741
      %v1074 = vpack.c.bf16 %v1008, %v919
      %v1075 = vpack.c.bf16 %v833, %v744
      %v1076 = vpack.c.bf16 %v1011, %v922
      %v1077 = vpack.c.bf16 %v835, %v746
      %v1078 = vpack.c.bf16 %v1013, %v924
      %v1079 = vxor.u32 %v1015, 2147516416
      %v1080 = vxor.u32 %v1016, 2147516416
      %v1081 = vxor.u32 %v1017, 2147516416
      %v1082 = vxor.u32 %v1018, 2147516416
      %v1083 = vxor.u32 %v1019, 2147516416
      %v1084 = vxor.u32 %v1020, 2147516416
      %v1085 = vxor.u32 %v1021, 2147516416
      %v1086 = vxor.u32 %v1022, 2147516416
      %v1087 = vxor.u32 %v1023, 2147516416
      %v1088 = vxor.u32 %v1024, 2147516416
      %v1089 = vxor.u32 %v1025, 2147516416
      %v1090 = vxor.u32 %v1026, 2147516416
      %v1091 = vxor.u32 %v1027, 2147516416
      %v1092 = vxor.u32 %v1028, 2147516416
      %v1093 = vxor.u32 %v1029, 2147516416
      %v1094 = vxor.u32 %v1030, 2147516416
      %v1095 = vxor.u32 %v1031, 2147516416
      %v1096 = vxor.u32 %v1032, 2147516416
      %v1097 = vxor.u32 %v1033, 2147516416
      %v1098 = vxor.u32 %v1034, 2147516416
      %v1099 = vxor.u32 %v1035, 2147516416
      %v1100 = vxor.u32 %v1036, 2147516416
      %v1101 = vxor.u32 %v1037, 2147516416
      %v1102 = vxor.u32 %v1038, 2147516416
      %v1103 = vxor.u32 %v1039, 2147516416
      %v1104 = vxor.u32 %v1040, 2147516416
      %v1105 = vxor.u32 %v1041, 2147516416
      %v1106 = vxor.u32 %v1042, 2147516416
      %v1107 = vxor.u32 %v1043, 2147516416
      %v1108 = vxor.u32 %v1044, 2147516416
      %v1109 = vxor.u32 %v1045, 2147516416
      %v1110 = vxor.u32 %v1046, 2147516416
      %v1111 = vxor.u32 %v1047, 2147516416
      %v1112 = vxor.u32 %v1048, 2147516416
      %v1113 = vxor.u32 %v1049, 2147516416
      %v1114 = vxor.u32 %v1050, 2147516416
      %v1115 = vxor.u32 %v1051, 2147516416
      %v1116 = vxor.u32 %v1052, 2147516416
      %v1117 = vxor.u32 %v1053, 2147516416
      %v1118 = vxor.u32 %v1054, 2147516416
      %v1119 = vxor.u32 %v1055, 2147516416
      %v1120 = vxor.u32 %v1056, 2147516416
      %v1121 = vxor.u32 %v1057, 2147516416
      %v1122 = vxor.u32 %v1058, 2147516416
      %v1123 = vxor.u32 %v1059, 2147516416
      %v1124 = vxor.u32 %v1060, 2147516416
      %v1125 = vxor.u32 %v1061, 2147516416
      %v1126 = vxor.u32 %v1062, 2147516416
      %v1127 = vxor.u32 %v1063, 2147516416
      %v1128 = vxor.u32 %v1064, 2147516416
      %v1129 = vxor.u32 %v1065, 2147516416
      %v1130 = vxor.u32 %v1066, 2147516416
      %v1131 = vxor.u32 %v1067, 2147516416
      %v1132 = vxor.u32 %v1068, 2147516416
      %v1133 = vxor.u32 %v1069, 2147516416
      %v1134 = vxor.u32 %v1070, 2147516416
      %v1135 = vxor.u32 %v1071, 2147516416
      %v1136 = vxor.u32 %v1072, 2147516416
      %v1137 = vxor.u32 %v1073, 2147516416
      %v1138 = vxor.u32 %v1074, 2147516416
      %v1139 = vxor.u32 %v1075, 2147516416
      %v1140 = vxor.u32 %v1076, 2147516416
      %v1141 = vxor.u32 %v1077, 2147516416
      %v1142 = vxor.u32 %v1078, 2147516416
      %v1143 = vunpack.c.l.bf16 %v1079
      %v1144 = vunpack.c.h.bf16 %v1079
      %v1145 = vunpack.c.l.bf16 %v1080
      %v1146 = vunpack.c.h.bf16 %v1080
      %v1147 = vunpack.c.l.bf16 %v1081
      %v1148 = vunpack.c.h.bf16 %v1081
      %v1149 = vunpack.c.l.bf16 %v1082
      %v1150 = vunpack.c.h.bf16 %v1082
      %v1151 = vunpack.c.l.bf16 %v1083
      %v1152 = vunpack.c.h.bf16 %v1083
      %v1153 = vunpack.c.l.bf16 %v1084
      %v1154 = vunpack.c.h.bf16 %v1084
      %v1155 = vunpack.c.l.bf16 %v1085
      %v1156 = vunpack.c.h.bf16 %v1085
      %v1157 = vunpack.c.l.bf16 %v1086
      %v1158 = vunpack.c.h.bf16 %v1086
      %v1159 = vunpack.c.l.bf16 %v1087
      %v1160 = vunpack.c.h.bf16 %v1087
      %v1161 = vunpack.c.l.bf16 %v1088
      %v1162 = vunpack.c.h.bf16 %v1088
      %v1163 = vunpack.c.l.bf16 %v1089
      %v1164 = vunpack.c.h.bf16 %v1089
      %v1165 = vunpack.c.l.bf16 %v1090
      %v1166 = vunpack.c.h.bf16 %v1090
      %v1167 = vunpack.c.l.bf16 %v1091
      %v1168 = vunpack.c.h.bf16 %v1091
      %v1169 = vunpack.c.l.bf16 %v1092
      %v1170 = vunpack.c.h.bf16 %v1092
      %v1171 = vunpack.c.l.bf16 %v1093
      %v1172 = vunpack.c.h.bf16 %v1093
      %v1173 = vunpack.c.l.bf16 %v1094
      %v1174 = vunpack.c.h.bf16 %v1094
      %v1175 = vunpack.c.l.bf16 %v1095
      %v1176 = vunpack.c.h.bf16 %v1095
      %v1177 = vunpack.c.l.bf16 %v1096
      %v1178 = vunpack.c.h.bf16 %v1096
      %v1179 = vunpack.c.l.bf16 %v1097
      %v1180 = vunpack.c.h.bf16 %v1097
      %v1181 = vunpack.c.l.bf16 %v1098
      %v1182 = vunpack.c.h.bf16 %v1098
      %v1183 = vunpack.c.l.bf16 %v1099
      %v1184 = vunpack.c.h.bf16 %v1099
      %v1185 = vunpack.c.l.bf16 %v1100
      %v1186 = vunpack.c.h.bf16 %v1100
      %v1187 = vunpack.c.l.bf16 %v1101
      %v1188 = vunpack.c.h.bf16 %v1101
      %v1189 = vunpack.c.l.bf16 %v1102
      %v1190 = vunpack.c.h.bf16 %v1102
      %v1191 = vunpack.c.l.bf16 %v1103
      %v1192 = vunpack.c.h.bf16 %v1103
      %v1193 = vunpack.c.l.bf16 %v1104
      %v1194 = vunpack.c.h.bf16 %v1104
      %v1195 = vunpack.c.l.bf16 %v1105
      %v1196 = vunpack.c.h.bf16 %v1105
      %v1197 = vunpack.c.l.bf16 %v1106
      %v1198 = vunpack.c.h.bf16 %v1106
      %v1199 = vunpack.c.l.bf16 %v1107
      %v1200 = vunpack.c.h.bf16 %v1107
      %v1201 = vunpack.c.l.bf16 %v1108
      %v1202 = vunpack.c.h.bf16 %v1108
      %v1203 = vunpack.c.l.bf16 %v1109
      %v1204 = vunpack.c.h.bf16 %v1109
      %v1205 = vunpack.c.l.bf16 %v1110
      %v1206 = vunpack.c.h.bf16 %v1110
      %v1207 = vunpack.c.l.bf16 %v1111
      %v1208 = vunpack.c.h.bf16 %v1111
      %v1209 = vunpack.c.l.bf16 %v1112
      %v1210 = vunpack.c.h.bf16 %v1112
      %v1211 = vunpack.c.l.bf16 %v1113
      %v1212 = vunpack.c.h.bf16 %v1113
      %v1213 = vunpack.c.l.bf16 %v1114
      %v1214 = vunpack.c.h.bf16 %v1114
      %v1215 = vunpack.c.l.bf16 %v1115
      %v1216 = vunpack.c.h.bf16 %v1115
      %v1217 = vunpack.c.l.bf16 %v1116
      %v1218 = vunpack.c.h.bf16 %v1116
      %v1219 = vunpack.c.l.bf16 %v1117
      %v1220 = vunpack.c.h.bf16 %v1117
      %v1221 = vunpack.c.l.bf16 %v1118
      %v1222 = vunpack.c.h.bf16 %v1118
      %v1223 = vunpack.c.l.bf16 %v1119
      %v1224 = vunpack.c.h.bf16 %v1119
      %v1225 = vunpack.c.l.bf16 %v1120
      %v1226 = vunpack.c.h.bf16 %v1120
      %v1227 = vunpack.c.l.bf16 %v1121
      %v1228 = vunpack.c.h.bf16 %v1121
      %v1229 = vunpack.c.l.bf16 %v1122
      %v1230 = vunpack.c.h.bf16 %v1122
      %v1231 = vunpack.c.l.bf16 %v1123
      %v1232 = vunpack.c.h.bf16 %v1123
      %v1233 = vunpack.c.l.bf16 %v1124
      %v1234 = vunpack.c.h.bf16 %v1124
      %v1235 = vunpack.c.l.bf16 %v1125
      %v1236 = vunpack.c.h.bf16 %v1125
      %v1237 = vunpack.c.l.bf16 %v1126
      %v1238 = vunpack.c.h.bf16 %v1126
      %v1239 = vunpack.c.l.bf16 %v1127
      %v1240 = vunpack.c.h.bf16 %v1127
      %v1241 = vunpack.c.l.bf16 %v1128
      %v1242 = vunpack.c.h.bf16 %v1128
      %v1243 = vunpack.c.l.bf16 %v1129
      %v1244 = vunpack.c.h.bf16 %v1129
      %v1245 = vunpack.c.l.bf16 %v1130
      %v1246 = vunpack.c.h.bf16 %v1130
      %v1247 = vunpack.c.l.bf16 %v1131
      %v1248 = vunpack.c.h.bf16 %v1131
      %v1249 = vunpack.c.l.bf16 %v1132
      %v1250 = vunpack.c.h.bf16 %v1132
      %v1251 = vunpack.c.l.bf16 %v1133
      %v1252 = vunpack.c.h.bf16 %v1133
      %v1253 = vunpack.c.l.bf16 %v1134
      %v1254 = vunpack.c.h.bf16 %v1134
      %v1255 = vunpack.c.l.bf16 %v1135
      %v1256 = vunpack.c.h.bf16 %v1135
      %v1257 = vunpack.c.l.bf16 %v1136
      %v1258 = vunpack.c.h.bf16 %v1136
      %v1259 = vunpack.c.l.bf16 %v1137
      %v1260 = vunpack.c.h.bf16 %v1137
      %v1261 = vunpack.c.l.bf16 %v1138
      %v1262 = vunpack.c.h.bf16 %v1138
      %v1263 = vunpack.c.l.bf16 %v1139
      %v1264 = vunpack.c.h.bf16 %v1139
      %v1265 = vunpack.c.l.bf16 %v1140
      %v1266 = vunpack.c.h.bf16 %v1140
      %v1267 = vunpack.c.l.bf16 %v1141
      %v1268 = vunpack.c.h.bf16 %v1141
      %v1269 = vunpack.c.l.bf16 %v1142
      %v1270 = vunpack.c.h.bf16 %v1142
      %v1271 = vmul.f32 %v1143, 1.442695
      %v1272 = vpow.pop %v1271
      %v1273 = vmul.f32 %v1144, 1.442695
      %v1274 = vpow.pop %v1273
      %v1275 = vmul.f32 %v1145, 1.442695
      %v1276 = vpow.pop %v1275
      %v1277 = vmul.f32 %v1146, 1.442695
      %v1278 = vpow.pop %v1277
      %v1279 = vmul.f32 %v1147, 1.442695
      %v1280 = vpow.pop %v1279
      %v1281 = vmul.f32 %v1148, 1.442695
      %v1282 = vpow.pop %v1281
      %v1283 = vmul.f32 %v1149, 1.442695
      %v1284 = vpow.pop %v1283
      %v1285 = vmul.f32 %v1150, 1.442695
      %v1286 = vpow.pop %v1285
      %v1287 = vmul.f32 %v1151, 1.442695
      %v1288 = vpow.pop %v1287
      %v1289 = vmul.f32 %v1152, 1.442695
      %v1290 = vpow.pop %v1289
      %v1291 = vmul.f32 %v1153, 1.442695
      %v1292 = vpow.pop %v1291
      %v1293 = vmul.f32 %v1154, 1.442695
      %v1294 = vpow.pop %v1293
      %v1295 = vmul.f32 %v1155, 1.442695
      %v1296 = vpow.pop %v1295
      %v1297 = vmul.f32 %v1156, 1.442695
      %v1298 = vpow.pop %v1297
      %v1299 = vmul.f32 %v1157, 1.442695
      %v1300 = vpow.pop %v1299
      %v1301 = vmul.f32 %v1158, 1.442695
      %v1302 = vpow.pop %v1301
      %v1303 = vmul.f32 %v1159, 1.442695
      %v1304 = vpow.pop %v1303
      %v1305 = vmul.f32 %v1160, 1.442695
      %v1306 = vpow.pop %v1305
      %v1307 = vmul.f32 %v1161, 1.442695
      %v1308 = vpow.pop %v1307
      %v1309 = vmul.f32 %v1162, 1.442695
      %v1310 = vpow.pop %v1309
      %v1311 = vmul.f32 %v1163, 1.442695
      %v1312 = vpow.pop %v1311
      %v1313 = vmul.f32 %v1164, 1.442695
      %v1314 = vpow.pop %v1313
      %v1315 = vmul.f32 %v1165, 1.442695
      %v1316 = vpow.pop %v1315
      %v1317 = vmul.f32 %v1166, 1.442695
      %v1318 = vpow.pop %v1317
      %v1319 = vmul.f32 %v1167, 1.442695
      %v1320 = vpow.pop %v1319
      %v1321 = vmul.f32 %v1168, 1.442695
      %v1322 = vpow.pop %v1321
      %v1323 = vmul.f32 %v1169, 1.442695
      %v1324 = vpow.pop %v1323
      %v1325 = vmul.f32 %v1170, 1.442695
      %v1326 = vpow.pop %v1325
      %v1327 = vmul.f32 %v1171, 1.442695
      %v1328 = vpow.pop %v1327
      %v1329 = vmul.f32 %v1172, 1.442695
      %v1330 = vpow.pop %v1329
      %v1331 = vmul.f32 %v1173, 1.442695
      %v1332 = vpow.pop %v1331
      %v1333 = vmul.f32 %v1174, 1.442695
      %v1334 = vpow.pop %v1333
      %v1335 = vmul.f32 %v1175, 1.442695
      %v1336 = vpow.pop %v1335
      %v1337 = vmul.f32 %v1176, 1.442695
      %v1338 = vpow.pop %v1337
      %v1339 = vmul.f32 %v1177, 1.442695
      %v1340 = vpow.pop %v1339
      %v1341 = vmul.f32 %v1178, 1.442695
      %v1342 = vpow.pop %v1341
      %v1343 = vmul.f32 %v1179, 1.442695
      %v1344 = vpow.pop %v1343
      %v1345 = vmul.f32 %v1180, 1.442695
      %v1346 = vpow.pop %v1345
      %v1347 = vmul.f32 %v1181, 1.442695
      %v1348 = vpow.pop %v1347
      %v1349 = vmul.f32 %v1182, 1.442695
      %v1350 = vpow.pop %v1349
      %v1351 = vmul.f32 %v1183, 1.442695
      %v1352 = vpow.pop %v1351
      %v1353 = vmul.f32 %v1184, 1.442695
      %v1354 = vpow.pop %v1353
      %v1355 = vmul.f32 %v1185, 1.442695
      %v1356 = vpow.pop %v1355
      %v1357 = vmul.f32 %v1186, 1.442695
      %v1358 = vpow.pop %v1357
      %v1359 = vmul.f32 %v1187, 1.442695
      %v1360 = vpow.pop %v1359
      %v1361 = vmul.f32 %v1188, 1.442695
      %v1362 = vpow.pop %v1361
      %v1363 = vmul.f32 %v1189, 1.442695
      %v1364 = vpow.pop %v1363
      %v1365 = vmul.f32 %v1190, 1.442695
      %v1366 = vpow.pop %v1365
      %v1367 = vmul.f32 %v1191, 1.442695
      %v1368 = vpow.pop %v1367
      %v1369 = vmul.f32 %v1192, 1.442695
      %v1370 = vpow.pop %v1369
      %v1371 = vmul.f32 %v1193, 1.442695
      %v1372 = vpow.pop %v1371
      %v1373 = vmul.f32 %v1194, 1.442695
      %v1374 = vpow.pop %v1373
      %v1375 = vmul.f32 %v1195, 1.442695
      %v1376 = vpow.pop %v1375
      %v1377 = vmul.f32 %v1196, 1.442695
      %v1378 = vpow.pop %v1377
      %v1379 = vmul.f32 %v1197, 1.442695
      %v1380 = vpow.pop %v1379
      %v1381 = vmul.f32 %v1198, 1.442695
      %v1382 = vpow.pop %v1381
      %v1383 = vmul.f32 %v1199, 1.442695
      %v1384 = vpow.pop %v1383
      %v1385 = vmul.f32 %v1200, 1.442695
      %v1386 = vpow.pop %v1385
      %v1387 = vmul.f32 %v1201, 1.442695
      %v1388 = vpow.pop %v1387
      %v1389 = vmul.f32 %v1202, 1.442695
      %v1390 = vpow.pop %v1389
      %v1391 = vmul.f32 %v1203, 1.442695
      %v1392 = vpow.pop %v1391
      %v1393 = vmul.f32 %v1204, 1.442695
      %v1394 = vpow.pop %v1393
      %v1395 = vmul.f32 %v1205, 1.442695
      %v1396 = vpow.pop %v1395
      %v1397 = vmul.f32 %v1206, 1.442695
      %v1398 = vpow.pop %v1397
      %v1399 = vmul.f32 %v1207, 1.442695
      %v1400 = vpow.pop %v1399
      %v1401 = vmul.f32 %v1208, 1.442695
      %v1402 = vpow.pop %v1401
      %v1403 = vmul.f32 %v1209, 1.442695
      %v1404 = vpow.pop %v1403
      %v1405 = vmul.f32 %v1210, 1.442695
      %v1406 = vpow.pop %v1405
      %v1407 = vmul.f32 %v1211, 1.442695
      %v1408 = vpow.pop %v1407
      %v1409 = vmul.f32 %v1212, 1.442695
      %v1410 = vpow.pop %v1409
      %v1411 = vmul.f32 %v1213, 1.442695
      %v1412 = vpow.pop %v1411
      %v1413 = vmul.f32 %v1214, 1.442695
      %v1414 = vpow.pop %v1413
      %v1415 = vmul.f32 %v1215, 1.442695
      %v1416 = vpow.pop %v1415
      %v1417 = vmul.f32 %v1216, 1.442695
      %v1418 = vpow.pop %v1417
      %v1419 = vmul.f32 %v1217, 1.442695
      %v1420 = vpow.pop %v1419
      %v1421 = vmul.f32 %v1218, 1.442695
      %v1422 = vpow.pop %v1421
      %v1423 = vmul.f32 %v1219, 1.442695
      %v1424 = vpow.pop %v1423
      %v1425 = vmul.f32 %v1220, 1.442695
      %v1426 = vpow.pop %v1425
      %v1427 = vmul.f32 %v1221, 1.442695
      %v1428 = vpow.pop %v1427
      %v1429 = vmul.f32 %v1222, 1.442695
      %v1430 = vpow.pop %v1429
      %v1431 = vmul.f32 %v1223, 1.442695
      %v1432 = vpow.pop %v1431
      %v1433 = vmul.f32 %v1224, 1.442695
      %v1434 = vpow.pop %v1433
      %v1435 = vmul.f32 %v1225, 1.442695
      %v1436 = vpow.pop %v1435
      %v1437 = vmul.f32 %v1226, 1.442695
      %v1438 = vpow.pop %v1437
      %v1439 = vmul.f32 %v1227, 1.442695
      %v1440 = vpow.pop %v1439
      %v1441 = vmul.f32 %v1228, 1.442695
      %v1442 = vpow.pop %v1441
      %v1443 = vmul.f32 %v1229, 1.442695
      %v1444 = vpow.pop %v1443
      %v1445 = vmul.f32 %v1230, 1.442695
      %v1446 = vpow.pop %v1445
      %v1447 = vmul.f32 %v1231, 1.442695
      %v1448 = vpow.pop %v1447
      %v1449 = vmul.f32 %v1232, 1.442695
      %v1450 = vpow.pop %v1449
      %v1451 = vmul.f32 %v1233, 1.442695
      %v1452 = vpow.pop %v1451
      %v1453 = vmul.f32 %v1234, 1.442695
      %v1454 = vpow.pop %v1453
      %v1455 = vmul.f32 %v1235, 1.442695
      %v1456 = vpow.pop %v1455
      %v1457 = vmul.f32 %v1236, 1.442695
      %v1458 = vpow.pop %v1457
      %v1459 = vmul.f32 %v1237, 1.442695
      %v1460 = vpow.pop %v1459
      %v1461 = vmul.f32 %v1238, 1.442695
      %v1462 = vpow.pop %v1461
      %v1463 = vmul.f32 %v1239, 1.442695
      %v1464 = vpow.pop %v1463
      %v1465 = vmul.f32 %v1240, 1.442695
      %v1466 = vpow.pop %v1465
      %v1467 = vmul.f32 %v1241, 1.442695
      %v1468 = vpow.pop %v1467
      %v1469 = vmul.f32 %v1242, 1.442695
      %v1470 = vpow.pop %v1469
      %v1471 = vmul.f32 %v1243, 1.442695
      %v1472 = vpow.pop %v1471
      %v1473 = vmul.f32 %v1244, 1.442695
      %v1474 = vpow.pop %v1473
      %v1475 = vmul.f32 %v1245, 1.442695
      %v1476 = vpow.pop %v1475
      %v1477 = vmul.f32 %v1246, 1.442695
      %v1478 = vpow.pop %v1477
      %v1479 = vmul.f32 %v1247, 1.442695
      %v1480 = vpow.pop %v1479
      %v1481 = vmul.f32 %v1248, 1.442695
      %v1482 = vpow.pop %v1481
      %v1483 = vmul.f32 %v1249, 1.442695
      %v1484 = vpow.pop %v1483
      %v1485 = vmul.f32 %v1250, 1.442695
      %v1486 = vpow.pop %v1485
      %v1487 = vmul.f32 %v1251, 1.442695
      %v1488 = vpow.pop %v1487
      %v1489 = vmul.f32 %v1252, 1.442695
      %v1490 = vpow.pop %v1489
      %v1491 = vmul.f32 %v1253, 1.442695
      %v1492 = vpow.pop %v1491
      %v1493 = vmul.f32 %v1254, 1.442695
      %v1494 = vpow.pop %v1493
      %v1495 = vmul.f32 %v1255, 1.442695
      %v1496 = vpow.pop %v1495
      %v1497 = vmul.f32 %v1256, 1.442695
      %v1498 = vpow.pop %v1497
      %v1499 = vmul.f32 %v1257, 1.442695
      %v1500 = vpow.pop %v1499
      %v1501 = vmul.f32 %v1258, 1.442695
      %v1502 = vpow.pop %v1501
      %v1503 = vmul.f32 %v1259, 1.442695
      %v1504 = vpow.pop %v1503
      %v1505 = vmul.f32 %v1260, 1.442695
      %v1506 = vpow.pop %v1505
      %v1507 = vmul.f32 %v1261, 1.442695
      %v1508 = vpow.pop %v1507
      %v1509 = vmul.f32 %v1262, 1.442695
      %v1510 = vpow.pop %v1509
      %v1511 = vmul.f32 %v1263, 1.442695
      %v1512 = vpow.pop %v1511
      %v1513 = vmul.f32 %v1264, 1.442695
      %v1514 = vpow.pop %v1513
      %v1515 = vmul.f32 %v1265, 1.442695
      %v1516 = vpow.pop %v1515
      %v1517 = vmul.f32 %v1266, 1.442695
      %v1518 = vpow.pop %v1517
      %v1519 = vmul.f32 %v1267, 1.442695
      %v1520 = vpow.pop %v1519
      %v1521 = vmul.f32 %v1268, 1.442695
      %v1522 = vpow.pop %v1521
      %v1523 = vmul.f32 %v1269, 1.442695
      %v1524 = vpow.pop %v1523
      %v1525 = vmul.f32 %v1270, 1.442695
      %v1526 = vpow.pop %v1525
      %v1527 = vpack.c.bf16 %v1274, %v1272
      %v1528 = vpack.c.bf16 %v1278, %v1276
      %v1529 = vpack.c.bf16 %v1282, %v1280
      %v1530 = vpack.c.bf16 %v1286, %v1284
      %v1531 = vpack.c.bf16 %v1290, %v1288
      %v1532 = vpack.c.bf16 %v1294, %v1292
      %v1533 = vpack.c.bf16 %v1298, %v1296
      %v1534 = vpack.c.bf16 %v1302, %v1300
      %v1535 = vpack.c.bf16 %v1306, %v1304
      %v1536 = vpack.c.bf16 %v1310, %v1308
      %v1537 = vpack.c.bf16 %v1314, %v1312
      %v1538 = vpack.c.bf16 %v1318, %v1316
      %v1539 = vpack.c.bf16 %v1322, %v1320
      %v1540 = vpack.c.bf16 %v1326, %v1324
      %v1541 = vpack.c.bf16 %v1330, %v1328
      %v1542 = vpack.c.bf16 %v1334, %v1332
      %v1543 = vpack.c.bf16 %v1338, %v1336
      %v1544 = vpack.c.bf16 %v1342, %v1340
      %v1545 = vpack.c.bf16 %v1346, %v1344
      %v1546 = vpack.c.bf16 %v1350, %v1348
      %v1547 = vpack.c.bf16 %v1354, %v1352
      %v1548 = vpack.c.bf16 %v1358, %v1356
      %v1549 = vpack.c.bf16 %v1362, %v1360
      %v1550 = vpack.c.bf16 %v1366, %v1364
      %v1551 = vpack.c.bf16 %v1370, %v1368
      %v1552 = vpack.c.bf16 %v1374, %v1372
      %v1553 = vpack.c.bf16 %v1378, %v1376
      %v1554 = vpack.c.bf16 %v1382, %v1380
      %v1555 = vpack.c.bf16 %v1386, %v1384
      %v1556 = vpack.c.bf16 %v1390, %v1388
      %v1557 = vpack.c.bf16 %v1394, %v1392
      %v1558 = vpack.c.bf16 %v1398, %v1396
      %v1559 = vpack.c.bf16 %v1402, %v1400
      %v1560 = vpack.c.bf16 %v1406, %v1404
      %v1561 = vpack.c.bf16 %v1410, %v1408
      %v1562 = vpack.c.bf16 %v1414, %v1412
      %v1563 = vpack.c.bf16 %v1418, %v1416
      %v1564 = vpack.c.bf16 %v1422, %v1420
      %v1565 = vpack.c.bf16 %v1426, %v1424
      %v1566 = vpack.c.bf16 %v1430, %v1428
      %v1567 = vpack.c.bf16 %v1434, %v1432
      %v1568 = vpack.c.bf16 %v1438, %v1436
      %v1569 = vpack.c.bf16 %v1442, %v1440
      %v1570 = vpack.c.bf16 %v1446, %v1444
      %v1571 = vpack.c.bf16 %v1450, %v1448
      %v1572 = vpack.c.bf16 %v1454, %v1452
      %v1573 = vpack.c.bf16 %v1458, %v1456
      %v1574 = vpack.c.bf16 %v1462, %v1460
      %v1575 = vpack.c.bf16 %v1466, %v1464
      %v1576 = vpack.c.bf16 %v1470, %v1468
      %v1577 = vpack.c.bf16 %v1474, %v1472
      %v1578 = vpack.c.bf16 %v1478, %v1476
      %v1579 = vpack.c.bf16 %v1482, %v1480
      %v1580 = vpack.c.bf16 %v1486, %v1484
      %v1581 = vpack.c.bf16 %v1490, %v1488
      %v1582 = vpack.c.bf16 %v1494, %v1492
      %v1583 = vpack.c.bf16 %v1498, %v1496
      %v1584 = vpack.c.bf16 %v1502, %v1500
      %v1585 = vpack.c.bf16 %v1506, %v1504
      %v1586 = vpack.c.bf16 %v1510, %v1508
      %v1587 = vpack.c.bf16 %v1514, %v1512
      %v1588 = vpack.c.bf16 %v1518, %v1516
      %v1589 = vpack.c.bf16 %v1522, %v1520
      %v1590 = vpack.c.bf16 %v1526, %v1524
      %v1591 = vunpack.c.l.bf16 %v1527
      %v1592 = vunpack.c.h.bf16 %v1527
      %v1593 = vunpack.c.l.bf16 %v1528
      %v1594 = vunpack.c.h.bf16 %v1528
      %v1595 = vunpack.c.l.bf16 %v1529
      %v1596 = vunpack.c.h.bf16 %v1529
      %v1597 = vunpack.c.l.bf16 %v1530
      %v1598 = vunpack.c.h.bf16 %v1530
      %v1599 = vunpack.c.l.bf16 %v1531
      %v1600 = vunpack.c.h.bf16 %v1531
      %v1601 = vunpack.c.l.bf16 %v1532
      %v1602 = vunpack.c.h.bf16 %v1532
      %v1603 = vunpack.c.l.bf16 %v1533
      %v1604 = vunpack.c.h.bf16 %v1533
      %v1605 = vunpack.c.l.bf16 %v1534
      %v1606 = vunpack.c.h.bf16 %v1534
      %v1607 = vunpack.c.l.bf16 %v1535
      %v1608 = vunpack.c.h.bf16 %v1535
      %v1609 = vunpack.c.l.bf16 %v1536
      %v1610 = vunpack.c.h.bf16 %v1536
      %v1611 = vunpack.c.l.bf16 %v1537
      %v1612 = vunpack.c.h.bf16 %v1537
      %v1613 = vunpack.c.l.bf16 %v1538
      %v1614 = vunpack.c.h.bf16 %v1538
      %v1615 = vunpack.c.l.bf16 %v1539
      %v1616 = vunpack.c.h.bf16 %v1539
      %v1617 = vunpack.c.l.bf16 %v1540
      %v1618 = vunpack.c.h.bf16 %v1540
      %v1619 = vunpack.c.l.bf16 %v1541
      %v1620 = vunpack.c.h.bf16 %v1541
      %v1621 = vunpack.c.l.bf16 %v1542
      %v1622 = vunpack.c.h.bf16 %v1542
      %v1623 = vunpack.c.l.bf16 %v1543
      %v1624 = vunpack.c.h.bf16 %v1543
      %v1625 = vunpack.c.l.bf16 %v1544
      %v1626 = vunpack.c.h.bf16 %v1544
      %v1627 = vunpack.c.l.bf16 %v1545
      %v1628 = vunpack.c.h.bf16 %v1545
      %v1629 = vunpack.c.l.bf16 %v1546
      %v1630 = vunpack.c.h.bf16 %v1546
      %v1631 = vunpack.c.l.bf16 %v1547
      %v1632 = vunpack.c.h.bf16 %v1547
      %v1633 = vunpack.c.l.bf16 %v1548
      %v1634 = vunpack.c.h.bf16 %v1548
      %v1635 = vunpack.c.l.bf16 %v1549
      %v1636 = vunpack.c.h.bf16 %v1549
      %v1637 = vunpack.c.l.bf16 %v1550
      %v1638 = vunpack.c.h.bf16 %v1550
      %v1639 = vunpack.c.l.bf16 %v1551
      %v1640 = vunpack.c.h.bf16 %v1551
      %v1641 = vunpack.c.l.bf16 %v1552
      %v1642 = vunpack.c.h.bf16 %v1552
      %v1643 = vunpack.c.l.bf16 %v1553
      %v1644 = vunpack.c.h.bf16 %v1553
      %v1645 = vunpack.c.l.bf16 %v1554
      %v1646 = vunpack.c.h.bf16 %v1554
      %v1647 = vunpack.c.l.bf16 %v1555
      %v1648 = vunpack.c.h.bf16 %v1555
      %v1649 = vunpack.c.l.bf16 %v1556
      %v1650 = vunpack.c.h.bf16 %v1556
      %v1651 = vunpack.c.l.bf16 %v1557
      %v1652 = vunpack.c.h.bf16 %v1557
      %v1653 = vunpack.c.l.bf16 %v1558
      %v1654 = vunpack.c.h.bf16 %v1558
      %v1655 = vunpack.c.l.bf16 %v1559
      %v1656 = vunpack.c.h.bf16 %v1559
      %v1657 = vunpack.c.l.bf16 %v1560
      %v1658 = vunpack.c.h.bf16 %v1560
      %v1659 = vunpack.c.l.bf16 %v1561
      %v1660 = vunpack.c.h.bf16 %v1561
      %v1661 = vunpack.c.l.bf16 %v1562
      %v1662 = vunpack.c.h.bf16 %v1562
      %v1663 = vunpack.c.l.bf16 %v1563
      %v1664 = vunpack.c.h.bf16 %v1563
      %v1665 = vunpack.c.l.bf16 %v1564
      %v1666 = vunpack.c.h.bf16 %v1564
      %v1667 = vunpack.c.l.bf16 %v1565
      %v1668 = vunpack.c.h.bf16 %v1565
      %v1669 = vunpack.c.l.bf16 %v1566
      %v1670 = vunpack.c.h.bf16 %v1566
      %v1671 = vunpack.c.l.bf16 %v1567
      %v1672 = vunpack.c.h.bf16 %v1567
      %v1673 = vunpack.c.l.bf16 %v1568
      %v1674 = vunpack.c.h.bf16 %v1568
      %v1675 = vunpack.c.l.bf16 %v1569
      %v1676 = vunpack.c.h.bf16 %v1569
      %v1677 = vunpack.c.l.bf16 %v1570
      %v1678 = vunpack.c.h.bf16 %v1570
      %v1679 = vunpack.c.l.bf16 %v1571
      %v1680 = vunpack.c.h.bf16 %v1571
      %v1681 = vunpack.c.l.bf16 %v1572
      %v1682 = vunpack.c.h.bf16 %v1572
      %v1683 = vunpack.c.l.bf16 %v1573
      %v1684 = vunpack.c.h.bf16 %v1573
      %v1685 = vunpack.c.l.bf16 %v1574
      %v1686 = vunpack.c.h.bf16 %v1574
      %v1687 = vunpack.c.l.bf16 %v1575
      %v1688 = vunpack.c.h.bf16 %v1575
      %v1689 = vunpack.c.l.bf16 %v1576
      %v1690 = vunpack.c.h.bf16 %v1576
      %v1691 = vunpack.c.l.bf16 %v1577
      %v1692 = vunpack.c.h.bf16 %v1577
      %v1693 = vunpack.c.l.bf16 %v1578
      %v1694 = vunpack.c.h.bf16 %v1578
      %v1695 = vunpack.c.l.bf16 %v1579
      %v1696 = vunpack.c.h.bf16 %v1579
      %v1697 = vunpack.c.l.bf16 %v1580
      %v1698 = vunpack.c.h.bf16 %v1580
      %v1699 = vunpack.c.l.bf16 %v1581
      %v1700 = vunpack.c.h.bf16 %v1581
      %v1701 = vunpack.c.l.bf16 %v1582
      %v1702 = vunpack.c.h.bf16 %v1582
      %v1703 = vunpack.c.l.bf16 %v1583
      %v1704 = vunpack.c.h.bf16 %v1583
      %v1705 = vunpack.c.l.bf16 %v1584
      %v1706 = vunpack.c.h.bf16 %v1584
      %v1707 = vunpack.c.l.bf16 %v1585
      %v1708 = vunpack.c.h.bf16 %v1585
      %v1709 = vunpack.c.l.bf16 %v1586
      %v1710 = vunpack.c.h.bf16 %v1586
      %v1711 = vunpack.c.l.bf16 %v1587
      %v1712 = vunpack.c.h.bf16 %v1587
      %v1713 = vunpack.c.l.bf16 %v1588
      %v1714 = vunpack.c.h.bf16 %v1588
      %v1715 = vunpack.c.l.bf16 %v1589
      %v1716 = vunpack.c.h.bf16 %v1589
      %v1717 = vunpack.c.l.bf16 %v1590
      %v1718 = vunpack.c.h.bf16 %v1590
      %v1719 = vadd.f32 %v1591, 1.0
      %v1720 = vadd.f32 %v1592, 1.0
      %v1721 = vadd.f32 %v1593, 1.0
      %v1722 = vadd.f32 %v1594, 1.0
      %v1723 = vadd.f32 %v1595, 1.0
      %v1724 = vadd.f32 %v1596, 1.0
      %v1725 = vadd.f32 %v1597, 1.0
      %v1726 = vadd.f32 %v1598, 1.0
      %v1727 = vadd.f32 %v1599, 1.0
      %v1728 = vadd.f32 %v1600, 1.0
      %v1729 = vadd.f32 %v1601, 1.0
      %v1730 = vadd.f32 %v1602, 1.0
      %v1731 = vadd.f32 %v1603, 1.0
      %v1732 = vadd.f32 %v1604, 1.0
      %v1733 = vadd.f32 %v1605, 1.0
      %v1734 = vadd.f32 %v1606, 1.0
      %v1735 = vadd.f32 %v1607, 1.0
      %v1736 = vadd.f32 %v1608, 1.0
      %v1737 = vadd.f32 %v1609, 1.0
      %v1738 = vadd.f32 %v1610, 1.0
      %v1739 = vadd.f32 %v1611, 1.0
      %v1740 = vadd.f32 %v1612, 1.0
      %v1741 = vadd.f32 %v1613, 1.0
      %v1742 = vadd.f32 %v1614, 1.0
      %v1743 = vadd.f32 %v1615, 1.0
      %v1744 = vadd.f32 %v1616, 1.0
      %v1745 = vadd.f32 %v1617, 1.0
      %v1746 = vadd.f32 %v1618, 1.0
      %v1747 = vadd.f32 %v1619, 1.0
      %v1748 = vadd.f32 %v1620, 1.0
      %v1749 = vadd.f32 %v1621, 1.0
      %v1750 = vadd.f32 %v1622, 1.0
      %v1751 = vadd.f32 %v1623, 1.0
      %v1752 = vadd.f32 %v1624, 1.0
      %v1753 = vadd.f32 %v1625, 1.0
      %v1754 = vadd.f32 %v1626, 1.0
      %v1755 = vadd.f32 %v1627, 1.0
      %v1756 = vadd.f32 %v1628, 1.0
      %v1757 = vadd.f32 %v1629, 1.0
      %v1758 = vadd.f32 %v1630, 1.0
      %v1759 = vadd.f32 %v1631, 1.0
      %v1760 = vadd.f32 %v1632, 1.0
      %v1761 = vadd.f32 %v1633, 1.0
      %v1762 = vadd.f32 %v1634, 1.0
      %v1763 = vadd.f32 %v1635, 1.0
      %v1764 = vadd.f32 %v1636, 1.0
      %v1765 = vadd.f32 %v1637, 1.0
      %v1766 = vadd.f32 %v1638, 1.0
      %v1767 = vadd.f32 %v1639, 1.0
      %v1768 = vadd.f32 %v1640, 1.0
      %v1769 = vadd.f32 %v1641, 1.0
      %v1770 = vadd.f32 %v1642, 1.0
      %v1771 = vadd.f32 %v1643, 1.0
      %v1772 = vadd.f32 %v1644, 1.0
      %v1773 = vadd.f32 %v1645, 1.0
      %v1774 = vadd.f32 %v1646, 1.0
      %v1775 = vadd.f32 %v1647, 1.0
      %v1776 = vadd.f32 %v1648, 1.0
      %v1777 = vadd.f32 %v1649, 1.0
      %v1778 = vadd.f32 %v1650, 1.0
      %v1779 = vadd.f32 %v1651, 1.0
      %v1780 = vadd.f32 %v1652, 1.0
      %v1781 = vadd.f32 %v1653, 1.0
      %v1782 = vadd.f32 %v1654, 1.0
      %v1783 = vadd.f32 %v1655, 1.0
      %v1784 = vadd.f32 %v1656, 1.0
      %v1785 = vadd.f32 %v1657, 1.0
      %v1786 = vadd.f32 %v1658, 1.0
      %v1787 = vadd.f32 %v1659, 1.0
      %v1788 = vadd.f32 %v1660, 1.0
      %v1789 = vadd.f32 %v1661, 1.0
      %v1790 = vadd.f32 %v1662, 1.0
      %v1791 = vadd.f32 %v1663, 1.0
      %v1792 = vadd.f32 %v1664, 1.0
      %v1793 = vadd.f32 %v1665, 1.0
      %v1794 = vadd.f32 %v1666, 1.0
      %v1795 = vadd.f32 %v1667, 1.0
      %v1796 = vadd.f32 %v1668, 1.0
      %v1797 = vadd.f32 %v1669, 1.0
      %v1798 = vadd.f32 %v1670, 1.0
      %v1799 = vadd.f32 %v1671, 1.0
      %v1800 = vadd.f32 %v1672, 1.0
      %v1801 = vadd.f32 %v1673, 1.0
      %v1802 = vadd.f32 %v1674, 1.0
      %v1803 = vadd.f32 %v1675, 1.0
      %v1804 = vadd.f32 %v1676, 1.0
      %v1805 = vadd.f32 %v1677, 1.0
      %v1806 = vadd.f32 %v1678, 1.0
      %v1807 = vadd.f32 %v1679, 1.0
      %v1808 = vadd.f32 %v1680, 1.0
      %v1809 = vadd.f32 %v1681, 1.0
      %v1810 = vadd.f32 %v1682, 1.0
      %v1811 = vadd.f32 %v1683, 1.0
      %v1812 = vadd.f32 %v1684, 1.0
      %v1813 = vadd.f32 %v1685, 1.0
      %v1814 = vadd.f32 %v1686, 1.0
      %v1815 = vadd.f32 %v1687, 1.0
      %v1816 = vadd.f32 %v1688, 1.0
      %v1817 = vadd.f32 %v1689, 1.0
      %v1818 = vadd.f32 %v1690, 1.0
      %v1819 = vadd.f32 %v1691, 1.0
      %v1820 = vadd.f32 %v1692, 1.0
      %v1821 = vadd.f32 %v1693, 1.0
      %v1822 = vadd.f32 %v1694, 1.0
      %v1823 = vadd.f32 %v1695, 1.0
      %v1824 = vadd.f32 %v1696, 1.0
      %v1825 = vadd.f32 %v1697, 1.0
      %v1826 = vadd.f32 %v1698, 1.0
      %v1827 = vadd.f32 %v1699, 1.0
      %v1828 = vadd.f32 %v1700, 1.0
      %v1829 = vadd.f32 %v1701, 1.0
      %v1830 = vadd.f32 %v1702, 1.0
      %v1831 = vadd.f32 %v1703, 1.0
      %v1832 = vadd.f32 %v1704, 1.0
      %v1833 = vadd.f32 %v1705, 1.0
      %v1834 = vadd.f32 %v1706, 1.0
      %v1835 = vadd.f32 %v1707, 1.0
      %v1836 = vadd.f32 %v1708, 1.0
      %v1837 = vadd.f32 %v1709, 1.0
      %v1838 = vadd.f32 %v1710, 1.0
      %v1839 = vadd.f32 %v1711, 1.0
      %v1840 = vadd.f32 %v1712, 1.0
      %v1841 = vadd.f32 %v1713, 1.0
      %v1842 = vadd.f32 %v1714, 1.0
      %v1843 = vadd.f32 %v1715, 1.0
      %v1844 = vadd.f32 %v1716, 1.0
      %v1845 = vadd.f32 %v1717, 1.0
      %v1846 = vadd.f32 %v1718, 1.0
      %v1847 = vpack.c.bf16 %v1720, %v1719
      %v1848 = vpack.c.bf16 %v1722, %v1721
      %v1849 = vpack.c.bf16 %v1724, %v1723
      %v1850 = vpack.c.bf16 %v1726, %v1725
      %v1851 = vpack.c.bf16 %v1728, %v1727
      %v1852 = vpack.c.bf16 %v1730, %v1729
      %v1853 = vpack.c.bf16 %v1732, %v1731
      %v1854 = vpack.c.bf16 %v1734, %v1733
      %v1855 = vpack.c.bf16 %v1736, %v1735
      %v1856 = vpack.c.bf16 %v1738, %v1737
      %v1857 = vpack.c.bf16 %v1740, %v1739
      %v1858 = vpack.c.bf16 %v1742, %v1741
      %v1859 = vpack.c.bf16 %v1744, %v1743
      %v1860 = vpack.c.bf16 %v1746, %v1745
      %v1861 = vpack.c.bf16 %v1748, %v1747
      %v1862 = vpack.c.bf16 %v1750, %v1749
      %v1863 = vpack.c.bf16 %v1752, %v1751
      %v1864 = vpack.c.bf16 %v1754, %v1753
      %v1865 = vpack.c.bf16 %v1756, %v1755
      %v1866 = vpack.c.bf16 %v1758, %v1757
      %v1867 = vpack.c.bf16 %v1760, %v1759
      %v1868 = vpack.c.bf16 %v1762, %v1761
      %v1869 = vpack.c.bf16 %v1764, %v1763
      %v1870 = vpack.c.bf16 %v1766, %v1765
      %v1871 = vpack.c.bf16 %v1768, %v1767
      %v1872 = vpack.c.bf16 %v1770, %v1769
      %v1873 = vpack.c.bf16 %v1772, %v1771
      %v1874 = vpack.c.bf16 %v1774, %v1773
      %v1875 = vpack.c.bf16 %v1776, %v1775
      %v1876 = vpack.c.bf16 %v1778, %v1777
      %v1877 = vpack.c.bf16 %v1780, %v1779
      %v1878 = vpack.c.bf16 %v1782, %v1781
      %v1879 = vpack.c.bf16 %v1784, %v1783
      %v1880 = vpack.c.bf16 %v1786, %v1785
      %v1881 = vpack.c.bf16 %v1788, %v1787
      %v1882 = vpack.c.bf16 %v1790, %v1789
      %v1883 = vpack.c.bf16 %v1792, %v1791
      %v1884 = vpack.c.bf16 %v1794, %v1793
      %v1885 = vpack.c.bf16 %v1796, %v1795
      %v1886 = vpack.c.bf16 %v1798, %v1797
      %v1887 = vpack.c.bf16 %v1800, %v1799
      %v1888 = vpack.c.bf16 %v1802, %v1801
      %v1889 = vpack.c.bf16 %v1804, %v1803
      %v1890 = vpack.c.bf16 %v1806, %v1805
      %v1891 = vpack.c.bf16 %v1808, %v1807
      %v1892 = vpack.c.bf16 %v1810, %v1809
      %v1893 = vpack.c.bf16 %v1812, %v1811
      %v1894 = vpack.c.bf16 %v1814, %v1813
      %v1895 = vpack.c.bf16 %v1816, %v1815
      %v1896 = vpack.c.bf16 %v1818, %v1817
      %v1897 = vpack.c.bf16 %v1820, %v1819
      %v1898 = vpack.c.bf16 %v1822, %v1821
      %v1899 = vpack.c.bf16 %v1824, %v1823
      %v1900 = vpack.c.bf16 %v1826, %v1825
      %v1901 = vpack.c.bf16 %v1828, %v1827
      %v1902 = vpack.c.bf16 %v1830, %v1829
      %v1903 = vpack.c.bf16 %v1832, %v1831
      %v1904 = vpack.c.bf16 %v1834, %v1833
      %v1905 = vpack.c.bf16 %v1836, %v1835
      %v1906 = vpack.c.bf16 %v1838, %v1837
      %v1907 = vpack.c.bf16 %v1840, %v1839
      %v1908 = vpack.c.bf16 %v1842, %v1841
      %v1909 = vpack.c.bf16 %v1844, %v1843
      %v1910 = vpack.c.bf16 %v1846, %v1845
      %v1911 = vunpack.c.h.bf16 1065369472
      %v1912 = vunpack.c.l.bf16 1065369472
      %v1913 = vunpack.c.h.bf16 %v1847
      %v1914 = vunpack.c.l.bf16 %v1847
      %v1915 = vrcp.pop %v1913
      %v1916 = vmul.f32 %v1911, %v1915
      %v1917 = vrcp.pop %v1914
      %v1918 = vmul.f32 %v1912, %v1917
      %v1919 = vpack.c.bf16 %v1916, %v1918
      %v1920 = vunpack.c.h.bf16 %v1848
      %v1921 = vunpack.c.l.bf16 %v1848
      %v1922 = vrcp.pop %v1920
      %v1923 = vmul.f32 %v1911, %v1922
      %v1924 = vrcp.pop %v1921
      %v1925 = vmul.f32 %v1912, %v1924
      %v1926 = vpack.c.bf16 %v1923, %v1925
      %v1927 = vunpack.c.h.bf16 %v1849
      %v1928 = vunpack.c.l.bf16 %v1849
      %v1929 = vrcp.pop %v1927
      %v1930 = vmul.f32 %v1911, %v1929
      %v1931 = vrcp.pop %v1928
      %v1932 = vmul.f32 %v1912, %v1931
      %v1933 = vpack.c.bf16 %v1930, %v1932
      %v1934 = vunpack.c.h.bf16 %v1850
      %v1935 = vunpack.c.l.bf16 %v1850
      %v1936 = vrcp.pop %v1934
      %v1937 = vmul.f32 %v1911, %v1936
      %v1938 = vrcp.pop %v1935
      %v1939 = vmul.f32 %v1912, %v1938
      %v1940 = vpack.c.bf16 %v1937, %v1939
      %v1941 = vunpack.c.h.bf16 %v1851
      %v1942 = vunpack.c.l.bf16 %v1851
      %v1943 = vrcp.pop %v1941
      %v1944 = vmul.f32 %v1911, %v1943
      %v1945 = vrcp.pop %v1942
      %v1946 = vmul.f32 %v1912, %v1945
      %v1947 = vpack.c.bf16 %v1944, %v1946
      %v1948 = vunpack.c.h.bf16 %v1852
      %v1949 = vunpack.c.l.bf16 %v1852
      %v1950 = vrcp.pop %v1948
      %v1951 = vmul.f32 %v1911, %v1950
      %v1952 = vrcp.pop %v1949
      %v1953 = vmul.f32 %v1912, %v1952
      %v1954 = vpack.c.bf16 %v1951, %v1953
      %v1955 = vunpack.c.h.bf16 %v1853
      %v1956 = vunpack.c.l.bf16 %v1853
      %v1957 = vrcp.pop %v1955
      %v1958 = vmul.f32 %v1911, %v1957
      %v1959 = vrcp.pop %v1956
      %v1960 = vmul.f32 %v1912, %v1959
      %v1961 = vpack.c.bf16 %v1958, %v1960
      %v1962 = vunpack.c.h.bf16 %v1854
      %v1963 = vunpack.c.l.bf16 %v1854
      %v1964 = vrcp.pop %v1962
      %v1965 = vmul.f32 %v1911, %v1964
      %v1966 = vrcp.pop %v1963
      %v1967 = vmul.f32 %v1912, %v1966
      %v1968 = vpack.c.bf16 %v1965, %v1967
      %v1969 = vunpack.c.h.bf16 %v1855
      %v1970 = vunpack.c.l.bf16 %v1855
      %v1971 = vrcp.pop %v1969
      %v1972 = vmul.f32 %v1911, %v1971
      %v1973 = vrcp.pop %v1970
      %v1974 = vmul.f32 %v1912, %v1973
      %v1975 = vpack.c.bf16 %v1972, %v1974
      %v1976 = vunpack.c.h.bf16 %v1856
      %v1977 = vunpack.c.l.bf16 %v1856
      %v1978 = vrcp.pop %v1976
      %v1979 = vmul.f32 %v1911, %v1978
      %v1980 = vrcp.pop %v1977
      %v1981 = vmul.f32 %v1912, %v1980
      %v1982 = vpack.c.bf16 %v1979, %v1981
      %v1983 = vunpack.c.h.bf16 %v1857
      %v1984 = vunpack.c.l.bf16 %v1857
      %v1985 = vrcp.pop %v1983
      %v1986 = vmul.f32 %v1911, %v1985
      %v1987 = vrcp.pop %v1984
      %v1988 = vmul.f32 %v1912, %v1987
      %v1989 = vpack.c.bf16 %v1986, %v1988
      %v1990 = vunpack.c.h.bf16 %v1858
      %v1991 = vunpack.c.l.bf16 %v1858
      %v1992 = vrcp.pop %v1990
      %v1993 = vmul.f32 %v1911, %v1992
      %v1994 = vrcp.pop %v1991
      %v1995 = vmul.f32 %v1912, %v1994
      %v1996 = vpack.c.bf16 %v1993, %v1995
      %v1997 = vunpack.c.h.bf16 %v1859
      %v1998 = vunpack.c.l.bf16 %v1859
      %v1999 = vrcp.pop %v1997
      %v2000 = vmul.f32 %v1911, %v1999
      %v2001 = vrcp.pop %v1998
      %v2002 = vmul.f32 %v1912, %v2001
      %v2003 = vpack.c.bf16 %v2000, %v2002
      %v2004 = vunpack.c.h.bf16 %v1860
      %v2005 = vunpack.c.l.bf16 %v1860
      %v2006 = vrcp.pop %v2004
      %v2007 = vmul.f32 %v1911, %v2006
      %v2008 = vrcp.pop %v2005
      %v2009 = vmul.f32 %v1912, %v2008
      %v2010 = vpack.c.bf16 %v2007, %v2009
      %v2011 = vunpack.c.h.bf16 %v1861
      %v2012 = vunpack.c.l.bf16 %v1861
      %v2013 = vrcp.pop %v2011
      %v2014 = vmul.f32 %v1911, %v2013
      %v2015 = vrcp.pop %v2012
      %v2016 = vmul.f32 %v1912, %v2015
      %v2017 = vpack.c.bf16 %v2014, %v2016
      %v2018 = vunpack.c.h.bf16 %v1862
      %v2019 = vunpack.c.l.bf16 %v1862
      %v2020 = vrcp.pop %v2018
      %v2021 = vmul.f32 %v1911, %v2020
      %v2022 = vrcp.pop %v2019
      %v2023 = vmul.f32 %v1912, %v2022
      %v2024 = vpack.c.bf16 %v2021, %v2023
      %v2025 = vunpack.c.h.bf16 %v1863
      %v2026 = vunpack.c.l.bf16 %v1863
      %v2027 = vrcp.pop %v2025
      %v2028 = vmul.f32 %v1911, %v2027
      %v2029 = vrcp.pop %v2026
      %v2030 = vmul.f32 %v1912, %v2029
      %v2031 = vpack.c.bf16 %v2028, %v2030
      %v2032 = vunpack.c.h.bf16 %v1864
      %v2033 = vunpack.c.l.bf16 %v1864
      %v2034 = vrcp.pop %v2032
      %v2035 = vmul.f32 %v1911, %v2034
      %v2036 = vrcp.pop %v2033
      %v2037 = vmul.f32 %v1912, %v2036
      %v2038 = vpack.c.bf16 %v2035, %v2037
      %v2039 = vunpack.c.h.bf16 %v1865
      %v2040 = vunpack.c.l.bf16 %v1865
      %v2041 = vrcp.pop %v2039
      %v2042 = vmul.f32 %v1911, %v2041
      %v2043 = vrcp.pop %v2040
      %v2044 = vmul.f32 %v1912, %v2043
      %v2045 = vpack.c.bf16 %v2042, %v2044
      %v2046 = vunpack.c.h.bf16 %v1866
      %v2047 = vunpack.c.l.bf16 %v1866
      %v2048 = vrcp.pop %v2046
      %v2049 = vmul.f32 %v1911, %v2048
      %v2050 = vrcp.pop %v2047
      %v2051 = vmul.f32 %v1912, %v2050
      %v2052 = vpack.c.bf16 %v2049, %v2051
      %v2053 = vunpack.c.h.bf16 %v1867
      %v2054 = vunpack.c.l.bf16 %v1867
      %v2055 = vrcp.pop %v2053
      %v2056 = vmul.f32 %v1911, %v2055
      %v2057 = vrcp.pop %v2054
      %v2058 = vmul.f32 %v1912, %v2057
      %v2059 = vpack.c.bf16 %v2056, %v2058
      %v2060 = vunpack.c.h.bf16 %v1868
      %v2061 = vunpack.c.l.bf16 %v1868
      %v2062 = vrcp.pop %v2060
      %v2063 = vmul.f32 %v1911, %v2062
      %v2064 = vrcp.pop %v2061
      %v2065 = vmul.f32 %v1912, %v2064
      %v2066 = vpack.c.bf16 %v2063, %v2065
      %v2067 = vunpack.c.h.bf16 %v1869
      %v2068 = vunpack.c.l.bf16 %v1869
      %v2069 = vrcp.pop %v2067
      %v2070 = vmul.f32 %v1911, %v2069
      %v2071 = vrcp.pop %v2068
      %v2072 = vmul.f32 %v1912, %v2071
      %v2073 = vpack.c.bf16 %v2070, %v2072
      %v2074 = vunpack.c.h.bf16 %v1870
      %v2075 = vunpack.c.l.bf16 %v1870
      %v2076 = vrcp.pop %v2074
      %v2077 = vmul.f32 %v1911, %v2076
      %v2078 = vrcp.pop %v2075
      %v2079 = vmul.f32 %v1912, %v2078
      %v2080 = vpack.c.bf16 %v2077, %v2079
      %v2081 = vunpack.c.h.bf16 %v1871
      %v2082 = vunpack.c.l.bf16 %v1871
      %v2083 = vrcp.pop %v2081
      %v2084 = vmul.f32 %v1911, %v2083
      %v2085 = vrcp.pop %v2082
      %v2086 = vmul.f32 %v1912, %v2085
      %v2087 = vpack.c.bf16 %v2084, %v2086
      %v2088 = vunpack.c.h.bf16 %v1872
      %v2089 = vunpack.c.l.bf16 %v1872
      %v2090 = vrcp.pop %v2088
      %v2091 = vmul.f32 %v1911, %v2090
      %v2092 = vrcp.pop %v2089
      %v2093 = vmul.f32 %v1912, %v2092
      %v2094 = vpack.c.bf16 %v2091, %v2093
      %v2095 = vunpack.c.h.bf16 %v1873
      %v2096 = vunpack.c.l.bf16 %v1873
      %v2097 = vrcp.pop %v2095
      %v2098 = vmul.f32 %v1911, %v2097
      %v2099 = vrcp.pop %v2096
      %v2100 = vmul.f32 %v1912, %v2099
      %v2101 = vpack.c.bf16 %v2098, %v2100
      %v2102 = vunpack.c.h.bf16 %v1874
      %v2103 = vunpack.c.l.bf16 %v1874
      %v2104 = vrcp.pop %v2102
      %v2105 = vmul.f32 %v1911, %v2104
      %v2106 = vrcp.pop %v2103
      %v2107 = vmul.f32 %v1912, %v2106
      %v2108 = vpack.c.bf16 %v2105, %v2107
      %v2109 = vunpack.c.h.bf16 %v1875
      %v2110 = vunpack.c.l.bf16 %v1875
      %v2111 = vrcp.pop %v2109
      %v2112 = vmul.f32 %v1911, %v2111
      %v2113 = vrcp.pop %v2110
      %v2114 = vmul.f32 %v1912, %v2113
      %v2115 = vpack.c.bf16 %v2112, %v2114
      %v2116 = vunpack.c.h.bf16 %v1876
      %v2117 = vunpack.c.l.bf16 %v1876
      %v2118 = vrcp.pop %v2116
      %v2119 = vmul.f32 %v1911, %v2118
      %v2120 = vrcp.pop %v2117
      %v2121 = vmul.f32 %v1912, %v2120
      %v2122 = vpack.c.bf16 %v2119, %v2121
      %v2123 = vunpack.c.h.bf16 %v1877
      %v2124 = vunpack.c.l.bf16 %v1877
      %v2125 = vrcp.pop %v2123
      %v2126 = vmul.f32 %v1911, %v2125
      %v2127 = vrcp.pop %v2124
      %v2128 = vmul.f32 %v1912, %v2127
      %v2129 = vpack.c.bf16 %v2126, %v2128
      %v2130 = vunpack.c.h.bf16 %v1878
      %v2131 = vunpack.c.l.bf16 %v1878
      %v2132 = vrcp.pop %v2130
      %v2133 = vmul.f32 %v1911, %v2132
      %v2134 = vrcp.pop %v2131
      %v2135 = vmul.f32 %v1912, %v2134
      %v2136 = vpack.c.bf16 %v2133, %v2135
      %v2137 = vunpack.c.h.bf16 %v1879
      %v2138 = vunpack.c.l.bf16 %v1879
      %v2139 = vrcp.pop %v2137
      %v2140 = vmul.f32 %v1911, %v2139
      %v2141 = vrcp.pop %v2138
      %v2142 = vmul.f32 %v1912, %v2141
      %v2143 = vpack.c.bf16 %v2140, %v2142
      %v2144 = vunpack.c.h.bf16 %v1880
      %v2145 = vunpack.c.l.bf16 %v1880
      %v2146 = vrcp.pop %v2144
      %v2147 = vmul.f32 %v1911, %v2146
      %v2148 = vrcp.pop %v2145
      %v2149 = vmul.f32 %v1912, %v2148
      %v2150 = vpack.c.bf16 %v2147, %v2149
      %v2151 = vunpack.c.h.bf16 %v1881
      %v2152 = vunpack.c.l.bf16 %v1881
      %v2153 = vrcp.pop %v2151
      %v2154 = vmul.f32 %v1911, %v2153
      %v2155 = vrcp.pop %v2152
      %v2156 = vmul.f32 %v1912, %v2155
      %v2157 = vpack.c.bf16 %v2154, %v2156
      %v2158 = vunpack.c.h.bf16 %v1882
      %v2159 = vunpack.c.l.bf16 %v1882
      %v2160 = vrcp.pop %v2158
      %v2161 = vmul.f32 %v1911, %v2160
      %v2162 = vrcp.pop %v2159
      %v2163 = vmul.f32 %v1912, %v2162
      %v2164 = vpack.c.bf16 %v2161, %v2163
      %v2165 = vunpack.c.h.bf16 %v1883
      %v2166 = vunpack.c.l.bf16 %v1883
      %v2167 = vrcp.pop %v2165
      %v2168 = vmul.f32 %v1911, %v2167
      %v2169 = vrcp.pop %v2166
      %v2170 = vmul.f32 %v1912, %v2169
      %v2171 = vpack.c.bf16 %v2168, %v2170
      %v2172 = vunpack.c.h.bf16 %v1884
      %v2173 = vunpack.c.l.bf16 %v1884
      %v2174 = vrcp.pop %v2172
      %v2175 = vmul.f32 %v1911, %v2174
      %v2176 = vrcp.pop %v2173
      %v2177 = vmul.f32 %v1912, %v2176
      %v2178 = vpack.c.bf16 %v2175, %v2177
      %v2179 = vunpack.c.h.bf16 %v1885
      %v2180 = vunpack.c.l.bf16 %v1885
      %v2181 = vrcp.pop %v2179
      %v2182 = vmul.f32 %v1911, %v2181
      %v2183 = vrcp.pop %v2180
      %v2184 = vmul.f32 %v1912, %v2183
      %v2185 = vpack.c.bf16 %v2182, %v2184
      %v2186 = vunpack.c.h.bf16 %v1886
      %v2187 = vunpack.c.l.bf16 %v1886
      %v2188 = vrcp.pop %v2186
      %v2189 = vmul.f32 %v1911, %v2188
      %v2190 = vrcp.pop %v2187
      %v2191 = vmul.f32 %v1912, %v2190
      %v2192 = vpack.c.bf16 %v2189, %v2191
      %v2193 = vunpack.c.h.bf16 %v1887
      %v2194 = vunpack.c.l.bf16 %v1887
      %v2195 = vrcp.pop %v2193
      %v2196 = vmul.f32 %v1911, %v2195
      %v2197 = vrcp.pop %v2194
      %v2198 = vmul.f32 %v1912, %v2197
      %v2199 = vpack.c.bf16 %v2196, %v2198
      %v2200 = vunpack.c.h.bf16 %v1888
      %v2201 = vunpack.c.l.bf16 %v1888
      %v2202 = vrcp.pop %v2200
      %v2203 = vmul.f32 %v1911, %v2202
      %v2204 = vrcp.pop %v2201
      %v2205 = vmul.f32 %v1912, %v2204
      %v2206 = vpack.c.bf16 %v2203, %v2205
      %v2207 = vunpack.c.h.bf16 %v1889
      %v2208 = vunpack.c.l.bf16 %v1889
      %v2209 = vrcp.pop %v2207
      %v2210 = vmul.f32 %v1911, %v2209
      %v2211 = vrcp.pop %v2208
      %v2212 = vmul.f32 %v1912, %v2211
      %v2213 = vpack.c.bf16 %v2210, %v2212
      %v2214 = vunpack.c.h.bf16 %v1890
      %v2215 = vunpack.c.l.bf16 %v1890
      %v2216 = vrcp.pop %v2214
      %v2217 = vmul.f32 %v1911, %v2216
      %v2218 = vrcp.pop %v2215
      %v2219 = vmul.f32 %v1912, %v2218
      %v2220 = vpack.c.bf16 %v2217, %v2219
      %v2221 = vunpack.c.h.bf16 %v1891
      %v2222 = vunpack.c.l.bf16 %v1891
      %v2223 = vrcp.pop %v2221
      %v2224 = vmul.f32 %v1911, %v2223
      %v2225 = vrcp.pop %v2222
      %v2226 = vmul.f32 %v1912, %v2225
      %v2227 = vpack.c.bf16 %v2224, %v2226
      %v2228 = vunpack.c.h.bf16 %v1892
      %v2229 = vunpack.c.l.bf16 %v1892
      %v2230 = vrcp.pop %v2228
      %v2231 = vmul.f32 %v1911, %v2230
      %v2232 = vrcp.pop %v2229
      %v2233 = vmul.f32 %v1912, %v2232
      %v2234 = vpack.c.bf16 %v2231, %v2233
      %v2235 = vunpack.c.h.bf16 %v1893
      %v2236 = vunpack.c.l.bf16 %v1893
      %v2237 = vrcp.pop %v2235
      %v2238 = vmul.f32 %v1911, %v2237
      %v2239 = vrcp.pop %v2236
      %v2240 = vmul.f32 %v1912, %v2239
      %v2241 = vpack.c.bf16 %v2238, %v2240
      %v2242 = vunpack.c.h.bf16 %v1894
      %v2243 = vunpack.c.l.bf16 %v1894
      %v2244 = vrcp.pop %v2242
      %v2245 = vmul.f32 %v1911, %v2244
      %v2246 = vrcp.pop %v2243
      %v2247 = vmul.f32 %v1912, %v2246
      %v2248 = vpack.c.bf16 %v2245, %v2247
      %v2249 = vunpack.c.h.bf16 %v1895
      %v2250 = vunpack.c.l.bf16 %v1895
      %v2251 = vrcp.pop %v2249
      %v2252 = vmul.f32 %v1911, %v2251
      %v2253 = vrcp.pop %v2250
      %v2254 = vmul.f32 %v1912, %v2253
      %v2255 = vpack.c.bf16 %v2252, %v2254
      %v2256 = vunpack.c.h.bf16 %v1896
      %v2257 = vunpack.c.l.bf16 %v1896
      %v2258 = vrcp.pop %v2256
      %v2259 = vmul.f32 %v1911, %v2258
      %v2260 = vrcp.pop %v2257
      %v2261 = vmul.f32 %v1912, %v2260
      %v2262 = vpack.c.bf16 %v2259, %v2261
      %v2263 = vunpack.c.h.bf16 %v1897
      %v2264 = vunpack.c.l.bf16 %v1897
      %v2265 = vrcp.pop %v2263
      %v2266 = vmul.f32 %v1911, %v2265
      %v2267 = vrcp.pop %v2264
      %v2268 = vmul.f32 %v1912, %v2267
      %v2269 = vpack.c.bf16 %v2266, %v2268
      %v2270 = vunpack.c.h.bf16 %v1898
      %v2271 = vunpack.c.l.bf16 %v1898
      %v2272 = vrcp.pop %v2270
      %v2273 = vmul.f32 %v1911, %v2272
      %v2274 = vrcp.pop %v2271
      %v2275 = vmul.f32 %v1912, %v2274
      %v2276 = vpack.c.bf16 %v2273, %v2275
      %v2277 = vunpack.c.h.bf16 %v1899
      %v2278 = vunpack.c.l.bf16 %v1899
      %v2279 = vrcp.pop %v2277
      %v2280 = vmul.f32 %v1911, %v2279
      %v2281 = vrcp.pop %v2278
      %v2282 = vmul.f32 %v1912, %v2281
      %v2283 = vpack.c.bf16 %v2280, %v2282
      %v2284 = vunpack.c.h.bf16 %v1900
      %v2285 = vunpack.c.l.bf16 %v1900
      %v2286 = vrcp.pop %v2284
      %v2287 = vmul.f32 %v1911, %v2286
      %v2288 = vrcp.pop %v2285
      %v2289 = vmul.f32 %v1912, %v2288
      %v2290 = vpack.c.bf16 %v2287, %v2289
      %v2291 = vunpack.c.h.bf16 %v1901
      %v2292 = vunpack.c.l.bf16 %v1901
      %v2293 = vrcp.pop %v2291
      %v2294 = vmul.f32 %v1911, %v2293
      %v2295 = vrcp.pop %v2292
      %v2296 = vmul.f32 %v1912, %v2295
      %v2297 = vpack.c.bf16 %v2294, %v2296
      %v2298 = vunpack.c.h.bf16 %v1902
      %v2299 = vunpack.c.l.bf16 %v1902
      %v2300 = vrcp.pop %v2298
      %v2301 = vmul.f32 %v1911, %v2300
      %v2302 = vrcp.pop %v2299
      %v2303 = vmul.f32 %v1912, %v2302
      %v2304 = vpack.c.bf16 %v2301, %v2303
      %v2305 = vunpack.c.h.bf16 %v1903
      %v2306 = vunpack.c.l.bf16 %v1903
      %v2307 = vrcp.pop %v2305
      %v2308 = vmul.f32 %v1911, %v2307
      %v2309 = vrcp.pop %v2306
      %v2310 = vmul.f32 %v1912, %v2309
      %v2311 = vpack.c.bf16 %v2308, %v2310
      %v2312 = vunpack.c.h.bf16 %v1904
      %v2313 = vunpack.c.l.bf16 %v1904
      %v2314 = vrcp.pop %v2312
      %v2315 = vmul.f32 %v1911, %v2314
      %v2316 = vrcp.pop %v2313
      %v2317 = vmul.f32 %v1912, %v2316
      %v2318 = vpack.c.bf16 %v2315, %v2317
      %v2319 = vunpack.c.h.bf16 %v1905
      %v2320 = vunpack.c.l.bf16 %v1905
      %v2321 = vrcp.pop %v2319
      %v2322 = vmul.f32 %v1911, %v2321
      %v2323 = vrcp.pop %v2320
      %v2324 = vmul.f32 %v1912, %v2323
      %v2325 = vpack.c.bf16 %v2322, %v2324
      %v2326 = vunpack.c.h.bf16 %v1906
      %v2327 = vunpack.c.l.bf16 %v1906
      %v2328 = vrcp.pop %v2326
      %v2329 = vmul.f32 %v1911, %v2328
      %v2330 = vrcp.pop %v2327
      %v2331 = vmul.f32 %v1912, %v2330
      %v2332 = vpack.c.bf16 %v2329, %v2331
      %v2333 = vunpack.c.h.bf16 %v1907
      %v2334 = vunpack.c.l.bf16 %v1907
      %v2335 = vrcp.pop %v2333
      %v2336 = vmul.f32 %v1911, %v2335
      %v2337 = vrcp.pop %v2334
      %v2338 = vmul.f32 %v1912, %v2337
      %v2339 = vpack.c.bf16 %v2336, %v2338
      %v2340 = vunpack.c.h.bf16 %v1908
      %v2341 = vunpack.c.l.bf16 %v1908
      %v2342 = vrcp.pop %v2340
      %v2343 = vmul.f32 %v1911, %v2342
      %v2344 = vrcp.pop %v2341
      %v2345 = vmul.f32 %v1912, %v2344
      %v2346 = vpack.c.bf16 %v2343, %v2345
      %v2347 = vunpack.c.h.bf16 %v1909
      %v2348 = vunpack.c.l.bf16 %v1909
      %v2349 = vrcp.pop %v2347
      %v2350 = vmul.f32 %v1911, %v2349
      %v2351 = vrcp.pop %v2348
      %v2352 = vmul.f32 %v1912, %v2351
      %v2353 = vpack.c.bf16 %v2350, %v2352
      %v2354 = vunpack.c.h.bf16 %v1910
      %v2355 = vunpack.c.l.bf16 %v1910
      %v2356 = vrcp.pop %v2354
      %v2357 = vmul.f32 %v1911, %v2356
      %v2358 = vrcp.pop %v2355
      %v2359 = vmul.f32 %v1912, %v2358
      %v2360 = vpack.c.bf16 %v2357, %v2359
      %v2361 = vunpack.c.l.bf16 %v1015
      %v2362 = vunpack.c.h.bf16 %v1015
      %v2363 = vunpack.c.l.bf16 %v1016
      %v2364 = vunpack.c.h.bf16 %v1016
      %v2365 = vunpack.c.l.bf16 %v1017
      %v2366 = vunpack.c.h.bf16 %v1017
      %v2367 = vunpack.c.l.bf16 %v1018
      %v2368 = vunpack.c.h.bf16 %v1018
      %v2369 = vunpack.c.l.bf16 %v1019
      %v2370 = vunpack.c.h.bf16 %v1019
      %v2371 = vunpack.c.l.bf16 %v1020
      %v2372 = vunpack.c.h.bf16 %v1020
      %v2373 = vunpack.c.l.bf16 %v1021
      %v2374 = vunpack.c.h.bf16 %v1021
      %v2375 = vunpack.c.l.bf16 %v1022
      %v2376 = vunpack.c.h.bf16 %v1022
      %v2377 = vunpack.c.l.bf16 %v1023
      %v2378 = vunpack.c.h.bf16 %v1023
      %v2379 = vunpack.c.l.bf16 %v1024
      %v2380 = vunpack.c.h.bf16 %v1024
      %v2381 = vunpack.c.l.bf16 %v1025
      %v2382 = vunpack.c.h.bf16 %v1025
      %v2383 = vunpack.c.l.bf16 %v1026
      %v2384 = vunpack.c.h.bf16 %v1026
      %v2385 = vunpack.c.l.bf16 %v1027
      %v2386 = vunpack.c.h.bf16 %v1027
      %v2387 = vunpack.c.l.bf16 %v1028
      %v2388 = vunpack.c.h.bf16 %v1028
      %v2389 = vunpack.c.l.bf16 %v1029
      %v2390 = vunpack.c.h.bf16 %v1029
      %v2391 = vunpack.c.l.bf16 %v1030
      %v2392 = vunpack.c.h.bf16 %v1030
      %v2393 = vunpack.c.l.bf16 %v1031
      %v2394 = vunpack.c.h.bf16 %v1031
      %v2395 = vunpack.c.l.bf16 %v1032
      %v2396 = vunpack.c.h.bf16 %v1032
      %v2397 = vunpack.c.l.bf16 %v1033
      %v2398 = vunpack.c.h.bf16 %v1033
      %v2399 = vunpack.c.l.bf16 %v1034
      %v2400 = vunpack.c.h.bf16 %v1034
      %v2401 = vunpack.c.l.bf16 %v1035
      %v2402 = vunpack.c.h.bf16 %v1035
      %v2403 = vunpack.c.l.bf16 %v1036
      %v2404 = vunpack.c.h.bf16 %v1036
      %v2405 = vunpack.c.l.bf16 %v1037
      %v2406 = vunpack.c.h.bf16 %v1037
      %v2407 = vunpack.c.l.bf16 %v1038
      %v2408 = vunpack.c.h.bf16 %v1038
      %v2409 = vunpack.c.l.bf16 %v1039
      %v2410 = vunpack.c.h.bf16 %v1039
      %v2411 = vunpack.c.l.bf16 %v1040
      %v2412 = vunpack.c.h.bf16 %v1040
      %v2413 = vunpack.c.l.bf16 %v1041
      %v2414 = vunpack.c.h.bf16 %v1041
      %v2415 = vunpack.c.l.bf16 %v1042
      %v2416 = vunpack.c.h.bf16 %v1042
      %v2417 = vunpack.c.l.bf16 %v1043
      %v2418 = vunpack.c.h.bf16 %v1043
      %v2419 = vunpack.c.l.bf16 %v1044
      %v2420 = vunpack.c.h.bf16 %v1044
      %v2421 = vunpack.c.l.bf16 %v1045
      %v2422 = vunpack.c.h.bf16 %v1045
      %v2423 = vunpack.c.l.bf16 %v1046
      %v2424 = vunpack.c.h.bf16 %v1046
      %v2425 = vunpack.c.l.bf16 %v1047
      %v2426 = vunpack.c.h.bf16 %v1047
      %v2427 = vunpack.c.l.bf16 %v1048
      %v2428 = vunpack.c.h.bf16 %v1048
      %v2429 = vunpack.c.l.bf16 %v1049
      %v2430 = vunpack.c.h.bf16 %v1049
      %v2431 = vunpack.c.l.bf16 %v1050
      %v2432 = vunpack.c.h.bf16 %v1050
      %v2433 = vunpack.c.l.bf16 %v1051
      %v2434 = vunpack.c.h.bf16 %v1051
      %v2435 = vunpack.c.l.bf16 %v1052
      %v2436 = vunpack.c.h.bf16 %v1052
      %v2437 = vunpack.c.l.bf16 %v1053
      %v2438 = vunpack.c.h.bf16 %v1053
      %v2439 = vunpack.c.l.bf16 %v1054
      %v2440 = vunpack.c.h.bf16 %v1054
      %v2441 = vunpack.c.l.bf16 %v1055
      %v2442 = vunpack.c.h.bf16 %v1055
      %v2443 = vunpack.c.l.bf16 %v1056
      %v2444 = vunpack.c.h.bf16 %v1056
      %v2445 = vunpack.c.l.bf16 %v1057
      %v2446 = vunpack.c.h.bf16 %v1057
      %v2447 = vunpack.c.l.bf16 %v1058
      %v2448 = vunpack.c.h.bf16 %v1058
      %v2449 = vunpack.c.l.bf16 %v1059
      %v2450 = vunpack.c.h.bf16 %v1059
      %v2451 = vunpack.c.l.bf16 %v1060
      %v2452 = vunpack.c.h.bf16 %v1060
      %v2453 = vunpack.c.l.bf16 %v1061
      %v2454 = vunpack.c.h.bf16 %v1061
      %v2455 = vunpack.c.l.bf16 %v1062
      %v2456 = vunpack.c.h.bf16 %v1062
      %v2457 = vunpack.c.l.bf16 %v1063
      %v2458 = vunpack.c.h.bf16 %v1063
      %v2459 = vunpack.c.l.bf16 %v1064
      %v2460 = vunpack.c.h.bf16 %v1064
      %v2461 = vunpack.c.l.bf16 %v1065
      %v2462 = vunpack.c.h.bf16 %v1065
      %v2463 = vunpack.c.l.bf16 %v1066
      %v2464 = vunpack.c.h.bf16 %v1066
      %v2465 = vunpack.c.l.bf16 %v1067
      %v2466 = vunpack.c.h.bf16 %v1067
      %v2467 = vunpack.c.l.bf16 %v1068
      %v2468 = vunpack.c.h.bf16 %v1068
      %v2469 = vunpack.c.l.bf16 %v1069
      %v2470 = vunpack.c.h.bf16 %v1069
      %v2471 = vunpack.c.l.bf16 %v1070
      %v2472 = vunpack.c.h.bf16 %v1070
      %v2473 = vunpack.c.l.bf16 %v1071
      %v2474 = vunpack.c.h.bf16 %v1071
      %v2475 = vunpack.c.l.bf16 %v1072
      %v2476 = vunpack.c.h.bf16 %v1072
      %v2477 = vunpack.c.l.bf16 %v1073
      %v2478 = vunpack.c.h.bf16 %v1073
      %v2479 = vunpack.c.l.bf16 %v1074
      %v2480 = vunpack.c.h.bf16 %v1074
      %v2481 = vunpack.c.l.bf16 %v1075
      %v2482 = vunpack.c.h.bf16 %v1075
      %v2483 = vunpack.c.l.bf16 %v1076
      %v2484 = vunpack.c.h.bf16 %v1076
      %v2485 = vunpack.c.l.bf16 %v1077
      %v2486 = vunpack.c.h.bf16 %v1077
      %v2487 = vunpack.c.l.bf16 %v1078
      %v2488 = vunpack.c.h.bf16 %v1078
      %v2489 = vunpack.c.l.bf16 %v1919
      %v2490 = vunpack.c.h.bf16 %v1919
      %v2491 = vunpack.c.l.bf16 %v1926
      %v2492 = vunpack.c.h.bf16 %v1926
      %v2493 = vunpack.c.l.bf16 %v1933
      %v2494 = vunpack.c.h.bf16 %v1933
      %v2495 = vunpack.c.l.bf16 %v1940
      %v2496 = vunpack.c.h.bf16 %v1940
      %v2497 = vunpack.c.l.bf16 %v1947
      %v2498 = vunpack.c.h.bf16 %v1947
      %v2499 = vunpack.c.l.bf16 %v1954
      %v2500 = vunpack.c.h.bf16 %v1954
      %v2501 = vunpack.c.l.bf16 %v1961
      %v2502 = vunpack.c.h.bf16 %v1961
      %v2503 = vunpack.c.l.bf16 %v1968
      %v2504 = vunpack.c.h.bf16 %v1968
      %v2505 = vunpack.c.l.bf16 %v1975
      %v2506 = vunpack.c.h.bf16 %v1975
      %v2507 = vunpack.c.l.bf16 %v1982
      %v2508 = vunpack.c.h.bf16 %v1982
      %v2509 = vunpack.c.l.bf16 %v1989
      %v2510 = vunpack.c.h.bf16 %v1989
      %v2511 = vunpack.c.l.bf16 %v1996
      %v2512 = vunpack.c.h.bf16 %v1996
      %v2513 = vunpack.c.l.bf16 %v2003
      %v2514 = vunpack.c.h.bf16 %v2003
      %v2515 = vunpack.c.l.bf16 %v2010
      %v2516 = vunpack.c.h.bf16 %v2010
      %v2517 = vunpack.c.l.bf16 %v2017
      %v2518 = vunpack.c.h.bf16 %v2017
      %v2519 = vunpack.c.l.bf16 %v2024
      %v2520 = vunpack.c.h.bf16 %v2024
      %v2521 = vunpack.c.l.bf16 %v2031
      %v2522 = vunpack.c.h.bf16 %v2031
      %v2523 = vunpack.c.l.bf16 %v2038
      %v2524 = vunpack.c.h.bf16 %v2038
      %v2525 = vunpack.c.l.bf16 %v2045
      %v2526 = vunpack.c.h.bf16 %v2045
      %v2527 = vunpack.c.l.bf16 %v2052
      %v2528 = vunpack.c.h.bf16 %v2052
      %v2529 = vunpack.c.l.bf16 %v2059
      %v2530 = vunpack.c.h.bf16 %v2059
      %v2531 = vunpack.c.l.bf16 %v2066
      %v2532 = vunpack.c.h.bf16 %v2066
      %v2533 = vunpack.c.l.bf16 %v2073
      %v2534 = vunpack.c.h.bf16 %v2073
      %v2535 = vunpack.c.l.bf16 %v2080
      %v2536 = vunpack.c.h.bf16 %v2080
      %v2537 = vunpack.c.l.bf16 %v2087
      %v2538 = vunpack.c.h.bf16 %v2087
      %v2539 = vunpack.c.l.bf16 %v2094
      %v2540 = vunpack.c.h.bf16 %v2094
      %v2541 = vunpack.c.l.bf16 %v2101
      %v2542 = vunpack.c.h.bf16 %v2101
      %v2543 = vunpack.c.l.bf16 %v2108
      %v2544 = vunpack.c.h.bf16 %v2108
      %v2545 = vunpack.c.l.bf16 %v2115
      %v2546 = vunpack.c.h.bf16 %v2115
      %v2547 = vunpack.c.l.bf16 %v2122
      %v2548 = vunpack.c.h.bf16 %v2122
      %v2549 = vunpack.c.l.bf16 %v2129
      %v2550 = vunpack.c.h.bf16 %v2129
      %v2551 = vunpack.c.l.bf16 %v2136
      %v2552 = vunpack.c.h.bf16 %v2136
      %v2553 = vunpack.c.l.bf16 %v2143
      %v2554 = vunpack.c.h.bf16 %v2143
      %v2555 = vunpack.c.l.bf16 %v2150
      %v2556 = vunpack.c.h.bf16 %v2150
      %v2557 = vunpack.c.l.bf16 %v2157
      %v2558 = vunpack.c.h.bf16 %v2157
      %v2559 = vunpack.c.l.bf16 %v2164
      %v2560 = vunpack.c.h.bf16 %v2164
      %v2561 = vunpack.c.l.bf16 %v2171
      %v2562 = vunpack.c.h.bf16 %v2171
      %v2563 = vunpack.c.l.bf16 %v2178
      %v2564 = vunpack.c.h.bf16 %v2178
      %v2565 = vunpack.c.l.bf16 %v2185
      %v2566 = vunpack.c.h.bf16 %v2185
      %v2567 = vunpack.c.l.bf16 %v2192
      %v2568 = vunpack.c.h.bf16 %v2192
      %v2569 = vunpack.c.l.bf16 %v2199
      %v2570 = vunpack.c.h.bf16 %v2199
      %v2571 = vunpack.c.l.bf16 %v2206
      %v2572 = vunpack.c.h.bf16 %v2206
      %v2573 = vunpack.c.l.bf16 %v2213
      %v2574 = vunpack.c.h.bf16 %v2213
      %v2575 = vunpack.c.l.bf16 %v2220
      %v2576 = vunpack.c.h.bf16 %v2220
      %v2577 = vunpack.c.l.bf16 %v2227
      %v2578 = vunpack.c.h.bf16 %v2227
      %v2579 = vunpack.c.l.bf16 %v2234
      %v2580 = vunpack.c.h.bf16 %v2234
      %v2581 = vunpack.c.l.bf16 %v2241
      %v2582 = vunpack.c.h.bf16 %v2241
      %v2583 = vunpack.c.l.bf16 %v2248
      %v2584 = vunpack.c.h.bf16 %v2248
      %v2585 = vunpack.c.l.bf16 %v2255
      %v2586 = vunpack.c.h.bf16 %v2255
      %v2587 = vunpack.c.l.bf16 %v2262
      %v2588 = vunpack.c.h.bf16 %v2262
      %v2589 = vunpack.c.l.bf16 %v2269
      %v2590 = vunpack.c.h.bf16 %v2269
      %v2591 = vunpack.c.l.bf16 %v2276
      %v2592 = vunpack.c.h.bf16 %v2276
      %v2593 = vunpack.c.l.bf16 %v2283
      %v2594 = vunpack.c.h.bf16 %v2283
      %v2595 = vunpack.c.l.bf16 %v2290
      %v2596 = vunpack.c.h.bf16 %v2290
      %v2597 = vunpack.c.l.bf16 %v2297
      %v2598 = vunpack.c.h.bf16 %v2297
      %v2599 = vunpack.c.l.bf16 %v2304
      %v2600 = vunpack.c.h.bf16 %v2304
      %v2601 = vunpack.c.l.bf16 %v2311
      %v2602 = vunpack.c.h.bf16 %v2311
      %v2603 = vunpack.c.l.bf16 %v2318
      %v2604 = vunpack.c.h.bf16 %v2318
      %v2605 = vunpack.c.l.bf16 %v2325
      %v2606 = vunpack.c.h.bf16 %v2325
      %v2607 = vunpack.c.l.bf16 %v2332
      %v2608 = vunpack.c.h.bf16 %v2332
      %v2609 = vunpack.c.l.bf16 %v2339
      %v2610 = vunpack.c.h.bf16 %v2339
      %v2611 = vunpack.c.l.bf16 %v2346
      %v2612 = vunpack.c.h.bf16 %v2346
      %v2613 = vunpack.c.l.bf16 %v2353
      %v2614 = vunpack.c.h.bf16 %v2353
      %v2615 = vunpack.c.l.bf16 %v2360
      %v2616 = vunpack.c.h.bf16 %v2360
      %v2617 = vmul.f32 %v2361, %v2489
      %v2618 = vmul.f32 %v2362, %v2490
      %v2619 = vmul.f32 %v2363, %v2491
      %v2620 = vmul.f32 %v2364, %v2492
      %v2621 = vmul.f32 %v2365, %v2493
      %v2622 = vmul.f32 %v2366, %v2494
      %v2623 = vmul.f32 %v2367, %v2495
      %v2624 = vmul.f32 %v2368, %v2496
      %v2625 = vmul.f32 %v2369, %v2497
      %v2626 = vmul.f32 %v2370, %v2498
      %v2627 = vmul.f32 %v2371, %v2499
      %v2628 = vmul.f32 %v2372, %v2500
      %v2629 = vmul.f32 %v2373, %v2501
      %v2630 = vmul.f32 %v2374, %v2502
      %v2631 = vmul.f32 %v2375, %v2503
      %v2632 = vmul.f32 %v2376, %v2504
      %v2633 = vmul.f32 %v2377, %v2505
      %v2634 = vmul.f32 %v2378, %v2506
      %v2635 = vmul.f32 %v2379, %v2507
      %v2636 = vmul.f32 %v2380, %v2508
      %v2637 = vmul.f32 %v2381, %v2509
      %v2638 = vmul.f32 %v2382, %v2510
      %v2639 = vmul.f32 %v2383, %v2511
      %v2640 = vmul.f32 %v2384, %v2512
      %v2641 = vmul.f32 %v2385, %v2513
      %v2642 = vmul.f32 %v2386, %v2514
      %v2643 = vmul.f32 %v2387, %v2515
      %v2644 = vmul.f32 %v2388, %v2516
      %v2645 = vmul.f32 %v2389, %v2517
      %v2646 = vmul.f32 %v2390, %v2518
      %v2647 = vmul.f32 %v2391, %v2519
      %v2648 = vmul.f32 %v2392, %v2520
      %v2649 = vmul.f32 %v2393, %v2521
      %v2650 = vmul.f32 %v2394, %v2522
      %v2651 = vmul.f32 %v2395, %v2523
      %v2652 = vmul.f32 %v2396, %v2524
      %v2653 = vmul.f32 %v2397, %v2525
      %v2654 = vmul.f32 %v2398, %v2526
      %v2655 = vmul.f32 %v2399, %v2527
      %v2656 = vmul.f32 %v2400, %v2528
      %v2657 = vmul.f32 %v2401, %v2529
      %v2658 = vmul.f32 %v2402, %v2530
      %v2659 = vmul.f32 %v2403, %v2531
      %v2660 = vmul.f32 %v2404, %v2532
      %v2661 = vmul.f32 %v2405, %v2533
      %v2662 = vmul.f32 %v2406, %v2534
      %v2663 = vmul.f32 %v2407, %v2535
      %v2664 = vmul.f32 %v2408, %v2536
      %v2665 = vmul.f32 %v2409, %v2537
      %v2666 = vmul.f32 %v2410, %v2538
      %v2667 = vmul.f32 %v2411, %v2539
      %v2668 = vmul.f32 %v2412, %v2540
      %v2669 = vmul.f32 %v2413, %v2541
      %v2670 = vmul.f32 %v2414, %v2542
      %v2671 = vmul.f32 %v2415, %v2543
      %v2672 = vmul.f32 %v2416, %v2544
      %v2673 = vmul.f32 %v2417, %v2545
      %v2674 = vmul.f32 %v2418, %v2546
      %v2675 = vmul.f32 %v2419, %v2547
      %v2676 = vmul.f32 %v2420, %v2548
      %v2677 = vmul.f32 %v2421, %v2549
      %v2678 = vmul.f32 %v2422, %v2550
      %v2679 = vmul.f32 %v2423, %v2551
      %v2680 = vmul.f32 %v2424, %v2552
      %v2681 = vmul.f32 %v2425, %v2553
      %v2682 = vmul.f32 %v2426, %v2554
      %v2683 = vmul.f32 %v2427, %v2555
      %v2684 = vmul.f32 %v2428, %v2556
      %v2685 = vmul.f32 %v2429, %v2557
      %v2686 = vmul.f32 %v2430, %v2558
      %v2687 = vmul.f32 %v2431, %v2559
      %v2688 = vmul.f32 %v2432, %v2560
      %v2689 = vmul.f32 %v2433, %v2561
      %v2690 = vmul.f32 %v2434, %v2562
      %v2691 = vmul.f32 %v2435, %v2563
      %v2692 = vmul.f32 %v2436, %v2564
      %v2693 = vmul.f32 %v2437, %v2565
      %v2694 = vmul.f32 %v2438, %v2566
      %v2695 = vmul.f32 %v2439, %v2567
      %v2696 = vmul.f32 %v2440, %v2568
      %v2697 = vmul.f32 %v2441, %v2569
      %v2698 = vmul.f32 %v2442, %v2570
      %v2699 = vmul.f32 %v2443, %v2571
      %v2700 = vmul.f32 %v2444, %v2572
      %v2701 = vmul.f32 %v2445, %v2573
      %v2702 = vmul.f32 %v2446, %v2574
      %v2703 = vmul.f32 %v2447, %v2575
      %v2704 = vmul.f32 %v2448, %v2576
      %v2705 = vmul.f32 %v2449, %v2577
      %v2706 = vmul.f32 %v2450, %v2578
      %v2707 = vmul.f32 %v2451, %v2579
      %v2708 = vmul.f32 %v2452, %v2580
      %v2709 = vmul.f32 %v2453, %v2581
      %v2710 = vmul.f32 %v2454, %v2582
      %v2711 = vmul.f32 %v2455, %v2583
      %v2712 = vmul.f32 %v2456, %v2584
      %v2713 = vmul.f32 %v2457, %v2585
      %v2714 = vmul.f32 %v2458, %v2586
      %v2715 = vmul.f32 %v2459, %v2587
      %v2716 = vmul.f32 %v2460, %v2588
      %v2717 = vmul.f32 %v2461, %v2589
      %v2718 = vmul.f32 %v2462, %v2590
      %v2719 = vmul.f32 %v2463, %v2591
      %v2720 = vmul.f32 %v2464, %v2592
      %v2721 = vmul.f32 %v2465, %v2593
      %v2722 = vmul.f32 %v2466, %v2594
      %v2723 = vmul.f32 %v2467, %v2595
      %v2724 = vmul.f32 %v2468, %v2596
      %v2725 = vmul.f32 %v2469, %v2597
      %v2726 = vmul.f32 %v2470, %v2598
      %v2727 = vmul.f32 %v2471, %v2599
      %v2728 = vmul.f32 %v2472, %v2600
      %v2729 = vmul.f32 %v2473, %v2601
      %v2730 = vmul.f32 %v2474, %v2602
      %v2731 = vmul.f32 %v2475, %v2603
      %v2732 = vmul.f32 %v2476, %v2604
      %v2733 = vmul.f32 %v2477, %v2605
      %v2734 = vmul.f32 %v2478, %v2606
      %v2735 = vmul.f32 %v2479, %v2607
      %v2736 = vmul.f32 %v2480, %v2608
      %v2737 = vmul.f32 %v2481, %v2609
      %v2738 = vmul.f32 %v2482, %v2610
      %v2739 = vmul.f32 %v2483, %v2611
      %v2740 = vmul.f32 %v2484, %v2612
      %v2741 = vmul.f32 %v2485, %v2613
      %v2742 = vmul.f32 %v2486, %v2614
      %v2743 = vmul.f32 %v2487, %v2615
      %v2744 = vmul.f32 %v2488, %v2616
      %v2745 = vpack.c.bf16 %v2621, %v2617
      %v2746 = vpack.c.bf16 %v2622, %v2618
      %v2747 = vpack.c.bf16 %v2623, %v2619
      %v2748 = vpack.c.bf16 %v2624, %v2620
      %v2749 = vpack.c.bf16 %v2629, %v2625
      %v2750 = vpack.c.bf16 %v2630, %v2626
      %v2751 = vpack.c.bf16 %v2631, %v2627
      %v2752 = vpack.c.bf16 %v2632, %v2628
      %v2753 = vpack.c.bf16 %v2637, %v2633
      %v2754 = vpack.c.bf16 %v2638, %v2634
      %v2755 = vpack.c.bf16 %v2639, %v2635
      %v2756 = vpack.c.bf16 %v2640, %v2636
      %v2757 = vpack.c.bf16 %v2645, %v2641
      %v2758 = vpack.c.bf16 %v2646, %v2642
      %v2759 = vpack.c.bf16 %v2647, %v2643
      %v2760 = vpack.c.bf16 %v2648, %v2644
      %v2761 = vpack.c.bf16 %v2653, %v2649
      %v2762 = vpack.c.bf16 %v2654, %v2650
      %v2763 = vpack.c.bf16 %v2655, %v2651
      %v2764 = vpack.c.bf16 %v2656, %v2652
      %v2765 = vpack.c.bf16 %v2661, %v2657
      %v2766 = vpack.c.bf16 %v2662, %v2658
      %v2767 = vpack.c.bf16 %v2663, %v2659
      %v2768 = vpack.c.bf16 %v2664, %v2660
      %v2769 = vpack.c.bf16 %v2669, %v2665
      %v2770 = vpack.c.bf16 %v2670, %v2666
      %v2771 = vpack.c.bf16 %v2671, %v2667
      %v2772 = vpack.c.bf16 %v2672, %v2668
      %v2773 = vpack.c.bf16 %v2677, %v2673
      %v2774 = vpack.c.bf16 %v2678, %v2674
      %v2775 = vpack.c.bf16 %v2679, %v2675
      %v2776 = vpack.c.bf16 %v2680, %v2676
      %v2777 = vpack.c.bf16 %v2685, %v2681
      %v2778 = vpack.c.bf16 %v2686, %v2682
      %v2779 = vpack.c.bf16 %v2687, %v2683
      %v2780 = vpack.c.bf16 %v2688, %v2684
      %v2781 = vpack.c.bf16 %v2693, %v2689
      %v2782 = vpack.c.bf16 %v2694, %v2690
      %v2783 = vpack.c.bf16 %v2695, %v2691
      %v2784 = vpack.c.bf16 %v2696, %v2692
      %v2785 = vpack.c.bf16 %v2701, %v2697
      %v2786 = vpack.c.bf16 %v2702, %v2698
      %v2787 = vpack.c.bf16 %v2703, %v2699
      %v2788 = vpack.c.bf16 %v2704, %v2700
      %v2789 = vpack.c.bf16 %v2709, %v2705
      %v2790 = vpack.c.bf16 %v2710, %v2706
      %v2791 = vpack.c.bf16 %v2711, %v2707
      %v2792 = vpack.c.bf16 %v2712, %v2708
      %v2793 = vpack.c.bf16 %v2717, %v2713
      %v2794 = vpack.c.bf16 %v2718, %v2714
      %v2795 = vpack.c.bf16 %v2719, %v2715
      %v2796 = vpack.c.bf16 %v2720, %v2716
      %v2797 = vpack.c.bf16 %v2725, %v2721
      %v2798 = vpack.c.bf16 %v2726, %v2722
      %v2799 = vpack.c.bf16 %v2727, %v2723
      %v2800 = vpack.c.bf16 %v2728, %v2724
      %v2801 = vpack.c.bf16 %v2733, %v2729
      %v2802 = vpack.c.bf16 %v2734, %v2730
      %v2803 = vpack.c.bf16 %v2735, %v2731
      %v2804 = vpack.c.bf16 %v2736, %v2732
      %v2805 = vpack.c.bf16 %v2741, %v2737
      %v2806 = vpack.c.bf16 %v2742, %v2738
      %v2807 = vpack.c.bf16 %v2743, %v2739
      %v2808 = vpack.c.bf16 %v2744, %v2740
      %v2809 = vld [vmem:[%s3] sm:$0xf]
      %v2810 = vld [vmem:[%s3 + $0x4] sm:$0xf]
      %v2811 = vld [vmem:[%s3 + $0x8] sm:$0xf]
      %v2812 = vld [vmem:[%s3 + $0xc] sm:$0xf]
      %v2813 = vld [vmem:[%s3 + $0x10] sm:$0xf]
      %v2814 = vld [vmem:[%s3 + $0x14] sm:$0xf]
      %v2815 = vld [vmem:[%s3 + $0x18] sm:$0xf]
      %v2816 = vld [vmem:[%s3 + $0x1c] sm:$0xf]
      %v2817 = vld [vmem:[%s3 + $0x20] sm:$0xf]
      %v2818 = vld [vmem:[%s3 + $0x24] sm:$0xf]
      %v2819 = vld [vmem:[%s3 + $0x28] sm:$0xf]
      %v2820 = vld [vmem:[%s3 + $0x2c] sm:$0xf]
      %v2821 = vld [vmem:[%s3 + $0x30] sm:$0xf]
      %v2822 = vld [vmem:[%s3 + $0x34] sm:$0xf]
      %v2823 = vld [vmem:[%s3 + $0x38] sm:$0xf]
      %v2824 = vld [vmem:[%s3 + $0x3c] sm:$0xf]
      %v2825 = vld [vmem:[%s3 + $0x40] sm:$0xf]
      %v2826 = vld [vmem:[%s3 + $0x44] sm:$0xf]
      %v2827 = vld [vmem:[%s3 + $0x48] sm:$0xf]
      %v2828 = vld [vmem:[%s3 + $0x4c] sm:$0xf]
      %v2829 = vld [vmem:[%s3 + $0x50] sm:$0xf]
      %v2830 = vld [vmem:[%s3 + $0x54] sm:$0xf]
      %v2831 = vld [vmem:[%s3 + $0x58] sm:$0xf]
      %v2832 = vld [vmem:[%s3 + $0x5c] sm:$0xf]
      %v2833 = vld [vmem:[%s3 + $0x60] sm:$0xf]
      %v2834 = vld [vmem:[%s3 + $0x64] sm:$0xf]
      %v2835 = vld [vmem:[%s3 + $0x68] sm:$0xf]
      %v2836 = vld [vmem:[%s3 + $0x6c] sm:$0xf]
      %v2837 = vld [vmem:[%s3 + $0x70] sm:$0xf]
      %v2838 = vld [vmem:[%s3 + $0x74] sm:$0xf]
      %v2839 = vld [vmem:[%s3 + $0x78] sm:$0xf]
      %v2840 = vld [vmem:[%s3 + $0x7c] sm:$0xf]
      %v2841 = vld [vmem:[%s3 + $0x80] sm:$0xf]
      %v2842 = vld [vmem:[%s3 + $0x84] sm:$0xf]
      %v2843 = vld [vmem:[%s3 + $0x88] sm:$0xf]
      %v2844 = vld [vmem:[%s3 + $0x8c] sm:$0xf]
      %v2845 = vld [vmem:[%s3 + $0x90] sm:$0xf]
      %v2846 = vld [vmem:[%s3 + $0x94] sm:$0xf]
      %v2847 = vld [vmem:[%s3 + $0x98] sm:$0xf]
      %v2848 = vld [vmem:[%s3 + $0x9c] sm:$0xf]
      %v2849 = vld [vmem:[%s3 + $0xa0] sm:$0xf]
      %v2850 = vld [vmem:[%s3 + $0xa4] sm:$0xf]
      %v2851 = vld [vmem:[%s3 + $0xa8] sm:$0xf]
      %v2852 = vld [vmem:[%s3 + $0xac] sm:$0xf]
      %v2853 = vld [vmem:[%s3 + $0xb0] sm:$0xf]
      %v2854 = vld [vmem:[%s3 + $0xb4] sm:$0xf]
      %v2855 = vld [vmem:[%s3 + $0xb8] sm:$0xf]
      %v2856 = vld [vmem:[%s3 + $0xbc] sm:$0xf]
      %v2857 = vld [vmem:[%s3 + $0xc0] sm:$0xf]
      %v2858 = vld [vmem:[%s3 + $0xc4] sm:$0xf]
      %v2859 = vld [vmem:[%s3 + $0xc8] sm:$0xf]
      %v2860 = vld [vmem:[%s3 + $0xcc] sm:$0xf]
      %v2861 = vld [vmem:[%s3 + $0xd0] sm:$0xf]
      %v2862 = vld [vmem:[%s3 + $0xd4] sm:$0xf]
      %v2863 = vld [vmem:[%s3 + $0xd8] sm:$0xf]
      %v2864 = vld [vmem:[%s3 + $0xdc] sm:$0xf]
      %v2865 = vld [vmem:[%s3 + $0xe0] sm:$0xf]
      %v2866 = vld [vmem:[%s3 + $0xe4] sm:$0xf]
      %v2867 = vld [vmem:[%s3 + $0xe8] sm:$0xf]
      %v2868 = vld [vmem:[%s3 + $0xec] sm:$0xf]
      %v2869 = vld [vmem:[%s3 + $0xf0] sm:$0xf]
      %v2870 = vld [vmem:[%s3 + $0xf4] sm:$0xf]
      %v2871 = vld [vmem:[%s3 + $0xf8] sm:$0xf]
      %v2872 = vld [vmem:[%s3 + $0xfc] sm:$0xf]
      %v2873 = vld [vmem:[%s4] sm:$0x1]
      %v2875 = vperm.slane %v2873, 0
      %v2941 = vunpack.c.l.b16 %v2809
      %v2942 = vunpack.c.l.b16 %v2810
      %v2943 = vunpack.c.l.b16 %v2811
      %v2944 = vunpack.c.l.b16 %v2812
      %v2945 = vunpack.c.l.b16 %v2813
      %v2946 = vunpack.c.l.b16 %v2814
      %v2947 = vunpack.c.l.b16 %v2815
      %v2948 = vunpack.c.l.b16 %v2816
      %v2949 = vunpack.c.l.b16 %v2817
      %v2950 = vunpack.c.l.b16 %v2818
      %v2951 = vunpack.c.l.b16 %v2819
      %v2952 = vunpack.c.l.b16 %v2820
      %v2953 = vunpack.c.l.b16 %v2821
      %v2954 = vunpack.c.l.b16 %v2822
      %v2955 = vunpack.c.l.b16 %v2823
      %v2956 = vunpack.c.l.b16 %v2824
      %v2957 = vunpack.c.l.b16 %v2825
      %v2958 = vunpack.c.l.b16 %v2826
      %v2959 = vunpack.c.l.b16 %v2827
      %v2960 = vunpack.c.l.b16 %v2828
      %v2961 = vunpack.c.l.b16 %v2829
      %v2962 = vunpack.c.l.b16 %v2830
      %v2963 = vunpack.c.l.b16 %v2831
      %v2964 = vunpack.c.l.b16 %v2832
      %v2965 = vunpack.c.l.b16 %v2833
      %v2966 = vunpack.c.l.b16 %v2834
      %v2967 = vunpack.c.l.b16 %v2835
      %v2968 = vunpack.c.l.b16 %v2836
      %v2969 = vunpack.c.l.b16 %v2837
      %v2970 = vunpack.c.l.b16 %v2838
      %v2971 = vunpack.c.l.b16 %v2839
      %v2972 = vunpack.c.l.b16 %v2840
      %v2973 = vunpack.c.l.b16 %v2841
      %v2974 = vunpack.c.l.b16 %v2842
      %v2975 = vunpack.c.l.b16 %v2843
      %v2976 = vunpack.c.l.b16 %v2844
      %v2977 = vunpack.c.l.b16 %v2845
      %v2978 = vunpack.c.l.b16 %v2846
      %v2979 = vunpack.c.l.b16 %v2847
      %v2980 = vunpack.c.l.b16 %v2848
      %v2981 = vunpack.c.l.b16 %v2849
      %v2982 = vunpack.c.l.b16 %v2850
      %v2983 = vunpack.c.l.b16 %v2851
      %v2984 = vunpack.c.l.b16 %v2852
      %v2985 = vunpack.c.l.b16 %v2853
      %v2986 = vunpack.c.l.b16 %v2854
      %v2987 = vunpack.c.l.b16 %v2855
      %v2988 = vunpack.c.l.b16 %v2856
      %v2989 = vunpack.c.l.b16 %v2857
      %v2990 = vunpack.c.l.b16 %v2858
      %v2991 = vunpack.c.l.b16 %v2859
      %v2992 = vunpack.c.l.b16 %v2860
      %v2993 = vunpack.c.l.b16 %v2861
      %v2994 = vunpack.c.l.b16 %v2862
      %v2995 = vunpack.c.l.b16 %v2863
      %v2996 = vunpack.c.l.b16 %v2864
      %v2997 = vunpack.c.l.b16 %v2865
      %v2998 = vunpack.c.l.b16 %v2866
      %v2999 = vunpack.c.l.b16 %v2867
      %v3000 = vunpack.c.l.b16 %v2868
      %v3001 = vunpack.c.l.b16 %v2869
      %v3002 = vunpack.c.l.b16 %v2870
      %v3003 = vunpack.c.l.b16 %v2871
      %v3004 = vunpack.c.l.b16 %v2872
      %v3005 = vpack.c.b16 %v2942, %v2941
      %v3006 = vpack.c.b16 %v2944, %v2943
      %v3007 = vpack.c.b16 %v2946, %v2945
      %v3008 = vpack.c.b16 %v2948, %v2947
      %v3009 = vpack.c.b16 %v2950, %v2949
      %v3010 = vpack.c.b16 %v2952, %v2951
      %v3011 = vpack.c.b16 %v2954, %v2953
      %v3012 = vpack.c.b16 %v2956, %v2955
      %v3013 = vpack.c.b16 %v2958, %v2957
      %v3014 = vpack.c.b16 %v2960, %v2959
      %v3015 = vpack.c.b16 %v2962, %v2961
      %v3016 = vpack.c.b16 %v2964, %v2963
      %v3017 = vpack.c.b16 %v2966, %v2965
      %v3018 = vpack.c.b16 %v2968, %v2967
      %v3019 = vpack.c.b16 %v2970, %v2969
      %v3020 = vpack.c.b16 %v2972, %v2971
      %v3021 = vpack.c.b16 %v2974, %v2973
      %v3022 = vpack.c.b16 %v2976, %v2975
      %v3023 = vpack.c.b16 %v2978, %v2977
      %v3024 = vpack.c.b16 %v2980, %v2979
      %v3025 = vpack.c.b16 %v2982, %v2981
      %v3026 = vpack.c.b16 %v2984, %v2983
      %v3027 = vpack.c.b16 %v2986, %v2985
      %v3028 = vpack.c.b16 %v2988, %v2987
      %v3029 = vpack.c.b16 %v2990, %v2989
      %v3030 = vpack.c.b16 %v2992, %v2991
      %v3031 = vpack.c.b16 %v2994, %v2993
      %v3032 = vpack.c.b16 %v2996, %v2995
      %v3033 = vpack.c.b16 %v2998, %v2997
      %v3034 = vpack.c.b16 %v3000, %v2999
      %v3035 = vpack.c.b16 %v3002, %v3001
      %v3036 = vpack.c.b16 %v3004, %v3003
      %3069 = vmatpush.bf16.msra.mxu0 %v3012
      %3070 = vmatpush.bf16.msra.mxu0 %v3011
      %3071 = vmatpush.bf16.msra.mxu0 %v3010
      %3072 = vmatpush.bf16.msra.mxu0 %v3009
      %3073 = vmatpush.bf16.msra.mxu0 %v3008
      %3074 = vmatpush.bf16.msra.mxu0 %v3007
      %3075 = vmatpush.bf16.msra.mxu0 %v3006
      %3076 = vmatpush.bf16.msra.mxu0 %v3005
      %3077 = vmatmul.bf16.gmra.mxu0 %v2745
      %v3078 = vpop.f32.mrf.mxu0
      %v3079 = vadd.f32 %v2875, %v3078
      %v3080 = vpop.f32.mrf.mxu0
      %v3081 = vadd.f32 %v2875, %v3080
      %3082 = vmatmul.bf16.gmra.mxu0 %v2749
      %v3083 = vpop.f32.mrf.mxu0
      %v3084 = vadd.f32 %v2875, %v3083
      %v3085 = vpop.f32.mrf.mxu0
      %v3086 = vadd.f32 %v2875, %v3085
      %3087 = vmatmul.bf16.gmra.mxu0 %v2753
      %v3088 = vpop.f32.mrf.mxu0
      %v3089 = vadd.f32 %v2875, %v3088
      %v3090 = vpop.f32.mrf.mxu0
      %v3091 = vadd.f32 %v2875, %v3090
      %3092 = vmatmul.bf16.gmra.mxu0 %v2757
      %v3093 = vpop.f32.mrf.mxu0
      %v3094 = vadd.f32 %v2875, %v3093
      %v3095 = vpop.f32.mrf.mxu0
      %v3096 = vadd.f32 %v2875, %v3095
      %3097 = vmatmul.bf16.gmra.mxu0 %v2761
      %v3098 = vpop.f32.mrf.mxu0
      %v3099 = vadd.f32 %v2875, %v3098
      %v3100 = vpop.f32.mrf.mxu0
      %v3101 = vadd.f32 %v2875, %v3100
      %3102 = vmatmul.bf16.gmra.mxu0 %v2765
      %v3103 = vpop.f32.mrf.mxu0
      %v3104 = vadd.f32 %v2875, %v3103
      %v3105 = vpop.f32.mrf.mxu0
      %v3106 = vadd.f32 %v2875, %v3105
      %3107 = vmatmul.bf16.gmra.mxu0 %v2769
      %v3108 = vpop.f32.mrf.mxu0
      %v3109 = vadd.f32 %v2875, %v3108
      %v3110 = vpop.f32.mrf.mxu0
      %v3111 = vadd.f32 %v2875, %v3110
      %3112 = vmatmul.bf16.gmra.mxu0 %v2773
      %v3113 = vpop.f32.mrf.mxu0
      %v3114 = vadd.f32 %v2875, %v3113
      %v3115 = vpop.f32.mrf.mxu0
      %v3116 = vadd.f32 %v2875, %v3115
      %3117 = vmatmul.bf16.gmra.mxu0 %v2777
      %v3118 = vpop.f32.mrf.mxu0
      %v3119 = vadd.f32 %v2875, %v3118
      %v3120 = vpop.f32.mrf.mxu0
      %v3121 = vadd.f32 %v2875, %v3120
      %3122 = vmatmul.bf16.gmra.mxu0 %v2781
      %v3123 = vpop.f32.mrf.mxu0
      %v3124 = vadd.f32 %v2875, %v3123
      %v3125 = vpop.f32.mrf.mxu0
      %v3126 = vadd.f32 %v2875, %v3125
      %3127 = vmatmul.bf16.gmra.mxu0 %v2785
      %v3128 = vpop.f32.mrf.mxu0
      %v3129 = vadd.f32 %v2875, %v3128
      %v3130 = vpop.f32.mrf.mxu0
      %v3131 = vadd.f32 %v2875, %v3130
      %3132 = vmatmul.bf16.gmra.mxu0 %v2789
      %v3133 = vpop.f32.mrf.mxu0
      %v3134 = vadd.f32 %v2875, %v3133
      %v3135 = vpop.f32.mrf.mxu0
      %v3136 = vadd.f32 %v2875, %v3135
      %3137 = vmatmul.bf16.gmra.mxu0 %v2793
      %v3138 = vpop.f32.mrf.mxu0
      %v3139 = vadd.f32 %v2875, %v3138
      %v3140 = vpop.f32.mrf.mxu0
      %v3141 = vadd.f32 %v2875, %v3140
      %3142 = vmatmul.bf16.gmra.mxu0 %v2797
      %v3143 = vpop.f32.mrf.mxu0
      %v3144 = vadd.f32 %v2875, %v3143
      %v3145 = vpop.f32.mrf.mxu0
      %v3146 = vadd.f32 %v2875, %v3145
      %3147 = vmatmul.bf16.gmra.mxu0 %v2801
      %v3148 = vpop.f32.mrf.mxu0
      %v3149 = vadd.f32 %v2875, %v3148
      %v3150 = vpop.f32.mrf.mxu0
      %v3151 = vadd.f32 %v2875, %v3150
      %3152 = vmatmul.bf16.gmra.mxu0 %v2805
      %v3153 = vpop.f32.mrf.mxu0
      %v3154 = vadd.f32 %v2875, %v3153
      %v3155 = vpop.f32.mrf.mxu0
      %v3156 = vadd.f32 %v2875, %v3155
      %3157 = vdwg.mxu0
      %3158 = vmatpush.bf16.msra.mxu0 %v3020
      %3159 = vmatpush.bf16.msra.mxu0 %v3019
      %3160 = vmatpush.bf16.msra.mxu0 %v3018
      %3161 = vmatpush.bf16.msra.mxu0 %v3017
      %3162 = vmatpush.bf16.msra.mxu0 %v3016
      %3163 = vmatpush.bf16.msra.mxu0 %v3015
      %3164 = vmatpush.bf16.msra.mxu0 %v3014
      %3165 = vmatpush.bf16.msra.mxu0 %v3013
      %3166 = vmatmul.bf16.gmra.mxu0 %v2746
      %v3167 = vpop.f32.mrf.mxu0
      %v3168 = vadd.f32 %v3079, %v3167
      %v3169 = vpop.f32.mrf.mxu0
      %v3170 = vadd.f32 %v3081, %v3169
      %3171 = vmatmul.bf16.gmra.mxu0 %v2750
      %v3172 = vpop.f32.mrf.mxu0
      %v3173 = vadd.f32 %v3084, %v3172
      %v3174 = vpop.f32.mrf.mxu0
      %v3175 = vadd.f32 %v3086, %v3174
      %3176 = vmatmul.bf16.gmra.mxu0 %v2754
      %v3177 = vpop.f32.mrf.mxu0
      %v3178 = vadd.f32 %v3089, %v3177
      %v3179 = vpop.f32.mrf.mxu0
      %v3180 = vadd.f32 %v3091, %v3179
      %3181 = vmatmul.bf16.gmra.mxu0 %v2758
      %v3182 = vpop.f32.mrf.mxu0
      %v3183 = vadd.f32 %v3094, %v3182
      %v3184 = vpop.f32.mrf.mxu0
      %v3185 = vadd.f32 %v3096, %v3184
      %3186 = vmatmul.bf16.gmra.mxu0 %v2762
      %v3187 = vpop.f32.mrf.mxu0
      %v3188 = vadd.f32 %v3099, %v3187
      %v3189 = vpop.f32.mrf.mxu0
      %v3190 = vadd.f32 %v3101, %v3189
      %3191 = vmatmul.bf16.gmra.mxu0 %v2766
      %v3192 = vpop.f32.mrf.mxu0
      %v3193 = vadd.f32 %v3104, %v3192
      %v3194 = vpop.f32.mrf.mxu0
      %v3195 = vadd.f32 %v3106, %v3194
      %3196 = vmatmul.bf16.gmra.mxu0 %v2770
      %v3197 = vpop.f32.mrf.mxu0
      %v3198 = vadd.f32 %v3109, %v3197
      %v3199 = vpop.f32.mrf.mxu0
      %v3200 = vadd.f32 %v3111, %v3199
      %3201 = vmatmul.bf16.gmra.mxu0 %v2774
      %v3202 = vpop.f32.mrf.mxu0
      %v3203 = vadd.f32 %v3114, %v3202
      %v3204 = vpop.f32.mrf.mxu0
      %v3205 = vadd.f32 %v3116, %v3204
      %3206 = vmatmul.bf16.gmra.mxu0 %v2778
      %v3207 = vpop.f32.mrf.mxu0
      %v3208 = vadd.f32 %v3119, %v3207
      %v3209 = vpop.f32.mrf.mxu0
      %v3210 = vadd.f32 %v3121, %v3209
      %3211 = vmatmul.bf16.gmra.mxu0 %v2782
      %v3212 = vpop.f32.mrf.mxu0
      %v3213 = vadd.f32 %v3124, %v3212
      %v3214 = vpop.f32.mrf.mxu0
      %v3215 = vadd.f32 %v3126, %v3214
      %3216 = vmatmul.bf16.gmra.mxu0 %v2786
      %v3217 = vpop.f32.mrf.mxu0
      %v3218 = vadd.f32 %v3129, %v3217
      %v3219 = vpop.f32.mrf.mxu0
      %v3220 = vadd.f32 %v3131, %v3219
      %3221 = vmatmul.bf16.gmra.mxu0 %v2790
      %v3222 = vpop.f32.mrf.mxu0
      %v3223 = vadd.f32 %v3134, %v3222
      %v3224 = vpop.f32.mrf.mxu0
      %v3225 = vadd.f32 %v3136, %v3224
      %3226 = vmatmul.bf16.gmra.mxu0 %v2794
      %v3227 = vpop.f32.mrf.mxu0
      %v3228 = vadd.f32 %v3139, %v3227
      %v3229 = vpop.f32.mrf.mxu0
      %v3230 = vadd.f32 %v3141, %v3229
      %3231 = vmatmul.bf16.gmra.mxu0 %v2798
      %v3232 = vpop.f32.mrf.mxu0
      %v3233 = vadd.f32 %v3144, %v3232
      %v3234 = vpop.f32.mrf.mxu0
      %v3235 = vadd.f32 %v3146, %v3234
      %3236 = vmatmul.bf16.gmra.mxu0 %v2802
      %v3237 = vpop.f32.mrf.mxu0
      %v3238 = vadd.f32 %v3149, %v3237
      %v3239 = vpop.f32.mrf.mxu0
      %v3240 = vadd.f32 %v3151, %v3239
      %3241 = vmatmul.bf16.gmra.mxu0 %v2806
      %v3242 = vpop.f32.mrf.mxu0
      %v3243 = vadd.f32 %v3154, %v3242
      %v3244 = vpop.f32.mrf.mxu0
      %v3245 = vadd.f32 %v3156, %v3244
      %3246 = vdwg.mxu0
      %3247 = vmatpush.bf16.msra.mxu0 %v3028
      %3248 = vmatpush.bf16.msra.mxu0 %v3027
      %3249 = vmatpush.bf16.msra.mxu0 %v3026
      %3250 = vmatpush.bf16.msra.mxu0 %v3025
      %3251 = vmatpush.bf16.msra.mxu0 %v3024
      %3252 = vmatpush.bf16.msra.mxu0 %v3023
      %3253 = vmatpush.bf16.msra.mxu0 %v3022
      %3254 = vmatpush.bf16.msra.mxu0 %v3021
      %3255 = vmatmul.bf16.gmra.mxu0 %v2747
      %v3256 = vpop.f32.mrf.mxu0
      %v3257 = vadd.f32 %v3168, %v3256
      %v3258 = vpop.f32.mrf.mxu0
      %v3259 = vadd.f32 %v3170, %v3258
      %3260 = vmatmul.bf16.gmra.mxu0 %v2751
      %v3261 = vpop.f32.mrf.mxu0
      %v3262 = vadd.f32 %v3173, %v3261
      %v3263 = vpop.f32.mrf.mxu0
      %v3264 = vadd.f32 %v3175, %v3263
      %3265 = vmatmul.bf16.gmra.mxu0 %v2755
      %v3266 = vpop.f32.mrf.mxu0
      %v3267 = vadd.f32 %v3178, %v3266
      %v3268 = vpop.f32.mrf.mxu0
      %v3269 = vadd.f32 %v3180, %v3268
      %3270 = vmatmul.bf16.gmra.mxu0 %v2759
      %v3271 = vpop.f32.mrf.mxu0
      %v3272 = vadd.f32 %v3183, %v3271
      %v3273 = vpop.f32.mrf.mxu0
      %v3274 = vadd.f32 %v3185, %v3273
      %3275 = vmatmul.bf16.gmra.mxu0 %v2763
      %v3276 = vpop.f32.mrf.mxu0
      %v3277 = vadd.f32 %v3188, %v3276
      %v3278 = vpop.f32.mrf.mxu0
      %v3279 = vadd.f32 %v3190, %v3278
      %3280 = vmatmul.bf16.gmra.mxu0 %v2767
      %v3281 = vpop.f32.mrf.mxu0
      %v3282 = vadd.f32 %v3193, %v3281
      %v3283 = vpop.f32.mrf.mxu0
      %v3284 = vadd.f32 %v3195, %v3283
      %3285 = vmatmul.bf16.gmra.mxu0 %v2771
      %v3286 = vpop.f32.mrf.mxu0
      %v3287 = vadd.f32 %v3198, %v3286
      %v3288 = vpop.f32.mrf.mxu0
      %v3289 = vadd.f32 %v3200, %v3288
      %3290 = vmatmul.bf16.gmra.mxu0 %v2775
      %v3291 = vpop.f32.mrf.mxu0
      %v3292 = vadd.f32 %v3203, %v3291
      %v3293 = vpop.f32.mrf.mxu0
      %v3294 = vadd.f32 %v3205, %v3293
      %3295 = vmatmul.bf16.gmra.mxu0 %v2779
      %v3296 = vpop.f32.mrf.mxu0
      %v3297 = vadd.f32 %v3208, %v3296
      %v3298 = vpop.f32.mrf.mxu0
      %v3299 = vadd.f32 %v3210, %v3298
      %3300 = vmatmul.bf16.gmra.mxu0 %v2783
      %v3301 = vpop.f32.mrf.mxu0
      %v3302 = vadd.f32 %v3213, %v3301
      %v3303 = vpop.f32.mrf.mxu0
      %v3304 = vadd.f32 %v3215, %v3303
      %3305 = vmatmul.bf16.gmra.mxu0 %v2787
      %v3306 = vpop.f32.mrf.mxu0
      %v3307 = vadd.f32 %v3218, %v3306
      %v3308 = vpop.f32.mrf.mxu0
      %v3309 = vadd.f32 %v3220, %v3308
      %3310 = vmatmul.bf16.gmra.mxu0 %v2791
      %v3311 = vpop.f32.mrf.mxu0
      %v3312 = vadd.f32 %v3223, %v3311
      %v3313 = vpop.f32.mrf.mxu0
      %v3314 = vadd.f32 %v3225, %v3313
      %3315 = vmatmul.bf16.gmra.mxu0 %v2795
      %v3316 = vpop.f32.mrf.mxu0
      %v3317 = vadd.f32 %v3228, %v3316
      %v3318 = vpop.f32.mrf.mxu0
      %v3319 = vadd.f32 %v3230, %v3318
      %3320 = vmatmul.bf16.gmra.mxu0 %v2799
      %v3321 = vpop.f32.mrf.mxu0
      %v3322 = vadd.f32 %v3233, %v3321
      %v3323 = vpop.f32.mrf.mxu0
      %v3324 = vadd.f32 %v3235, %v3323
      %3325 = vmatmul.bf16.gmra.mxu0 %v2803
      %v3326 = vpop.f32.mrf.mxu0
      %v3327 = vadd.f32 %v3238, %v3326
      %v3328 = vpop.f32.mrf.mxu0
      %v3329 = vadd.f32 %v3240, %v3328
      %3330 = vmatmul.bf16.gmra.mxu0 %v2807
      %v3331 = vpop.f32.mrf.mxu0
      %v3332 = vadd.f32 %v3243, %v3331
      %v3333 = vpop.f32.mrf.mxu0
      %v3334 = vadd.f32 %v3245, %v3333
      %3335 = vdwg.mxu0
      %3336 = vmatpush.bf16.msra.mxu0 %v3036
      %3337 = vmatpush.bf16.msra.mxu0 %v3035
      %3338 = vmatpush.bf16.msra.mxu0 %v3034
      %3339 = vmatpush.bf16.msra.mxu0 %v3033
      %3340 = vmatpush.bf16.msra.mxu0 %v3032
      %3341 = vmatpush.bf16.msra.mxu0 %v3031
      %3342 = vmatpush.bf16.msra.mxu0 %v3030
      %3343 = vmatpush.bf16.msra.mxu0 %v3029
      %3344 = vmatmul.bf16.gmra.mxu0 %v2748
      %v3345 = vpop.f32.mrf.mxu0
      %v3346 = vadd.f32 %v3257, %v3345
      %v3347 = vpop.f32.mrf.mxu0
      %v3348 = vadd.f32 %v3259, %v3347
      %3349 = vmatmul.bf16.gmra.mxu0 %v2752
      %v3350 = vpop.f32.mrf.mxu0
      %v3351 = vadd.f32 %v3262, %v3350
      %v3352 = vpop.f32.mrf.mxu0
      %v3353 = vadd.f32 %v3264, %v3352
      %3354 = vmatmul.bf16.gmra.mxu0 %v2756
      %v3355 = vpop.f32.mrf.mxu0
      %v3356 = vadd.f32 %v3267, %v3355
      %v3357 = vpop.f32.mrf.mxu0
      %v3358 = vadd.f32 %v3269, %v3357
      %3359 = vmatmul.bf16.gmra.mxu0 %v2760
      %v3360 = vpop.f32.mrf.mxu0
      %v3361 = vadd.f32 %v3272, %v3360
      %v3362 = vpop.f32.mrf.mxu0
      %v3363 = vadd.f32 %v3274, %v3362
      %3364 = vmatmul.bf16.gmra.mxu0 %v2764
      %v3365 = vpop.f32.mrf.mxu0
      %v3366 = vadd.f32 %v3277, %v3365
      %v3367 = vpop.f32.mrf.mxu0
      %v3368 = vadd.f32 %v3279, %v3367
      %3369 = vmatmul.bf16.gmra.mxu0 %v2768
      %v3370 = vpop.f32.mrf.mxu0
      %v3371 = vadd.f32 %v3282, %v3370
      %v3372 = vpop.f32.mrf.mxu0
      %v3373 = vadd.f32 %v3284, %v3372
      %3374 = vmatmul.bf16.gmra.mxu0 %v2772
      %v3375 = vpop.f32.mrf.mxu0
      %v3376 = vadd.f32 %v3287, %v3375
      %v3377 = vpop.f32.mrf.mxu0
      %v3378 = vadd.f32 %v3289, %v3377
      %3379 = vmatmul.bf16.gmra.mxu0 %v2776
      %v3380 = vpop.f32.mrf.mxu0
      %v3381 = vadd.f32 %v3292, %v3380
      %v3382 = vpop.f32.mrf.mxu0
      %v3383 = vadd.f32 %v3294, %v3382
      %3384 = vmatmul.bf16.gmra.mxu0 %v2780
      %v3385 = vpop.f32.mrf.mxu0
      %v3386 = vadd.f32 %v3297, %v3385
      %v3387 = vpop.f32.mrf.mxu0
      %v3388 = vadd.f32 %v3299, %v3387
      %3389 = vmatmul.bf16.gmra.mxu0 %v2784
      %v3390 = vpop.f32.mrf.mxu0
      %v3391 = vadd.f32 %v3302, %v3390
      %v3392 = vpop.f32.mrf.mxu0
      %v3393 = vadd.f32 %v3304, %v3392
      %3394 = vmatmul.bf16.gmra.mxu0 %v2788
      %v3395 = vpop.f32.mrf.mxu0
      %v3396 = vadd.f32 %v3307, %v3395
      %v3397 = vpop.f32.mrf.mxu0
      %v3398 = vadd.f32 %v3309, %v3397
      %3399 = vmatmul.bf16.gmra.mxu0 %v2792
      %v3400 = vpop.f32.mrf.mxu0
      %v3401 = vadd.f32 %v3312, %v3400
      %v3402 = vpop.f32.mrf.mxu0
      %v3403 = vadd.f32 %v3314, %v3402
      %3404 = vmatmul.bf16.gmra.mxu0 %v2796
      %v3405 = vpop.f32.mrf.mxu0
      %v3406 = vadd.f32 %v3317, %v3405
      %v3407 = vpop.f32.mrf.mxu0
      %v3408 = vadd.f32 %v3319, %v3407
      %3409 = vmatmul.bf16.gmra.mxu0 %v2800
      %v3410 = vpop.f32.mrf.mxu0
      %v3411 = vadd.f32 %v3322, %v3410
      %v3412 = vpop.f32.mrf.mxu0
      %v3413 = vadd.f32 %v3324, %v3412
      %3414 = vmatmul.bf16.gmra.mxu0 %v2804
      %v3415 = vpop.f32.mrf.mxu0
      %v3416 = vadd.f32 %v3327, %v3415
      %v3417 = vpop.f32.mrf.mxu0
      %v3418 = vadd.f32 %v3329, %v3417
      %3419 = vmatmul.bf16.gmra.mxu0 %v2808
      %v3420 = vpop.f32.mrf.mxu0
      %v3421 = vadd.f32 %v3332, %v3420
      %v3422 = vpop.f32.mrf.mxu0
      %v3423 = vadd.f32 %v3334, %v3422
      %3424 = vdwg.mxu0
      %v3425 = vld [vmem:[%s5] sm:$0x1]
      %v3426 = vld [vmem:[%s5 + $0x1] sm:$0x1]
      %v3427 = vld [vmem:[%s5 + $0x2] sm:$0x1]
      %v3428 = vld [vmem:[%s5 + $0x3] sm:$0x1]
      %v3429 = vxor.u32 %v3346, 2147483648
      %v3430 = vxor.u32 %v3348, 2147483648
      %v3431 = vxor.u32 %v3351, 2147483648
      %v3432 = vxor.u32 %v3353, 2147483648
      %v3433 = vxor.u32 %v3356, 2147483648
      %v3434 = vxor.u32 %v3358, 2147483648
      %v3435 = vxor.u32 %v3361, 2147483648
      %v3436 = vxor.u32 %v3363, 2147483648
      %v3437 = vxor.u32 %v3366, 2147483648
      %v3438 = vxor.u32 %v3368, 2147483648
      %v3439 = vxor.u32 %v3371, 2147483648
      %v3440 = vxor.u32 %v3373, 2147483648
      %v3441 = vxor.u32 %v3376, 2147483648
      %v3442 = vxor.u32 %v3378, 2147483648
      %v3443 = vxor.u32 %v3381, 2147483648
      %v3444 = vxor.u32 %v3383, 2147483648
      %v3445 = vxor.u32 %v3386, 2147483648
      %v3446 = vxor.u32 %v3388, 2147483648
      %v3447 = vxor.u32 %v3391, 2147483648
      %v3448 = vxor.u32 %v3393, 2147483648
      %v3449 = vxor.u32 %v3396, 2147483648
      %v3450 = vxor.u32 %v3398, 2147483648
      %v3451 = vxor.u32 %v3401, 2147483648
      %v3452 = vxor.u32 %v3403, 2147483648
      %v3453 = vxor.u32 %v3406, 2147483648
      %v3454 = vxor.u32 %v3408, 2147483648
      %v3455 = vxor.u32 %v3411, 2147483648
      %v3456 = vxor.u32 %v3413, 2147483648
      %v3457 = vxor.u32 %v3416, 2147483648
      %v3458 = vxor.u32 %v3418, 2147483648
      %v3459 = vxor.u32 %v3421, 2147483648
      %v3460 = vxor.u32 %v3423, 2147483648
      %v3461 = vmul.f32 %v3429, 1.442695
      %v3462 = vpow.pop %v3461
      %v3463 = vmul.f32 %v3430, 1.442695
      %v3464 = vpow.pop %v3463
      %v3465 = vmul.f32 %v3431, 1.442695
      %v3466 = vpow.pop %v3465
      %v3467 = vmul.f32 %v3432, 1.442695
      %v3468 = vpow.pop %v3467
      %v3469 = vmul.f32 %v3433, 1.442695
      %v3470 = vpow.pop %v3469
      %v3471 = vmul.f32 %v3434, 1.442695
      %v3472 = vpow.pop %v3471
      %v3473 = vmul.f32 %v3435, 1.442695
      %v3474 = vpow.pop %v3473
      %v3475 = vmul.f32 %v3436, 1.442695
      %v3476 = vpow.pop %v3475
      %v3477 = vmul.f32 %v3437, 1.442695
      %v3478 = vpow.pop %v3477
      %v3479 = vmul.f32 %v3438, 1.442695
      %v3480 = vpow.pop %v3479
      %v3481 = vmul.f32 %v3439, 1.442695
      %v3482 = vpow.pop %v3481
      %v3483 = vmul.f32 %v3440, 1.442695
      %v3484 = vpow.pop %v3483
      %v3485 = vmul.f32 %v3441, 1.442695
      %v3486 = vpow.pop %v3485
      %v3487 = vmul.f32 %v3442, 1.442695
      %v3488 = vpow.pop %v3487
      %v3489 = vmul.f32 %v3443, 1.442695
      %v3490 = vpow.pop %v3489
      %v3491 = vmul.f32 %v3444, 1.442695
      %v3492 = vpow.pop %v3491
      %v3493 = vmul.f32 %v3445, 1.442695
      %v3494 = vpow.pop %v3493
      %v3495 = vmul.f32 %v3446, 1.442695
      %v3496 = vpow.pop %v3495
      %v3497 = vmul.f32 %v3447, 1.442695
      %v3498 = vpow.pop %v3497
      %v3499 = vmul.f32 %v3448, 1.442695
      %v3500 = vpow.pop %v3499
      %v3501 = vmul.f32 %v3449, 1.442695
      %v3502 = vpow.pop %v3501
      %v3503 = vmul.f32 %v3450, 1.442695
      %v3504 = vpow.pop %v3503
      %v3505 = vmul.f32 %v3451, 1.442695
      %v3506 = vpow.pop %v3505
      %v3507 = vmul.f32 %v3452, 1.442695
      %v3508 = vpow.pop %v3507
      %v3509 = vmul.f32 %v3453, 1.442695
      %v3510 = vpow.pop %v3509
      %v3511 = vmul.f32 %v3454, 1.442695
      %v3512 = vpow.pop %v3511
      %v3513 = vmul.f32 %v3455, 1.442695
      %v3514 = vpow.pop %v3513
      %v3515 = vmul.f32 %v3456, 1.442695
      %v3516 = vpow.pop %v3515
      %v3517 = vmul.f32 %v3457, 1.442695
      %v3518 = vpow.pop %v3517
      %v3519 = vmul.f32 %v3458, 1.442695
      %v3520 = vpow.pop %v3519
      %v3521 = vmul.f32 %v3459, 1.442695
      %v3522 = vpow.pop %v3521
      %v3523 = vmul.f32 %v3460, 1.442695
      %v3524 = vpow.pop %v3523
      %v3525 = vadd.f32 %v3462, 1.0
      %v3526 = vadd.f32 %v3464, 1.0
      %v3527 = vadd.f32 %v3466, 1.0
      %v3528 = vadd.f32 %v3468, 1.0
      %v3529 = vadd.f32 %v3470, 1.0
      %v3530 = vadd.f32 %v3472, 1.0
      %v3531 = vadd.f32 %v3474, 1.0
      %v3532 = vadd.f32 %v3476, 1.0
      %v3533 = vadd.f32 %v3478, 1.0
      %v3534 = vadd.f32 %v3480, 1.0
      %v3535 = vadd.f32 %v3482, 1.0
      %v3536 = vadd.f32 %v3484, 1.0
      %v3537 = vadd.f32 %v3486, 1.0
      %v3538 = vadd.f32 %v3488, 1.0
      %v3539 = vadd.f32 %v3490, 1.0
      %v3540 = vadd.f32 %v3492, 1.0
      %v3541 = vadd.f32 %v3494, 1.0
      %v3542 = vadd.f32 %v3496, 1.0
      %v3543 = vadd.f32 %v3498, 1.0
      %v3544 = vadd.f32 %v3500, 1.0
      %v3545 = vadd.f32 %v3502, 1.0
      %v3546 = vadd.f32 %v3504, 1.0
      %v3547 = vadd.f32 %v3506, 1.0
      %v3548 = vadd.f32 %v3508, 1.0
      %v3549 = vadd.f32 %v3510, 1.0
      %v3550 = vadd.f32 %v3512, 1.0
      %v3551 = vadd.f32 %v3514, 1.0
      %v3552 = vadd.f32 %v3516, 1.0
      %v3553 = vadd.f32 %v3518, 1.0
      %v3554 = vadd.f32 %v3520, 1.0
      %v3555 = vadd.f32 %v3522, 1.0
      %v3556 = vadd.f32 %v3524, 1.0
      %v3557 = vrcp.pop %v3525
      %v3558 = vmul.f32 %v3525, %v3557
      %v3559 = vsub.f32 1.0, %v3558
      %v3560 = vmul.f32 %v3557, %v3559
      %v3561 = vadd.f32 %v3557, %v3560
      %vm3562 = vweird.f32 %v3525
      %vm3563 = vweird.f32 %v3557
      %vm3564 = vmor %vm3562, %vm3563
      %v3565 = vsel %vm3564, %v3557, %v3561
      %v3566 = vand.u32 2147483647, %v3525
      %vm3567 = vcmp.eq.f32.partialorder %v3566, 8.507059e+37
      %v3568 = vand.u32 %v3525, 2147483648
      %v3569 = vor.u32 1.1754944e-38, %v3568
      %v3570 = vsel %vm3567, %v3569, %v3565
      %v3571 = vmul.f32 1.0, %v3570
      %v3572 = vrcp.pop %v3526
      %v3573 = vmul.f32 %v3526, %v3572
      %v3574 = vsub.f32 1.0, %v3573
      %v3575 = vmul.f32 %v3572, %v3574
      %v3576 = vadd.f32 %v3572, %v3575
      %vm3577 = vweird.f32 %v3526
      %vm3578 = vweird.f32 %v3572
      %vm3579 = vmor %vm3577, %vm3578
      %v3580 = vsel %vm3579, %v3572, %v3576
      %v3581 = vand.u32 2147483647, %v3526
      %vm3582 = vcmp.eq.f32.partialorder %v3581, 8.507059e+37
      %v3583 = vand.u32 %v3526, 2147483648
      %v3584 = vor.u32 1.1754944e-38, %v3583
      %v3585 = vsel %vm3582, %v3584, %v3580
      %v3586 = vmul.f32 1.0, %v3585
      %v3587 = vrcp.pop %v3527
      %v3588 = vmul.f32 %v3527, %v3587
      %v3589 = vsub.f32 1.0, %v3588
      %v3590 = vmul.f32 %v3587, %v3589
      %v3591 = vadd.f32 %v3587, %v3590
      %vm3592 = vweird.f32 %v3527
      %vm3593 = vweird.f32 %v3587
      %vm3594 = vmor %vm3592, %vm3593
      %v3595 = vsel %vm3594, %v3587, %v3591
      %v3596 = vand.u32 2147483647, %v3527
      %vm3597 = vcmp.eq.f32.partialorder %v3596, 8.507059e+37
      %v3598 = vand.u32 %v3527, 2147483648
      %v3599 = vor.u32 1.1754944e-38, %v3598
      %v3600 = vsel %vm3597, %v3599, %v3595
      %v3601 = vmul.f32 1.0, %v3600
      %v3602 = vrcp.pop %v3528
      %v3603 = vmul.f32 %v3528, %v3602
      %v3604 = vsub.f32 1.0, %v3603
      %v3605 = vmul.f32 %v3602, %v3604
      %v3606 = vadd.f32 %v3602, %v3605
      %vm3607 = vweird.f32 %v3528
      %vm3608 = vweird.f32 %v3602
      %vm3609 = vmor %vm3607, %vm3608
      %v3610 = vsel %vm3609, %v3602, %v3606
      %v3611 = vand.u32 2147483647, %v3528
      %vm3612 = vcmp.eq.f32.partialorder %v3611, 8.507059e+37
      %v3613 = vand.u32 %v3528, 2147483648
      %v3614 = vor.u32 1.1754944e-38, %v3613
      %v3615 = vsel %vm3612, %v3614, %v3610
      %v3616 = vmul.f32 1.0, %v3615
      %v3617 = vrcp.pop %v3529
      %v3618 = vmul.f32 %v3529, %v3617
      %v3619 = vsub.f32 1.0, %v3618
      %v3620 = vmul.f32 %v3617, %v3619
      %v3621 = vadd.f32 %v3617, %v3620
      %vm3622 = vweird.f32 %v3529
      %vm3623 = vweird.f32 %v3617
      %vm3624 = vmor %vm3622, %vm3623
      %v3625 = vsel %vm3624, %v3617, %v3621
      %v3626 = vand.u32 2147483647, %v3529
      %vm3627 = vcmp.eq.f32.partialorder %v3626, 8.507059e+37
      %v3628 = vand.u32 %v3529, 2147483648
      %v3629 = vor.u32 1.1754944e-38, %v3628
      %v3630 = vsel %vm3627, %v3629, %v3625
      %v3631 = vmul.f32 1.0, %v3630
      %v3632 = vrcp.pop %v3530
      %v3633 = vmul.f32 %v3530, %v3632
      %v3634 = vsub.f32 1.0, %v3633
      %v3635 = vmul.f32 %v3632, %v3634
      %v3636 = vadd.f32 %v3632, %v3635
      %vm3637 = vweird.f32 %v3530
      %vm3638 = vweird.f32 %v3632
      %vm3639 = vmor %vm3637, %vm3638
      %v3640 = vsel %vm3639, %v3632, %v3636
      %v3641 = vand.u32 2147483647, %v3530
      %vm3642 = vcmp.eq.f32.partialorder %v3641, 8.507059e+37
      %v3643 = vand.u32 %v3530, 2147483648
      %v3644 = vor.u32 1.1754944e-38, %v3643
      %v3645 = vsel %vm3642, %v3644, %v3640
      %v3646 = vmul.f32 1.0, %v3645
      %v3647 = vrcp.pop %v3531
      %v3648 = vmul.f32 %v3531, %v3647
      %v3649 = vsub.f32 1.0, %v3648
      %v3650 = vmul.f32 %v3647, %v3649
      %v3651 = vadd.f32 %v3647, %v3650
      %vm3652 = vweird.f32 %v3531
      %vm3653 = vweird.f32 %v3647
      %vm3654 = vmor %vm3652, %vm3653
      %v3655 = vsel %vm3654, %v3647, %v3651
      %v3656 = vand.u32 2147483647, %v3531
      %vm3657 = vcmp.eq.f32.partialorder %v3656, 8.507059e+37
      %v3658 = vand.u32 %v3531, 2147483648
      %v3659 = vor.u32 1.1754944e-38, %v3658
      %v3660 = vsel %vm3657, %v3659, %v3655
      %v3661 = vmul.f32 1.0, %v3660
      %v3662 = vrcp.pop %v3532
      %v3663 = vmul.f32 %v3532, %v3662
      %v3664 = vsub.f32 1.0, %v3663
      %v3665 = vmul.f32 %v3662, %v3664
      %v3666 = vadd.f32 %v3662, %v3665
      %vm3667 = vweird.f32 %v3532
      %vm3668 = vweird.f32 %v3662
      %vm3669 = vmor %vm3667, %vm3668
      %v3670 = vsel %vm3669, %v3662, %v3666
      %v3671 = vand.u32 2147483647, %v3532
      %vm3672 = vcmp.eq.f32.partialorder %v3671, 8.507059e+37
      %v3673 = vand.u32 %v3532, 2147483648
      %v3674 = vor.u32 1.1754944e-38, %v3673
      %v3675 = vsel %vm3672, %v3674, %v3670
      %v3676 = vmul.f32 1.0, %v3675
      %v3677 = vrcp.pop %v3533
      %v3678 = vmul.f32 %v3533, %v3677
      %v3679 = vsub.f32 1.0, %v3678
      %v3680 = vmul.f32 %v3677, %v3679
      %v3681 = vadd.f32 %v3677, %v3680
      %vm3682 = vweird.f32 %v3533
      %vm3683 = vweird.f32 %v3677
      %vm3684 = vmor %vm3682, %vm3683
      %v3685 = vsel %vm3684, %v3677, %v3681
      %v3686 = vand.u32 2147483647, %v3533
      %vm3687 = vcmp.eq.f32.partialorder %v3686, 8.507059e+37
      %v3688 = vand.u32 %v3533, 2147483648
      %v3689 = vor.u32 1.1754944e-38, %v3688
      %v3690 = vsel %vm3687, %v3689, %v3685
      %v3691 = vmul.f32 1.0, %v3690
      %v3692 = vrcp.pop %v3534
      %v3693 = vmul.f32 %v3534, %v3692
      %v3694 = vsub.f32 1.0, %v3693
      %v3695 = vmul.f32 %v3692, %v3694
      %v3696 = vadd.f32 %v3692, %v3695
      %vm3697 = vweird.f32 %v3534
      %vm3698 = vweird.f32 %v3692
      %vm3699 = vmor %vm3697, %vm3698
      %v3700 = vsel %vm3699, %v3692, %v3696
      %v3701 = vand.u32 2147483647, %v3534
      %vm3702 = vcmp.eq.f32.partialorder %v3701, 8.507059e+37
      %v3703 = vand.u32 %v3534, 2147483648
      %v3704 = vor.u32 1.1754944e-38, %v3703
      %v3705 = vsel %vm3702, %v3704, %v3700
      %v3706 = vmul.f32 1.0, %v3705
      %v3707 = vrcp.pop %v3535
      %v3708 = vmul.f32 %v3535, %v3707
      %v3709 = vsub.f32 1.0, %v3708
      %v3710 = vmul.f32 %v3707, %v3709
      %v3711 = vadd.f32 %v3707, %v3710
      %vm3712 = vweird.f32 %v3535
      %vm3713 = vweird.f32 %v3707
      %vm3714 = vmor %vm3712, %vm3713
      %v3715 = vsel %vm3714, %v3707, %v3711
      %v3716 = vand.u32 2147483647, %v3535
      %vm3717 = vcmp.eq.f32.partialorder %v3716, 8.507059e+37
      %v3718 = vand.u32 %v3535, 2147483648
      %v3719 = vor.u32 1.1754944e-38, %v3718
      %v3720 = vsel %vm3717, %v3719, %v3715
      %v3721 = vmul.f32 1.0, %v3720
      %v3722 = vrcp.pop %v3536
      %v3723 = vmul.f32 %v3536, %v3722
      %v3724 = vsub.f32 1.0, %v3723
      %v3725 = vmul.f32 %v3722, %v3724
      %v3726 = vadd.f32 %v3722, %v3725
      %vm3727 = vweird.f32 %v3536
      %vm3728 = vweird.f32 %v3722
      %vm3729 = vmor %vm3727, %vm3728
      %v3730 = vsel %vm3729, %v3722, %v3726
      %v3731 = vand.u32 2147483647, %v3536
      %vm3732 = vcmp.eq.f32.partialorder %v3731, 8.507059e+37
      %v3733 = vand.u32 %v3536, 2147483648
      %v3734 = vor.u32 1.1754944e-38, %v3733
      %v3735 = vsel %vm3732, %v3734, %v3730
      %v3736 = vmul.f32 1.0, %v3735
      %v3737 = vrcp.pop %v3537
      %v3738 = vmul.f32 %v3537, %v3737
      %v3739 = vsub.f32 1.0, %v3738
      %v3740 = vmul.f32 %v3737, %v3739
      %v3741 = vadd.f32 %v3737, %v3740
      %vm3742 = vweird.f32 %v3537
      %vm3743 = vweird.f32 %v3737
      %vm3744 = vmor %vm3742, %vm3743
      %v3745 = vsel %vm3744, %v3737, %v3741
      %v3746 = vand.u32 2147483647, %v3537
      %vm3747 = vcmp.eq.f32.partialorder %v3746, 8.507059e+37
      %v3748 = vand.u32 %v3537, 2147483648
      %v3749 = vor.u32 1.1754944e-38, %v3748
      %v3750 = vsel %vm3747, %v3749, %v3745
      %v3751 = vmul.f32 1.0, %v3750
      %v3752 = vrcp.pop %v3538
      %v3753 = vmul.f32 %v3538, %v3752
      %v3754 = vsub.f32 1.0, %v3753
      %v3755 = vmul.f32 %v3752, %v3754
      %v3756 = vadd.f32 %v3752, %v3755
      %vm3757 = vweird.f32 %v3538
      %vm3758 = vweird.f32 %v3752
      %vm3759 = vmor %vm3757, %vm3758
      %v3760 = vsel %vm3759, %v3752, %v3756
      %v3761 = vand.u32 2147483647, %v3538
      %vm3762 = vcmp.eq.f32.partialorder %v3761, 8.507059e+37
      %v3763 = vand.u32 %v3538, 2147483648
      %v3764 = vor.u32 1.1754944e-38, %v3763
      %v3765 = vsel %vm3762, %v3764, %v3760
      %v3766 = vmul.f32 1.0, %v3765
      %v3767 = vrcp.pop %v3539
      %v3768 = vmul.f32 %v3539, %v3767
      %v3769 = vsub.f32 1.0, %v3768
      %v3770 = vmul.f32 %v3767, %v3769
      %v3771 = vadd.f32 %v3767, %v3770
      %vm3772 = vweird.f32 %v3539
      %vm3773 = vweird.f32 %v3767
      %vm3774 = vmor %vm3772, %vm3773
      %v3775 = vsel %vm3774, %v3767, %v3771
      %v3776 = vand.u32 2147483647, %v3539
      %vm3777 = vcmp.eq.f32.partialorder %v3776, 8.507059e+37
      %v3778 = vand.u32 %v3539, 2147483648
      %v3779 = vor.u32 1.1754944e-38, %v3778
      %v3780 = vsel %vm3777, %v3779, %v3775
      %v3781 = vmul.f32 1.0, %v3780
      %v3782 = vrcp.pop %v3540
      %v3783 = vmul.f32 %v3540, %v3782
      %v3784 = vsub.f32 1.0, %v3783
      %v3785 = vmul.f32 %v3782, %v3784
      %v3786 = vadd.f32 %v3782, %v3785
      %vm3787 = vweird.f32 %v3540
      %vm3788 = vweird.f32 %v3782
      %vm3789 = vmor %vm3787, %vm3788
      %v3790 = vsel %vm3789, %v3782, %v3786
      %v3791 = vand.u32 2147483647, %v3540
      %vm3792 = vcmp.eq.f32.partialorder %v3791, 8.507059e+37
      %v3793 = vand.u32 %v3540, 2147483648
      %v3794 = vor.u32 1.1754944e-38, %v3793
      %v3795 = vsel %vm3792, %v3794, %v3790
      %v3796 = vmul.f32 1.0, %v3795
      %v3797 = vrcp.pop %v3541
      %v3798 = vmul.f32 %v3541, %v3797
      %v3799 = vsub.f32 1.0, %v3798
      %v3800 = vmul.f32 %v3797, %v3799
      %v3801 = vadd.f32 %v3797, %v3800
      %vm3802 = vweird.f32 %v3541
      %vm3803 = vweird.f32 %v3797
      %vm3804 = vmor %vm3802, %vm3803
      %v3805 = vsel %vm3804, %v3797, %v3801
      %v3806 = vand.u32 2147483647, %v3541
      %vm3807 = vcmp.eq.f32.partialorder %v3806, 8.507059e+37
      %v3808 = vand.u32 %v3541, 2147483648
      %v3809 = vor.u32 1.1754944e-38, %v3808
      %v3810 = vsel %vm3807, %v3809, %v3805
      %v3811 = vmul.f32 1.0, %v3810
      %v3812 = vrcp.pop %v3542
      %v3813 = vmul.f32 %v3542, %v3812
      %v3814 = vsub.f32 1.0, %v3813
      %v3815 = vmul.f32 %v3812, %v3814
      %v3816 = vadd.f32 %v3812, %v3815
      %vm3817 = vweird.f32 %v3542
      %vm3818 = vweird.f32 %v3812
      %vm3819 = vmor %vm3817, %vm3818
      %v3820 = vsel %vm3819, %v3812, %v3816
      %v3821 = vand.u32 2147483647, %v3542
      %vm3822 = vcmp.eq.f32.partialorder %v3821, 8.507059e+37
      %v3823 = vand.u32 %v3542, 2147483648
      %v3824 = vor.u32 1.1754944e-38, %v3823
      %v3825 = vsel %vm3822, %v3824, %v3820
      %v3826 = vmul.f32 1.0, %v3825
      %v3827 = vrcp.pop %v3543
      %v3828 = vmul.f32 %v3543, %v3827
      %v3829 = vsub.f32 1.0, %v3828
      %v3830 = vmul.f32 %v3827, %v3829
      %v3831 = vadd.f32 %v3827, %v3830
      %vm3832 = vweird.f32 %v3543
      %vm3833 = vweird.f32 %v3827
      %vm3834 = vmor %vm3832, %vm3833
      %v3835 = vsel %vm3834, %v3827, %v3831
      %v3836 = vand.u32 2147483647, %v3543
      %vm3837 = vcmp.eq.f32.partialorder %v3836, 8.507059e+37
      %v3838 = vand.u32 %v3543, 2147483648
      %v3839 = vor.u32 1.1754944e-38, %v3838
      %v3840 = vsel %vm3837, %v3839, %v3835
      %v3841 = vmul.f32 1.0, %v3840
      %v3842 = vrcp.pop %v3544
      %v3843 = vmul.f32 %v3544, %v3842
      %v3844 = vsub.f32 1.0, %v3843
      %v3845 = vmul.f32 %v3842, %v3844
      %v3846 = vadd.f32 %v3842, %v3845
      %vm3847 = vweird.f32 %v3544
      %vm3848 = vweird.f32 %v3842
      %vm3849 = vmor %vm3847, %vm3848
      %v3850 = vsel %vm3849, %v3842, %v3846
      %v3851 = vand.u32 2147483647, %v3544
      %vm3852 = vcmp.eq.f32.partialorder %v3851, 8.507059e+37
      %v3853 = vand.u32 %v3544, 2147483648
      %v3854 = vor.u32 1.1754944e-38, %v3853
      %v3855 = vsel %vm3852, %v3854, %v3850
      %v3856 = vmul.f32 1.0, %v3855
      %v3857 = vrcp.pop %v3545
      %v3858 = vmul.f32 %v3545, %v3857
      %v3859 = vsub.f32 1.0, %v3858
      %v3860 = vmul.f32 %v3857, %v3859
      %v3861 = vadd.f32 %v3857, %v3860
      %vm3862 = vweird.f32 %v3545
      %vm3863 = vweird.f32 %v3857
      %vm3864 = vmor %vm3862, %vm3863
      %v3865 = vsel %vm3864, %v3857, %v3861
      %v3866 = vand.u32 2147483647, %v3545
      %vm3867 = vcmp.eq.f32.partialorder %v3866, 8.507059e+37
      %v3868 = vand.u32 %v3545, 2147483648
      %v3869 = vor.u32 1.1754944e-38, %v3868
      %v3870 = vsel %vm3867, %v3869, %v3865
      %v3871 = vmul.f32 1.0, %v3870
      %v3872 = vrcp.pop %v3546
      %v3873 = vmul.f32 %v3546, %v3872
      %v3874 = vsub.f32 1.0, %v3873
      %v3875 = vmul.f32 %v3872, %v3874
      %v3876 = vadd.f32 %v3872, %v3875
      %vm3877 = vweird.f32 %v3546
      %vm3878 = vweird.f32 %v3872
      %vm3879 = vmor %vm3877, %vm3878
      %v3880 = vsel %vm3879, %v3872, %v3876
      %v3881 = vand.u32 2147483647, %v3546
      %vm3882 = vcmp.eq.f32.partialorder %v3881, 8.507059e+37
      %v3883 = vand.u32 %v3546, 2147483648
      %v3884 = vor.u32 1.1754944e-38, %v3883
      %v3885 = vsel %vm3882, %v3884, %v3880
      %v3886 = vmul.f32 1.0, %v3885
      %v3887 = vrcp.pop %v3547
      %v3888 = vmul.f32 %v3547, %v3887
      %v3889 = vsub.f32 1.0, %v3888
      %v3890 = vmul.f32 %v3887, %v3889
      %v3891 = vadd.f32 %v3887, %v3890
      %vm3892 = vweird.f32 %v3547
      %vm3893 = vweird.f32 %v3887
      %vm3894 = vmor %vm3892, %vm3893
      %v3895 = vsel %vm3894, %v3887, %v3891
      %v3896 = vand.u32 2147483647, %v3547
      %vm3897 = vcmp.eq.f32.partialorder %v3896, 8.507059e+37
      %v3898 = vand.u32 %v3547, 2147483648
      %v3899 = vor.u32 1.1754944e-38, %v3898
      %v3900 = vsel %vm3897, %v3899, %v3895
      %v3901 = vmul.f32 1.0, %v3900
      %v3902 = vrcp.pop %v3548
      %v3903 = vmul.f32 %v3548, %v3902
      %v3904 = vsub.f32 1.0, %v3903
      %v3905 = vmul.f32 %v3902, %v3904
      %v3906 = vadd.f32 %v3902, %v3905
      %vm3907 = vweird.f32 %v3548
      %vm3908 = vweird.f32 %v3902
      %vm3909 = vmor %vm3907, %vm3908
      %v3910 = vsel %vm3909, %v3902, %v3906
      %v3911 = vand.u32 2147483647, %v3548
      %vm3912 = vcmp.eq.f32.partialorder %v3911, 8.507059e+37
      %v3913 = vand.u32 %v3548, 2147483648
      %v3914 = vor.u32 1.1754944e-38, %v3913
      %v3915 = vsel %vm3912, %v3914, %v3910
      %v3916 = vmul.f32 1.0, %v3915
      %v3917 = vrcp.pop %v3549
      %v3918 = vmul.f32 %v3549, %v3917
      %v3919 = vsub.f32 1.0, %v3918
      %v3920 = vmul.f32 %v3917, %v3919
      %v3921 = vadd.f32 %v3917, %v3920
      %vm3922 = vweird.f32 %v3549
      %vm3923 = vweird.f32 %v3917
      %vm3924 = vmor %vm3922, %vm3923
      %v3925 = vsel %vm3924, %v3917, %v3921
      %v3926 = vand.u32 2147483647, %v3549
      %vm3927 = vcmp.eq.f32.partialorder %v3926, 8.507059e+37
      %v3928 = vand.u32 %v3549, 2147483648
      %v3929 = vor.u32 1.1754944e-38, %v3928
      %v3930 = vsel %vm3927, %v3929, %v3925
      %v3931 = vmul.f32 1.0, %v3930
      %v3932 = vrcp.pop %v3550
      %v3933 = vmul.f32 %v3550, %v3932
      %v3934 = vsub.f32 1.0, %v3933
      %v3935 = vmul.f32 %v3932, %v3934
      %v3936 = vadd.f32 %v3932, %v3935
      %vm3937 = vweird.f32 %v3550
      %vm3938 = vweird.f32 %v3932
      %vm3939 = vmor %vm3937, %vm3938
      %v3940 = vsel %vm3939, %v3932, %v3936
      %v3941 = vand.u32 2147483647, %v3550
      %vm3942 = vcmp.eq.f32.partialorder %v3941, 8.507059e+37
      %v3943 = vand.u32 %v3550, 2147483648
      %v3944 = vor.u32 1.1754944e-38, %v3943
      %v3945 = vsel %vm3942, %v3944, %v3940
      %v3946 = vmul.f32 1.0, %v3945
      %v3947 = vrcp.pop %v3551
      %v3948 = vmul.f32 %v3551, %v3947
      %v3949 = vsub.f32 1.0, %v3948
      %v3950 = vmul.f32 %v3947, %v3949
      %v3951 = vadd.f32 %v3947, %v3950
      %vm3952 = vweird.f32 %v3551
      %vm3953 = vweird.f32 %v3947
      %vm3954 = vmor %vm3952, %vm3953
      %v3955 = vsel %vm3954, %v3947, %v3951
      %v3956 = vand.u32 2147483647, %v3551
      %vm3957 = vcmp.eq.f32.partialorder %v3956, 8.507059e+37
      %v3958 = vand.u32 %v3551, 2147483648
      %v3959 = vor.u32 1.1754944e-38, %v3958
      %v3960 = vsel %vm3957, %v3959, %v3955
      %v3961 = vmul.f32 1.0, %v3960
      %v3962 = vrcp.pop %v3552
      %v3963 = vmul.f32 %v3552, %v3962
      %v3964 = vsub.f32 1.0, %v3963
      %v3965 = vmul.f32 %v3962, %v3964
      %v3966 = vadd.f32 %v3962, %v3965
      %vm3967 = vweird.f32 %v3552
      %vm3968 = vweird.f32 %v3962
      %vm3969 = vmor %vm3967, %vm3968
      %v3970 = vsel %vm3969, %v3962, %v3966
      %v3971 = vand.u32 2147483647, %v3552
      %vm3972 = vcmp.eq.f32.partialorder %v3971, 8.507059e+37
      %v3973 = vand.u32 %v3552, 2147483648
      %v3974 = vor.u32 1.1754944e-38, %v3973
      %v3975 = vsel %vm3972, %v3974, %v3970
      %v3976 = vmul.f32 1.0, %v3975
      %v3977 = vrcp.pop %v3553
      %v3978 = vmul.f32 %v3553, %v3977
      %v3979 = vsub.f32 1.0, %v3978
      %v3980 = vmul.f32 %v3977, %v3979
      %v3981 = vadd.f32 %v3977, %v3980
      %vm3982 = vweird.f32 %v3553
      %vm3983 = vweird.f32 %v3977
      %vm3984 = vmor %vm3982, %vm3983
      %v3985 = vsel %vm3984, %v3977, %v3981
      %v3986 = vand.u32 2147483647, %v3553
      %vm3987 = vcmp.eq.f32.partialorder %v3986, 8.507059e+37
      %v3988 = vand.u32 %v3553, 2147483648
      %v3989 = vor.u32 1.1754944e-38, %v3988
      %v3990 = vsel %vm3987, %v3989, %v3985
      %v3991 = vmul.f32 1.0, %v3990
      %v3992 = vrcp.pop %v3554
      %v3993 = vmul.f32 %v3554, %v3992
      %v3994 = vsub.f32 1.0, %v3993
      %v3995 = vmul.f32 %v3992, %v3994
      %v3996 = vadd.f32 %v3992, %v3995
      %vm3997 = vweird.f32 %v3554
      %vm3998 = vweird.f32 %v3992
      %vm3999 = vmor %vm3997, %vm3998
      %v4000 = vsel %vm3999, %v3992, %v3996
      %v4001 = vand.u32 2147483647, %v3554
      %vm4002 = vcmp.eq.f32.partialorder %v4001, 8.507059e+37
      %v4003 = vand.u32 %v3554, 2147483648
      %v4004 = vor.u32 1.1754944e-38, %v4003
      %v4005 = vsel %vm4002, %v4004, %v4000
      %v4006 = vmul.f32 1.0, %v4005
      %v4007 = vrcp.pop %v3555
      %v4008 = vmul.f32 %v3555, %v4007
      %v4009 = vsub.f32 1.0, %v4008
      %v4010 = vmul.f32 %v4007, %v4009
      %v4011 = vadd.f32 %v4007, %v4010
      %vm4012 = vweird.f32 %v3555
      %vm4013 = vweird.f32 %v4007
      %vm4014 = vmor %vm4012, %vm4013
      %v4015 = vsel %vm4014, %v4007, %v4011
      %v4016 = vand.u32 2147483647, %v3555
      %vm4017 = vcmp.eq.f32.partialorder %v4016, 8.507059e+37
      %v4018 = vand.u32 %v3555, 2147483648
      %v4019 = vor.u32 1.1754944e-38, %v4018
      %v4020 = vsel %vm4017, %v4019, %v4015
      %v4021 = vmul.f32 1.0, %v4020
      %v4022 = vrcp.pop %v3556
      %v4023 = vmul.f32 %v3556, %v4022
      %v4024 = vsub.f32 1.0, %v4023
      %v4025 = vmul.f32 %v4022, %v4024
      %v4026 = vadd.f32 %v4022, %v4025
      %vm4027 = vweird.f32 %v3556
      %vm4028 = vweird.f32 %v4022
      %vm4029 = vmor %vm4027, %vm4028
      %v4030 = vsel %vm4029, %v4022, %v4026
      %v4031 = vand.u32 2147483647, %v3556
      %vm4032 = vcmp.eq.f32.partialorder %v4031, 8.507059e+37
      %v4033 = vand.u32 %v3556, 2147483648
      %v4034 = vor.u32 1.1754944e-38, %v4033
      %v4035 = vsel %vm4032, %v4034, %v4030
      %v4036 = vmul.f32 1.0, %v4035
      %vm4037 = vcmp.gt.f32.partialorder %v3427, 0.0
      %v4038 = vsel %vm4037, 1, 0
      %v4039 = vperm.slane %v4038, 0
      %vm4040 = vcmp.eq.s32.totalorder %v4039, 1
      %v4041 = vsel %vm4040, %v3346, -1e+30
      %v4042 = vsel %vm4040, %v3348, -1e+30
      %v4043 = vsel %vm4040, %v3351, -1e+30
      %v4044 = vsel %vm4040, %v3353, -1e+30
      %v4045 = vsel %vm4040, %v3356, -1e+30
      %v4046 = vsel %vm4040, %v3358, -1e+30
      %v4047 = vsel %vm4040, %v3361, -1e+30
      %v4048 = vsel %vm4040, %v3363, -1e+30
      %v4049 = vsel %vm4040, %v3366, -1e+30
      %v4050 = vsel %vm4040, %v3368, -1e+30
      %v4051 = vsel %vm4040, %v3371, -1e+30
      %v4052 = vsel %vm4040, %v3373, -1e+30
      %v4053 = vsel %vm4040, %v3376, -1e+30
      %v4054 = vsel %vm4040, %v3378, -1e+30
      %v4055 = vsel %vm4040, %v3381, -1e+30
      %v4056 = vsel %vm4040, %v3383, -1e+30
      %v4057 = vsel %vm4040, %v3386, -1e+30
      %v4058 = vsel %vm4040, %v3388, -1e+30
      %v4059 = vsel %vm4040, %v3391, -1e+30
      %v4060 = vsel %vm4040, %v3393, -1e+30
      %v4061 = vsel %vm4040, %v3396, -1e+30
      %v4062 = vsel %vm4040, %v3398, -1e+30
      %v4063 = vsel %vm4040, %v3401, -1e+30
      %v4064 = vsel %vm4040, %v3403, -1e+30
      %v4065 = vsel %vm4040, %v3406, -1e+30
      %v4066 = vsel %vm4040, %v3408, -1e+30
      %v4067 = vsel %vm4040, %v3411, -1e+30
      %v4068 = vsel %vm4040, %v3413, -1e+30
      %v4069 = vsel %vm4040, %v3416, -1e+30
      %v4070 = vsel %vm4040, %v3418, -1e+30
      %v4071 = vsel %vm4040, %v3421, -1e+30
      %v4072 = vsel %vm4040, %v3423, -1e+30
      %4073 = vrot.lane.b32.xlu0 %v4041, 1
      %v4074 = vpop.permute.xlu0 %4073
      %4075 = vrot.lane.b32.xlu0 %v4042, 1
      %v4076 = vpop.permute.xlu0 %4075
      %4077 = vrot.lane.b32.xlu0 %v4043, 1
      %v4078 = vpop.permute.xlu0 %4077
      %4079 = vrot.lane.b32.xlu0 %v4044, 1
      %v4080 = vpop.permute.xlu0 %4079
      %4081 = vrot.lane.b32.xlu0 %v4045, 1
      %v4082 = vpop.permute.xlu0 %4081
      %4083 = vrot.lane.b32.xlu0 %v4046, 1
      %v4084 = vpop.permute.xlu0 %4083
      %4085 = vrot.lane.b32.xlu0 %v4047, 1
      %v4086 = vpop.permute.xlu0 %4085
      %4087 = vrot.lane.b32.xlu0 %v4048, 1
      %v4088 = vpop.permute.xlu0 %4087
      %4089 = vrot.lane.b32.xlu0 %v4049, 1
      %v4090 = vpop.permute.xlu0 %4089
      %4091 = vrot.lane.b32.xlu0 %v4050, 1
      %v4092 = vpop.permute.xlu0 %4091
      %4093 = vrot.lane.b32.xlu0 %v4051, 1
      %v4094 = vpop.permute.xlu0 %4093
      %4095 = vrot.lane.b32.xlu0 %v4052, 1
      %v4096 = vpop.permute.xlu0 %4095
      %4097 = vrot.lane.b32.xlu0 %v4053, 1
      %v4098 = vpop.permute.xlu0 %4097
      %4099 = vrot.lane.b32.xlu0 %v4054, 1
      %v4100 = vpop.permute.xlu0 %4099
      %4101 = vrot.lane.b32.xlu0 %v4055, 1
      %v4102 = vpop.permute.xlu0 %4101
      %4103 = vrot.lane.b32.xlu0 %v4056, 1
      %v4104 = vpop.permute.xlu0 %4103
      %4105 = vrot.lane.b32.xlu0 %v4057, 1
      %v4106 = vpop.permute.xlu0 %4105
      %4107 = vrot.lane.b32.xlu0 %v4058, 1
      %v4108 = vpop.permute.xlu0 %4107
      %4109 = vrot.lane.b32.xlu0 %v4059, 1
      %v4110 = vpop.permute.xlu0 %4109
      %4111 = vrot.lane.b32.xlu0 %v4060, 1
      %v4112 = vpop.permute.xlu0 %4111
      %4113 = vrot.lane.b32.xlu0 %v4061, 1
      %v4114 = vpop.permute.xlu0 %4113
      %4115 = vrot.lane.b32.xlu0 %v4062, 1
      %v4116 = vpop.permute.xlu0 %4115
      %4117 = vrot.lane.b32.xlu0 %v4063, 1
      %v4118 = vpop.permute.xlu0 %4117
      %4119 = vrot.lane.b32.xlu0 %v4064, 1
      %v4120 = vpop.permute.xlu0 %4119
      %4121 = vrot.lane.b32.xlu0 %v4065, 1
      %v4122 = vpop.permute.xlu0 %4121
      %4123 = vrot.lane.b32.xlu0 %v4066, 1
      %v4124 = vpop.permute.xlu0 %4123
      %4125 = vrot.lane.b32.xlu0 %v4067, 1
      %v4126 = vpop.permute.xlu0 %4125
      %4127 = vrot.lane.b32.xlu0 %v4068, 1
      %v4128 = vpop.permute.xlu0 %4127
      %4129 = vrot.lane.b32.xlu0 %v4069, 1
      %v4130 = vpop.permute.xlu0 %4129
      %4131 = vrot.lane.b32.xlu0 %v4070, 1
      %v4132 = vpop.permute.xlu0 %4131
      %4133 = vrot.lane.b32.xlu0 %v4071, 1
      %v4134 = vpop.permute.xlu0 %4133
      %4135 = vrot.lane.b32.xlu0 %v4072, 1
      %v4136 = vpop.permute.xlu0 %4135
      %v4137 = vmax.f32 %v4041, %v4074
      %v4138 = vmax.f32 %v4042, %v4076
      %v4139 = vmax.f32 %v4043, %v4078
      %v4140 = vmax.f32 %v4044, %v4080
      %v4141 = vmax.f32 %v4045, %v4082
      %v4142 = vmax.f32 %v4046, %v4084
      %v4143 = vmax.f32 %v4047, %v4086
      %v4144 = vmax.f32 %v4048, %v4088
      %v4145 = vmax.f32 %v4049, %v4090
      %v4146 = vmax.f32 %v4050, %v4092
      %v4147 = vmax.f32 %v4051, %v4094
      %v4148 = vmax.f32 %v4052, %v4096
      %v4149 = vmax.f32 %v4053, %v4098
      %v4150 = vmax.f32 %v4054, %v4100
      %v4151 = vmax.f32 %v4055, %v4102
      %v4152 = vmax.f32 %v4056, %v4104
      %v4153 = vmax.f32 %v4057, %v4106
      %v4154 = vmax.f32 %v4058, %v4108
      %v4155 = vmax.f32 %v4059, %v4110
      %v4156 = vmax.f32 %v4060, %v4112
      %v4157 = vmax.f32 %v4061, %v4114
      %v4158 = vmax.f32 %v4062, %v4116
      %v4159 = vmax.f32 %v4063, %v4118
      %v4160 = vmax.f32 %v4064, %v4120
      %v4161 = vmax.f32 %v4065, %v4122
      %v4162 = vmax.f32 %v4066, %v4124
      %v4163 = vmax.f32 %v4067, %v4126
      %v4164 = vmax.f32 %v4068, %v4128
      %v4165 = vmax.f32 %v4069, %v4130
      %v4166 = vmax.f32 %v4070, %v4132
      %v4167 = vmax.f32 %v4071, %v4134
      %v4168 = vmax.f32 %v4072, %v4136
      %4169 = vrot.lane.b32.xlu0 %v4041, 127
      %v4170 = vpop.permute.xlu0 %4169
      %4171 = vrot.lane.b32.xlu0 %v4042, 127
      %v4172 = vpop.permute.xlu0 %4171
      %4173 = vrot.lane.b32.xlu0 %v4043, 127
      %v4174 = vpop.permute.xlu0 %4173
      %4175 = vrot.lane.b32.xlu0 %v4044, 127
      %v4176 = vpop.permute.xlu0 %4175
      %4177 = vrot.lane.b32.xlu0 %v4045, 127
      %v4178 = vpop.permute.xlu0 %4177
      %4179 = vrot.lane.b32.xlu0 %v4046, 127
      %v4180 = vpop.permute.xlu0 %4179
      %4181 = vrot.lane.b32.xlu0 %v4047, 127
      %v4182 = vpop.permute.xlu0 %4181
      %4183 = vrot.lane.b32.xlu0 %v4048, 127
      %v4184 = vpop.permute.xlu0 %4183
      %4185 = vrot.lane.b32.xlu0 %v4049, 127
      %v4186 = vpop.permute.xlu0 %4185
      %4187 = vrot.lane.b32.xlu0 %v4050, 127
      %v4188 = vpop.permute.xlu0 %4187
      %4189 = vrot.lane.b32.xlu0 %v4051, 127
      %v4190 = vpop.permute.xlu0 %4189
      %4191 = vrot.lane.b32.xlu0 %v4052, 127
      %v4192 = vpop.permute.xlu0 %4191
      %4193 = vrot.lane.b32.xlu0 %v4053, 127
      %v4194 = vpop.permute.xlu0 %4193
      %4195 = vrot.lane.b32.xlu0 %v4054, 127
      %v4196 = vpop.permute.xlu0 %4195
      %4197 = vrot.lane.b32.xlu0 %v4055, 127
      %v4198 = vpop.permute.xlu0 %4197
      %4199 = vrot.lane.b32.xlu0 %v4056, 127
      %v4200 = vpop.permute.xlu0 %4199
      %4201 = vrot.lane.b32.xlu0 %v4057, 127
      %v4202 = vpop.permute.xlu0 %4201
      %4203 = vrot.lane.b32.xlu0 %v4058, 127
      %v4204 = vpop.permute.xlu0 %4203
      %4205 = vrot.lane.b32.xlu0 %v4059, 127
      %v4206 = vpop.permute.xlu0 %4205
      %4207 = vrot.lane.b32.xlu0 %v4060, 127
      %v4208 = vpop.permute.xlu0 %4207
      %4209 = vrot.lane.b32.xlu0 %v4061, 127
      %v4210 = vpop.permute.xlu0 %4209
      %4211 = vrot.lane.b32.xlu0 %v4062, 127
      %v4212 = vpop.permute.xlu0 %4211
      %4213 = vrot.lane.b32.xlu0 %v4063, 127
      %v4214 = vpop.permute.xlu0 %4213
      %4215 = vrot.lane.b32.xlu0 %v4064, 127
      %v4216 = vpop.permute.xlu0 %4215
      %4217 = vrot.lane.b32.xlu0 %v4065, 127
      %v4218 = vpop.permute.xlu0 %4217
      %4219 = vrot.lane.b32.xlu0 %v4066, 127
      %v4220 = vpop.permute.xlu0 %4219
      %4221 = vrot.lane.b32.xlu0 %v4067, 127
      %v4222 = vpop.permute.xlu0 %4221
      %4223 = vrot.lane.b32.xlu0 %v4068, 127
      %v4224 = vpop.permute.xlu0 %4223
      %4225 = vrot.lane.b32.xlu0 %v4069, 127
      %v4226 = vpop.permute.xlu0 %4225
      %4227 = vrot.lane.b32.xlu0 %v4070, 127
      %v4228 = vpop.permute.xlu0 %4227
      %4229 = vrot.lane.b32.xlu0 %v4071, 127
      %v4230 = vpop.permute.xlu0 %4229
      %4231 = vrot.lane.b32.xlu0 %v4072, 127
      %v4232 = vpop.permute.xlu0 %4231
      %v4233 = vmax.f32 %v4137, %v4170
      %v4234 = vmax.f32 %v4138, %v4172
      %v4235 = vmax.f32 %v4139, %v4174
      %v4236 = vmax.f32 %v4140, %v4176
      %v4237 = vmax.f32 %v4141, %v4178
      %v4238 = vmax.f32 %v4142, %v4180
      %v4239 = vmax.f32 %v4143, %v4182
      %v4240 = vmax.f32 %v4144, %v4184
      %v4241 = vmax.f32 %v4145, %v4186
      %v4242 = vmax.f32 %v4146, %v4188
      %v4243 = vmax.f32 %v4147, %v4190
      %v4244 = vmax.f32 %v4148, %v4192
      %v4245 = vmax.f32 %v4149, %v4194
      %v4246 = vmax.f32 %v4150, %v4196
      %v4247 = vmax.f32 %v4151, %v4198
      %v4248 = vmax.f32 %v4152, %v4200
      %v4249 = vmax.f32 %v4153, %v4202
      %v4250 = vmax.f32 %v4154, %v4204
      %v4251 = vmax.f32 %v4155, %v4206
      %v4252 = vmax.f32 %v4156, %v4208
      %v4253 = vmax.f32 %v4157, %v4210
      %v4254 = vmax.f32 %v4158, %v4212
      %v4255 = vmax.f32 %v4159, %v4214
      %v4256 = vmax.f32 %v4160, %v4216
      %v4257 = vmax.f32 %v4161, %v4218
      %v4258 = vmax.f32 %v4162, %v4220
      %v4259 = vmax.f32 %v4163, %v4222
      %v4260 = vmax.f32 %v4164, %v4224
      %v4261 = vmax.f32 %v4165, %v4226
      %v4262 = vmax.f32 %v4166, %v4228
      %v4263 = vmax.f32 %v4167, %v4230
      %v4264 = vmax.f32 %v4168, %v4232
      %4265 = vrot.lane.b32.xlu0 %v4041, 2
      %v4266 = vpop.permute.xlu0 %4265
      %4267 = vrot.lane.b32.xlu0 %v4042, 2
      %v4268 = vpop.permute.xlu0 %4267
      %4269 = vrot.lane.b32.xlu0 %v4043, 2
      %v4270 = vpop.permute.xlu0 %4269
      %4271 = vrot.lane.b32.xlu0 %v4044, 2
      %v4272 = vpop.permute.xlu0 %4271
      %4273 = vrot.lane.b32.xlu0 %v4045, 2
      %v4274 = vpop.permute.xlu0 %4273
      %4275 = vrot.lane.b32.xlu0 %v4046, 2
      %v4276 = vpop.permute.xlu0 %4275
      %4277 = vrot.lane.b32.xlu0 %v4047, 2
      %v4278 = vpop.permute.xlu0 %4277
      %4279 = vrot.lane.b32.xlu0 %v4048, 2
      %v4280 = vpop.permute.xlu0 %4279
      %4281 = vrot.lane.b32.xlu0 %v4049, 2
      %v4282 = vpop.permute.xlu0 %4281
      %4283 = vrot.lane.b32.xlu0 %v4050, 2
      %v4284 = vpop.permute.xlu0 %4283
      %4285 = vrot.lane.b32.xlu0 %v4051, 2
      %v4286 = vpop.permute.xlu0 %4285
      %4287 = vrot.lane.b32.xlu0 %v4052, 2
      %v4288 = vpop.permute.xlu0 %4287
      %4289 = vrot.lane.b32.xlu0 %v4053, 2
      %v4290 = vpop.permute.xlu0 %4289
      %4291 = vrot.lane.b32.xlu0 %v4054, 2
      %v4292 = vpop.permute.xlu0 %4291
      %4293 = vrot.lane.b32.xlu0 %v4055, 2
      %v4294 = vpop.permute.xlu0 %4293
      %4295 = vrot.lane.b32.xlu0 %v4056, 2
      %v4296 = vpop.permute.xlu0 %4295
      %4297 = vrot.lane.b32.xlu0 %v4057, 2
      %v4298 = vpop.permute.xlu0 %4297
      %4299 = vrot.lane.b32.xlu0 %v4058, 2
      %v4300 = vpop.permute.xlu0 %4299
      %4301 = vrot.lane.b32.xlu0 %v4059, 2
      %v4302 = vpop.permute.xlu0 %4301
      %4303 = vrot.lane.b32.xlu0 %v4060, 2
      %v4304 = vpop.permute.xlu0 %4303
      %4305 = vrot.lane.b32.xlu0 %v4061, 2
      %v4306 = vpop.permute.xlu0 %4305
      %4307 = vrot.lane.b32.xlu0 %v4062, 2
      %v4308 = vpop.permute.xlu0 %4307
      %4309 = vrot.lane.b32.xlu0 %v4063, 2
      %v4310 = vpop.permute.xlu0 %4309
      %4311 = vrot.lane.b32.xlu0 %v4064, 2
      %v4312 = vpop.permute.xlu0 %4311
      %4313 = vrot.lane.b32.xlu0 %v4065, 2
      %v4314 = vpop.permute.xlu0 %4313
      %4315 = vrot.lane.b32.xlu0 %v4066, 2
      %v4316 = vpop.permute.xlu0 %4315
      %4317 = vrot.lane.b32.xlu0 %v4067, 2
      %v4318 = vpop.permute.xlu0 %4317
      %4319 = vrot.lane.b32.xlu0 %v4068, 2
      %v4320 = vpop.permute.xlu0 %4319
      %4321 = vrot.lane.b32.xlu0 %v4069, 2
      %v4322 = vpop.permute.xlu0 %4321
      %4323 = vrot.lane.b32.xlu0 %v4070, 2
      %v4324 = vpop.permute.xlu0 %4323
      %4325 = vrot.lane.b32.xlu0 %v4071, 2
      %v4326 = vpop.permute.xlu0 %4325
      %4327 = vrot.lane.b32.xlu0 %v4072, 2
      %v4328 = vpop.permute.xlu0 %4327
      %v4329 = vmax.f32 %v4233, %v4266
      %v4330 = vmax.f32 %v4234, %v4268
      %v4331 = vmax.f32 %v4235, %v4270
      %v4332 = vmax.f32 %v4236, %v4272
      %v4333 = vmax.f32 %v4237, %v4274
      %v4334 = vmax.f32 %v4238, %v4276
      %v4335 = vmax.f32 %v4239, %v4278
      %v4336 = vmax.f32 %v4240, %v4280
      %v4337 = vmax.f32 %v4241, %v4282
      %v4338 = vmax.f32 %v4242, %v4284
      %v4339 = vmax.f32 %v4243, %v4286
      %v4340 = vmax.f32 %v4244, %v4288
      %v4341 = vmax.f32 %v4245, %v4290
      %v4342 = vmax.f32 %v4246, %v4292
      %v4343 = vmax.f32 %v4247, %v4294
      %v4344 = vmax.f32 %v4248, %v4296
      %v4345 = vmax.f32 %v4249, %v4298
      %v4346 = vmax.f32 %v4250, %v4300
      %v4347 = vmax.f32 %v4251, %v4302
      %v4348 = vmax.f32 %v4252, %v4304
      %v4349 = vmax.f32 %v4253, %v4306
      %v4350 = vmax.f32 %v4254, %v4308
      %v4351 = vmax.f32 %v4255, %v4310
      %v4352 = vmax.f32 %v4256, %v4312
      %v4353 = vmax.f32 %v4257, %v4314
      %v4354 = vmax.f32 %v4258, %v4316
      %v4355 = vmax.f32 %v4259, %v4318
      %v4356 = vmax.f32 %v4260, %v4320
      %v4357 = vmax.f32 %v4261, %v4322
      %v4358 = vmax.f32 %v4262, %v4324
      %v4359 = vmax.f32 %v4263, %v4326
      %v4360 = vmax.f32 %v4264, %v4328
      %4361 = vrot.lane.b32.xlu0 %v4041, 126
      %v4362 = vpop.permute.xlu0 %4361
      %4363 = vrot.lane.b32.xlu0 %v4042, 126
      %v4364 = vpop.permute.xlu0 %4363
      %4365 = vrot.lane.b32.xlu0 %v4043, 126
      %v4366 = vpop.permute.xlu0 %4365
      %4367 = vrot.lane.b32.xlu0 %v4044, 126
      %v4368 = vpop.permute.xlu0 %4367
      %4369 = vrot.lane.b32.xlu0 %v4045, 126
      %v4370 = vpop.permute.xlu0 %4369
      %4371 = vrot.lane.b32.xlu0 %v4046, 126
      %v4372 = vpop.permute.xlu0 %4371
      %4373 = vrot.lane.b32.xlu0 %v4047, 126
      %v4374 = vpop.permute.xlu0 %4373
      %4375 = vrot.lane.b32.xlu0 %v4048, 126
      %v4376 = vpop.permute.xlu0 %4375
      %4377 = vrot.lane.b32.xlu0 %v4049, 126
      %v4378 = vpop.permute.xlu0 %4377
      %4379 = vrot.lane.b32.xlu0 %v4050, 126
      %v4380 = vpop.permute.xlu0 %4379
      %4381 = vrot.lane.b32.xlu0 %v4051, 126
      %v4382 = vpop.permute.xlu0 %4381
      %4383 = vrot.lane.b32.xlu0 %v4052, 126
      %v4384 = vpop.permute.xlu0 %4383
      %4385 = vrot.lane.b32.xlu0 %v4053, 126
      %v4386 = vpop.permute.xlu0 %4385
      %4387 = vrot.lane.b32.xlu0 %v4054, 126
      %v4388 = vpop.permute.xlu0 %4387
      %4389 = vrot.lane.b32.xlu0 %v4055, 126
      %v4390 = vpop.permute.xlu0 %4389
      %4391 = vrot.lane.b32.xlu0 %v4056, 126
      %v4392 = vpop.permute.xlu0 %4391
      %4393 = vrot.lane.b32.xlu0 %v4057, 126
      %v4394 = vpop.permute.xlu0 %4393
      %4395 = vrot.lane.b32.xlu0 %v4058, 126
      %v4396 = vpop.permute.xlu0 %4395
      %4397 = vrot.lane.b32.xlu0 %v4059, 126
      %v4398 = vpop.permute.xlu0 %4397
      %4399 = vrot.lane.b32.xlu0 %v4060, 126
      %v4400 = vpop.permute.xlu0 %4399
      %4401 = vrot.lane.b32.xlu0 %v4061, 126
      %v4402 = vpop.permute.xlu0 %4401
      %4403 = vrot.lane.b32.xlu0 %v4062, 126
      %v4404 = vpop.permute.xlu0 %4403
      %4405 = vrot.lane.b32.xlu0 %v4063, 126
      %v4406 = vpop.permute.xlu0 %4405
      %4407 = vrot.lane.b32.xlu0 %v4064, 126
      %v4408 = vpop.permute.xlu0 %4407
      %4409 = vrot.lane.b32.xlu0 %v4065, 126
      %v4410 = vpop.permute.xlu0 %4409
      %4411 = vrot.lane.b32.xlu0 %v4066, 126
      %v4412 = vpop.permute.xlu0 %4411
      %4413 = vrot.lane.b32.xlu0 %v4067, 126
      %v4414 = vpop.permute.xlu0 %4413
      %4415 = vrot.lane.b32.xlu0 %v4068, 126
      %v4416 = vpop.permute.xlu0 %4415
      %4417 = vrot.lane.b32.xlu0 %v4069, 126
      %v4418 = vpop.permute.xlu0 %4417
      %4419 = vrot.lane.b32.xlu0 %v4070, 126
      %v4420 = vpop.permute.xlu0 %4419
      %4421 = vrot.lane.b32.xlu0 %v4071, 126
      %v4422 = vpop.permute.xlu0 %4421
      %4423 = vrot.lane.b32.xlu0 %v4072, 126
      %v4424 = vpop.permute.xlu0 %4423
      %v4425 = vmax.f32 %v4329, %v4362
      %v4426 = vmax.f32 %v4330, %v4364
      %v4427 = vmax.f32 %v4331, %v4366
      %v4428 = vmax.f32 %v4332, %v4368
      %v4429 = vmax.f32 %v4333, %v4370
      %v4430 = vmax.f32 %v4334, %v4372
      %v4431 = vmax.f32 %v4335, %v4374
      %v4432 = vmax.f32 %v4336, %v4376
      %v4433 = vmax.f32 %v4337, %v4378
      %v4434 = vmax.f32 %v4338, %v4380
      %v4435 = vmax.f32 %v4339, %v4382
      %v4436 = vmax.f32 %v4340, %v4384
      %v4437 = vmax.f32 %v4341, %v4386
      %v4438 = vmax.f32 %v4342, %v4388
      %v4439 = vmax.f32 %v4343, %v4390
      %v4440 = vmax.f32 %v4344, %v4392
      %v4441 = vmax.f32 %v4345, %v4394
      %v4442 = vmax.f32 %v4346, %v4396
      %v4443 = vmax.f32 %v4347, %v4398
      %v4444 = vmax.f32 %v4348, %v4400
      %v4445 = vmax.f32 %v4349, %v4402
      %v4446 = vmax.f32 %v4350, %v4404
      %v4447 = vmax.f32 %v4351, %v4406
      %v4448 = vmax.f32 %v4352, %v4408
      %v4449 = vmax.f32 %v4353, %v4410
      %v4450 = vmax.f32 %v4354, %v4412
      %v4451 = vmax.f32 %v4355, %v4414
      %v4452 = vmax.f32 %v4356, %v4416
      %v4453 = vmax.f32 %v4357, %v4418
      %v4454 = vmax.f32 %v4358, %v4420
      %v4455 = vmax.f32 %v4359, %v4422
      %v4456 = vmax.f32 %v4360, %v4424
      %v4457 = vsel %vm4040, %v4425, 0.0
      %v4458 = vsel %vm4040, %v4426, 0.0
      %v4459 = vsel %vm4040, %v4427, 0.0
      %v4460 = vsel %vm4040, %v4428, 0.0
      %v4461 = vsel %vm4040, %v4429, 0.0
      %v4462 = vsel %vm4040, %v4430, 0.0
      %v4463 = vsel %vm4040, %v4431, 0.0
      %v4464 = vsel %vm4040, %v4432, 0.0
      %v4465 = vsel %vm4040, %v4433, 0.0
      %v4466 = vsel %vm4040, %v4434, 0.0
      %v4467 = vsel %vm4040, %v4435, 0.0
      %v4468 = vsel %vm4040, %v4436, 0.0
      %v4469 = vsel %vm4040, %v4437, 0.0
      %v4470 = vsel %vm4040, %v4438, 0.0
      %v4471 = vsel %vm4040, %v4439, 0.0
      %v4472 = vsel %vm4040, %v4440, 0.0
      %v4473 = vsel %vm4040, %v4441, 0.0
      %v4474 = vsel %vm4040, %v4442, 0.0
      %v4475 = vsel %vm4040, %v4443, 0.0
      %v4476 = vsel %vm4040, %v4444, 0.0
      %v4477 = vsel %vm4040, %v4445, 0.0
      %v4478 = vsel %vm4040, %v4446, 0.0
      %v4479 = vsel %vm4040, %v4447, 0.0
      %v4480 = vsel %vm4040, %v4448, 0.0
      %v4481 = vsel %vm4040, %v4449, 0.0
      %v4482 = vsel %vm4040, %v4450, 0.0
      %v4483 = vsel %vm4040, %v4451, 0.0
      %v4484 = vsel %vm4040, %v4452, 0.0
      %v4485 = vsel %vm4040, %v4453, 0.0
      %v4486 = vsel %vm4040, %v4454, 0.0
      %v4487 = vsel %vm4040, %v4455, 0.0
      %v4488 = vsel %vm4040, %v4456, 0.0
      %vm4489 = vcmp.gt.f32.partialorder %v3428, 0.0
      %v4490 = vsub.f32 %v3346, %v4457
      %v4491 = vsub.f32 %v3348, %v4458
      %v4492 = vsub.f32 %v3351, %v4459
      %v4493 = vsub.f32 %v3353, %v4460
      %v4494 = vsub.f32 %v3356, %v4461
      %v4495 = vsub.f32 %v3358, %v4462
      %v4496 = vsub.f32 %v3361, %v4463
      %v4497 = vsub.f32 %v3363, %v4464
      %v4498 = vsub.f32 %v3366, %v4465
      %v4499 = vsub.f32 %v3368, %v4466
      %v4500 = vsub.f32 %v3371, %v4467
      %v4501 = vsub.f32 %v3373, %v4468
      %v4502 = vsub.f32 %v3376, %v4469
      %v4503 = vsub.f32 %v3378, %v4470
      %v4504 = vsub.f32 %v3381, %v4471
      %v4505 = vsub.f32 %v3383, %v4472
      %v4506 = vsub.f32 %v3386, %v4473
      %v4507 = vsub.f32 %v3388, %v4474
      %v4508 = vsub.f32 %v3391, %v4475
      %v4509 = vsub.f32 %v3393, %v4476
      %v4510 = vsub.f32 %v3396, %v4477
      %v4511 = vsub.f32 %v3398, %v4478
      %v4512 = vsub.f32 %v3401, %v4479
      %v4513 = vsub.f32 %v3403, %v4480
      %v4514 = vsub.f32 %v3406, %v4481
      %v4515 = vsub.f32 %v3408, %v4482
      %v4516 = vsub.f32 %v3411, %v4483
      %v4517 = vsub.f32 %v3413, %v4484
      %v4518 = vsub.f32 %v3416, %v4485
      %v4519 = vsub.f32 %v3418, %v4486
      %v4520 = vsub.f32 %v3421, %v4487
      %v4521 = vsub.f32 %v3423, %v4488
      %v4522 = vsel %vm4489, 1, 0
      %v4523 = vperm.slane %v4522, 0
      %vm4524 = vcmp.eq.s32.totalorder %v4523, 1
      %v4525 = vsel %vm4524, %v4490, 0.0
      %v4526 = vsel %vm4524, %v4491, 0.0
      %v4527 = vsel %vm4524, %v4492, 0.0
      %v4528 = vsel %vm4524, %v4493, 0.0
      %v4529 = vsel %vm4524, %v4494, 0.0
      %v4530 = vsel %vm4524, %v4495, 0.0
      %v4531 = vsel %vm4524, %v4496, 0.0
      %v4532 = vsel %vm4524, %v4497, 0.0
      %v4533 = vsel %vm4524, %v4498, 0.0
      %v4534 = vsel %vm4524, %v4499, 0.0
      %v4535 = vsel %vm4524, %v4500, 0.0
      %v4536 = vsel %vm4524, %v4501, 0.0
      %v4537 = vsel %vm4524, %v4502, 0.0
      %v4538 = vsel %vm4524, %v4503, 0.0
      %v4539 = vsel %vm4524, %v4504, 0.0
      %v4540 = vsel %vm4524, %v4505, 0.0
      %v4541 = vsel %vm4524, %v4506, 0.0
      %v4542 = vsel %vm4524, %v4507, 0.0
      %v4543 = vsel %vm4524, %v4508, 0.0
      %v4544 = vsel %vm4524, %v4509, 0.0
      %v4545 = vsel %vm4524, %v4510, 0.0
      %v4546 = vsel %vm4524, %v4511, 0.0
      %v4547 = vsel %vm4524, %v4512, 0.0
      %v4548 = vsel %vm4524, %v4513, 0.0
      %v4549 = vsel %vm4524, %v4514, 0.0
      %v4550 = vsel %vm4524, %v4515, 0.0
      %v4551 = vsel %vm4524, %v4516, 0.0
      %v4552 = vsel %vm4524, %v4517, 0.0
      %v4553 = vsel %vm4524, %v4518, 0.0
      %v4554 = vsel %vm4524, %v4519, 0.0
      %v4555 = vsel %vm4524, %v4520, 0.0
      %v4556 = vsel %vm4524, %v4521, 0.0
      %v4557 = vmul.f32 %v4525, 1.442695
      %v4558 = vpow.pop %v4557
      %v4559 = vmul.f32 %v4526, 1.442695
      %v4560 = vpow.pop %v4559
      %v4561 = vmul.f32 %v4527, 1.442695
      %v4562 = vpow.pop %v4561
      %v4563 = vmul.f32 %v4528, 1.442695
      %v4564 = vpow.pop %v4563
      %v4565 = vmul.f32 %v4529, 1.442695
      %v4566 = vpow.pop %v4565
      %v4567 = vmul.f32 %v4530, 1.442695
      %v4568 = vpow.pop %v4567
      %v4569 = vmul.f32 %v4531, 1.442695
      %v4570 = vpow.pop %v4569
      %v4571 = vmul.f32 %v4532, 1.442695
      %v4572 = vpow.pop %v4571
      %v4573 = vmul.f32 %v4533, 1.442695
      %v4574 = vpow.pop %v4573
      %v4575 = vmul.f32 %v4534, 1.442695
      %v4576 = vpow.pop %v4575
      %v4577 = vmul.f32 %v4535, 1.442695
      %v4578 = vpow.pop %v4577
      %v4579 = vmul.f32 %v4536, 1.442695
      %v4580 = vpow.pop %v4579
      %v4581 = vmul.f32 %v4537, 1.442695
      %v4582 = vpow.pop %v4581
      %v4583 = vmul.f32 %v4538, 1.442695
      %v4584 = vpow.pop %v4583
      %v4585 = vmul.f32 %v4539, 1.442695
      %v4586 = vpow.pop %v4585
      %v4587 = vmul.f32 %v4540, 1.442695
      %v4588 = vpow.pop %v4587
      %v4589 = vmul.f32 %v4541, 1.442695
      %v4590 = vpow.pop %v4589
      %v4591 = vmul.f32 %v4542, 1.442695
      %v4592 = vpow.pop %v4591
      %v4593 = vmul.f32 %v4543, 1.442695
      %v4594 = vpow.pop %v4593
      %v4595 = vmul.f32 %v4544, 1.442695
      %v4596 = vpow.pop %v4595
      %v4597 = vmul.f32 %v4545, 1.442695
      %v4598 = vpow.pop %v4597
      %v4599 = vmul.f32 %v4546, 1.442695
      %v4600 = vpow.pop %v4599
      %v4601 = vmul.f32 %v4547, 1.442695
      %v4602 = vpow.pop %v4601
      %v4603 = vmul.f32 %v4548, 1.442695
      %v4604 = vpow.pop %v4603
      %v4605 = vmul.f32 %v4549, 1.442695
      %v4606 = vpow.pop %v4605
      %v4607 = vmul.f32 %v4550, 1.442695
      %v4608 = vpow.pop %v4607
      %v4609 = vmul.f32 %v4551, 1.442695
      %v4610 = vpow.pop %v4609
      %v4611 = vmul.f32 %v4552, 1.442695
      %v4612 = vpow.pop %v4611
      %v4613 = vmul.f32 %v4553, 1.442695
      %v4614 = vpow.pop %v4613
      %v4615 = vmul.f32 %v4554, 1.442695
      %v4616 = vpow.pop %v4615
      %v4617 = vmul.f32 %v4555, 1.442695
      %v4618 = vpow.pop %v4617
      %v4619 = vmul.f32 %v4556, 1.442695
      %v4620 = vpow.pop %v4619
      %v4621 = vperm.slane %v3427, 0
      %v4622 = vmul.f32 %v4558, %v4621
      %v4623 = vmul.f32 %v4560, %v4621
      %v4624 = vmul.f32 %v4562, %v4621
      %v4625 = vmul.f32 %v4564, %v4621
      %v4626 = vmul.f32 %v4566, %v4621
      %v4627 = vmul.f32 %v4568, %v4621
      %v4628 = vmul.f32 %v4570, %v4621
      %v4629 = vmul.f32 %v4572, %v4621
      %v4630 = vmul.f32 %v4574, %v4621
      %v4631 = vmul.f32 %v4576, %v4621
      %v4632 = vmul.f32 %v4578, %v4621
      %v4633 = vmul.f32 %v4580, %v4621
      %v4634 = vmul.f32 %v4582, %v4621
      %v4635 = vmul.f32 %v4584, %v4621
      %v4636 = vmul.f32 %v4586, %v4621
      %v4637 = vmul.f32 %v4588, %v4621
      %v4638 = vmul.f32 %v4590, %v4621
      %v4639 = vmul.f32 %v4592, %v4621
      %v4640 = vmul.f32 %v4594, %v4621
      %v4641 = vmul.f32 %v4596, %v4621
      %v4642 = vmul.f32 %v4598, %v4621
      %v4643 = vmul.f32 %v4600, %v4621
      %v4644 = vmul.f32 %v4602, %v4621
      %v4645 = vmul.f32 %v4604, %v4621
      %v4646 = vmul.f32 %v4606, %v4621
      %v4647 = vmul.f32 %v4608, %v4621
      %v4648 = vmul.f32 %v4610, %v4621
      %v4649 = vmul.f32 %v4612, %v4621
      %v4650 = vmul.f32 %v4614, %v4621
      %v4651 = vmul.f32 %v4616, %v4621
      %v4652 = vmul.f32 %v4618, %v4621
      %v4653 = vmul.f32 %v4620, %v4621
      %4654 = vrot.lane.b32.xlu0 %v4622, 1
      %v4655 = vpop.permute.xlu0 %4654
      %4656 = vrot.lane.b32.xlu0 %v4623, 1
      %v4657 = vpop.permute.xlu0 %4656
      %4658 = vrot.lane.b32.xlu0 %v4624, 1
      %v4659 = vpop.permute.xlu0 %4658
      %4660 = vrot.lane.b32.xlu0 %v4625, 1
      %v4661 = vpop.permute.xlu0 %4660
      %4662 = vrot.lane.b32.xlu0 %v4626, 1
      %v4663 = vpop.permute.xlu0 %4662
      %4664 = vrot.lane.b32.xlu0 %v4627, 1
      %v4665 = vpop.permute.xlu0 %4664
      %4666 = vrot.lane.b32.xlu0 %v4628, 1
      %v4667 = vpop.permute.xlu0 %4666
      %4668 = vrot.lane.b32.xlu0 %v4629, 1
      %v4669 = vpop.permute.xlu0 %4668
      %4670 = vrot.lane.b32.xlu0 %v4630, 1
      %v4671 = vpop.permute.xlu0 %4670
      %4672 = vrot.lane.b32.xlu0 %v4631, 1
      %v4673 = vpop.permute.xlu0 %4672
      %4674 = vrot.lane.b32.xlu0 %v4632, 1
      %v4675 = vpop.permute.xlu0 %4674
      %4676 = vrot.lane.b32.xlu0 %v4633, 1
      %v4677 = vpop.permute.xlu0 %4676
      %4678 = vrot.lane.b32.xlu0 %v4634, 1
      %v4679 = vpop.permute.xlu0 %4678
      %4680 = vrot.lane.b32.xlu0 %v4635, 1
      %v4681 = vpop.permute.xlu0 %4680
      %4682 = vrot.lane.b32.xlu0 %v4636, 1
      %v4683 = vpop.permute.xlu0 %4682
      %4684 = vrot.lane.b32.xlu0 %v4637, 1
      %v4685 = vpop.permute.xlu0 %4684
      %4686 = vrot.lane.b32.xlu0 %v4638, 1
      %v4687 = vpop.permute.xlu0 %4686
      %4688 = vrot.lane.b32.xlu0 %v4639, 1
      %v4689 = vpop.permute.xlu0 %4688
      %4690 = vrot.lane.b32.xlu0 %v4640, 1
      %v4691 = vpop.permute.xlu0 %4690
      %4692 = vrot.lane.b32.xlu0 %v4641, 1
      %v4693 = vpop.permute.xlu0 %4692
      %4694 = vrot.lane.b32.xlu0 %v4642, 1
      %v4695 = vpop.permute.xlu0 %4694
      %4696 = vrot.lane.b32.xlu0 %v4643, 1
      %v4697 = vpop.permute.xlu0 %4696
      %4698 = vrot.lane.b32.xlu0 %v4644, 1
      %v4699 = vpop.permute.xlu0 %4698
      %4700 = vrot.lane.b32.xlu0 %v4645, 1
      %v4701 = vpop.permute.xlu0 %4700
      %4702 = vrot.lane.b32.xlu0 %v4646, 1
      %v4703 = vpop.permute.xlu0 %4702
      %4704 = vrot.lane.b32.xlu0 %v4647, 1
      %v4705 = vpop.permute.xlu0 %4704
      %4706 = vrot.lane.b32.xlu0 %v4648, 1
      %v4707 = vpop.permute.xlu0 %4706
      %4708 = vrot.lane.b32.xlu0 %v4649, 1
      %v4709 = vpop.permute.xlu0 %4708
      %4710 = vrot.lane.b32.xlu0 %v4650, 1
      %v4711 = vpop.permute.xlu0 %4710
      %4712 = vrot.lane.b32.xlu0 %v4651, 1
      %v4713 = vpop.permute.xlu0 %4712
      %4714 = vrot.lane.b32.xlu0 %v4652, 1
      %v4715 = vpop.permute.xlu0 %4714
      %4716 = vrot.lane.b32.xlu0 %v4653, 1
      %v4717 = vpop.permute.xlu0 %4716
      %v4718 = vadd.f32 %v4622, %v4655
      %v4719 = vadd.f32 %v4623, %v4657
      %v4720 = vadd.f32 %v4624, %v4659
      %v4721 = vadd.f32 %v4625, %v4661
      %v4722 = vadd.f32 %v4626, %v4663
      %v4723 = vadd.f32 %v4627, %v4665
      %v4724 = vadd.f32 %v4628, %v4667
      %v4725 = vadd.f32 %v4629, %v4669
      %v4726 = vadd.f32 %v4630, %v4671
      %v4727 = vadd.f32 %v4631, %v4673
      %v4728 = vadd.f32 %v4632, %v4675
      %v4729 = vadd.f32 %v4633, %v4677
      %v4730 = vadd.f32 %v4634, %v4679
      %v4731 = vadd.f32 %v4635, %v4681
      %v4732 = vadd.f32 %v4636, %v4683
      %v4733 = vadd.f32 %v4637, %v4685
      %v4734 = vadd.f32 %v4638, %v4687
      %v4735 = vadd.f32 %v4639, %v4689
      %v4736 = vadd.f32 %v4640, %v4691
      %v4737 = vadd.f32 %v4641, %v4693
      %v4738 = vadd.f32 %v4642, %v4695
      %v4739 = vadd.f32 %v4643, %v4697
      %v4740 = vadd.f32 %v4644, %v4699
      %v4741 = vadd.f32 %v4645, %v4701
      %v4742 = vadd.f32 %v4646, %v4703
      %v4743 = vadd.f32 %v4647, %v4705
      %v4744 = vadd.f32 %v4648, %v4707
      %v4745 = vadd.f32 %v4649, %v4709
      %v4746 = vadd.f32 %v4650, %v4711
      %v4747 = vadd.f32 %v4651, %v4713
      %v4748 = vadd.f32 %v4652, %v4715
      %v4749 = vadd.f32 %v4653, %v4717
      %4750 = vrot.lane.b32.xlu0 %v4622, 127
      %v4751 = vpop.permute.xlu0 %4750
      %4752 = vrot.lane.b32.xlu0 %v4623, 127
      %v4753 = vpop.permute.xlu0 %4752
      %4754 = vrot.lane.b32.xlu0 %v4624, 127
      %v4755 = vpop.permute.xlu0 %4754
      %4756 = vrot.lane.b32.xlu0 %v4625, 127
      %v4757 = vpop.permute.xlu0 %4756
      %4758 = vrot.lane.b32.xlu0 %v4626, 127
      %v4759 = vpop.permute.xlu0 %4758
      %4760 = vrot.lane.b32.xlu0 %v4627, 127
      %v4761 = vpop.permute.xlu0 %4760
      %4762 = vrot.lane.b32.xlu0 %v4628, 127
      %v4763 = vpop.permute.xlu0 %4762
      %4764 = vrot.lane.b32.xlu0 %v4629, 127
      %v4765 = vpop.permute.xlu0 %4764
      %4766 = vrot.lane.b32.xlu0 %v4630, 127
      %v4767 = vpop.permute.xlu0 %4766
      %4768 = vrot.lane.b32.xlu0 %v4631, 127
      %v4769 = vpop.permute.xlu0 %4768
      %4770 = vrot.lane.b32.xlu0 %v4632, 127
      %v4771 = vpop.permute.xlu0 %4770
      %4772 = vrot.lane.b32.xlu0 %v4633, 127
      %v4773 = vpop.permute.xlu0 %4772
      %4774 = vrot.lane.b32.xlu0 %v4634, 127
      %v4775 = vpop.permute.xlu0 %4774
      %4776 = vrot.lane.b32.xlu0 %v4635, 127
      %v4777 = vpop.permute.xlu0 %4776
      %4778 = vrot.lane.b32.xlu0 %v4636, 127
      %v4779 = vpop.permute.xlu0 %4778
      %4780 = vrot.lane.b32.xlu0 %v4637, 127
      %v4781 = vpop.permute.xlu0 %4780
      %4782 = vrot.lane.b32.xlu0 %v4638, 127
      %v4783 = vpop.permute.xlu0 %4782
      %4784 = vrot.lane.b32.xlu0 %v4639, 127
      %v4785 = vpop.permute.xlu0 %4784
      %4786 = vrot.lane.b32.xlu0 %v4640, 127
      %v4787 = vpop.permute.xlu0 %4786
      %4788 = vrot.lane.b32.xlu0 %v4641, 127
      %v4789 = vpop.permute.xlu0 %4788
      %4790 = vrot.lane.b32.xlu0 %v4642, 127
      %v4791 = vpop.permute.xlu0 %4790
      %4792 = vrot.lane.b32.xlu0 %v4643, 127
      %v4793 = vpop.permute.xlu0 %4792
      %4794 = vrot.lane.b32.xlu0 %v4644, 127
      %v4795 = vpop.permute.xlu0 %4794
      %4796 = vrot.lane.b32.xlu0 %v4645, 127
      %v4797 = vpop.permute.xlu0 %4796
      %4798 = vrot.lane.b32.xlu0 %v4646, 127
      %v4799 = vpop.permute.xlu0 %4798
      %4800 = vrot.lane.b32.xlu0 %v4647, 127
      %v4801 = vpop.permute.xlu0 %4800
      %4802 = vrot.lane.b32.xlu0 %v4648, 127
      %v4803 = vpop.permute.xlu0 %4802
      %4804 = vrot.lane.b32.xlu0 %v4649, 127
      %v4805 = vpop.permute.xlu0 %4804
      %4806 = vrot.lane.b32.xlu0 %v4650, 127
      %v4807 = vpop.permute.xlu0 %4806
      %4808 = vrot.lane.b32.xlu0 %v4651, 127
      %v4809 = vpop.permute.xlu0 %4808
      %4810 = vrot.lane.b32.xlu0 %v4652, 127
      %v4811 = vpop.permute.xlu0 %4810
      %4812 = vrot.lane.b32.xlu0 %v4653, 127
      %v4813 = vpop.permute.xlu0 %4812
      %v4814 = vadd.f32 %v4718, %v4751
      %v4815 = vadd.f32 %v4719, %v4753
      %v4816 = vadd.f32 %v4720, %v4755
      %v4817 = vadd.f32 %v4721, %v4757
      %v4818 = vadd.f32 %v4722, %v4759
      %v4819 = vadd.f32 %v4723, %v4761
      %v4820 = vadd.f32 %v4724, %v4763
      %v4821 = vadd.f32 %v4725, %v4765
      %v4822 = vadd.f32 %v4726, %v4767
      %v4823 = vadd.f32 %v4727, %v4769
      %v4824 = vadd.f32 %v4728, %v4771
      %v4825 = vadd.f32 %v4729, %v4773
      %v4826 = vadd.f32 %v4730, %v4775
      %v4827 = vadd.f32 %v4731, %v4777
      %v4828 = vadd.f32 %v4732, %v4779
      %v4829 = vadd.f32 %v4733, %v4781
      %v4830 = vadd.f32 %v4734, %v4783
      %v4831 = vadd.f32 %v4735, %v4785
      %v4832 = vadd.f32 %v4736, %v4787
      %v4833 = vadd.f32 %v4737, %v4789
      %v4834 = vadd.f32 %v4738, %v4791
      %v4835 = vadd.f32 %v4739, %v4793
      %v4836 = vadd.f32 %v4740, %v4795
      %v4837 = vadd.f32 %v4741, %v4797
      %v4838 = vadd.f32 %v4742, %v4799
      %v4839 = vadd.f32 %v4743, %v4801
      %v4840 = vadd.f32 %v4744, %v4803
      %v4841 = vadd.f32 %v4745, %v4805
      %v4842 = vadd.f32 %v4746, %v4807
      %v4843 = vadd.f32 %v4747, %v4809
      %v4844 = vadd.f32 %v4748, %v4811
      %v4845 = vadd.f32 %v4749, %v4813
      %4846 = vrot.lane.b32.xlu0 %v4622, 2
      %v4847 = vpop.permute.xlu0 %4846
      %4848 = vrot.lane.b32.xlu0 %v4623, 2
      %v4849 = vpop.permute.xlu0 %4848
      %4850 = vrot.lane.b32.xlu0 %v4624, 2
      %v4851 = vpop.permute.xlu0 %4850
      %4852 = vrot.lane.b32.xlu0 %v4625, 2
      %v4853 = vpop.permute.xlu0 %4852
      %4854 = vrot.lane.b32.xlu0 %v4626, 2
      %v4855 = vpop.permute.xlu0 %4854
      %4856 = vrot.lane.b32.xlu0 %v4627, 2
      %v4857 = vpop.permute.xlu0 %4856
      %4858 = vrot.lane.b32.xlu0 %v4628, 2
      %v4859 = vpop.permute.xlu0 %4858
      %4860 = vrot.lane.b32.xlu0 %v4629, 2
      %v4861 = vpop.permute.xlu0 %4860
      %4862 = vrot.lane.b32.xlu0 %v4630, 2
      %v4863 = vpop.permute.xlu0 %4862
      %4864 = vrot.lane.b32.xlu0 %v4631, 2
      %v4865 = vpop.permute.xlu0 %4864
      %4866 = vrot.lane.b32.xlu0 %v4632, 2
      %v4867 = vpop.permute.xlu0 %4866
      %4868 = vrot.lane.b32.xlu0 %v4633, 2
      %v4869 = vpop.permute.xlu0 %4868
      %4870 = vrot.lane.b32.xlu0 %v4634, 2
      %v4871 = vpop.permute.xlu0 %4870
      %4872 = vrot.lane.b32.xlu0 %v4635, 2
      %v4873 = vpop.permute.xlu0 %4872
      %4874 = vrot.lane.b32.xlu0 %v4636, 2
      %v4875 = vpop.permute.xlu0 %4874
      %4876 = vrot.lane.b32.xlu0 %v4637, 2
      %v4877 = vpop.permute.xlu0 %4876
      %4878 = vrot.lane.b32.xlu0 %v4638, 2
      %v4879 = vpop.permute.xlu0 %4878
      %4880 = vrot.lane.b32.xlu0 %v4639, 2
      %v4881 = vpop.permute.xlu0 %4880
      %4882 = vrot.lane.b32.xlu0 %v4640, 2
      %v4883 = vpop.permute.xlu0 %4882
      %4884 = vrot.lane.b32.xlu0 %v4641, 2
      %v4885 = vpop.permute.xlu0 %4884
      %4886 = vrot.lane.b32.xlu0 %v4642, 2
      %v4887 = vpop.permute.xlu0 %4886
      %4888 = vrot.lane.b32.xlu0 %v4643, 2
      %v4889 = vpop.permute.xlu0 %4888
      %4890 = vrot.lane.b32.xlu0 %v4644, 2
      %v4891 = vpop.permute.xlu0 %4890
      %4892 = vrot.lane.b32.xlu0 %v4645, 2
      %v4893 = vpop.permute.xlu0 %4892
      %4894 = vrot.lane.b32.xlu0 %v4646, 2
      %v4895 = vpop.permute.xlu0 %4894
      %4896 = vrot.lane.b32.xlu0 %v4647, 2
      %v4897 = vpop.permute.xlu0 %4896
      %4898 = vrot.lane.b32.xlu0 %v4648, 2
      %v4899 = vpop.permute.xlu0 %4898
      %4900 = vrot.lane.b32.xlu0 %v4649, 2
      %v4901 = vpop.permute.xlu0 %4900
      %4902 = vrot.lane.b32.xlu0 %v4650, 2
      %v4903 = vpop.permute.xlu0 %4902
      %4904 = vrot.lane.b32.xlu0 %v4651, 2
      %v4905 = vpop.permute.xlu0 %4904
      %4906 = vrot.lane.b32.xlu0 %v4652, 2
      %v4907 = vpop.permute.xlu0 %4906
      %4908 = vrot.lane.b32.xlu0 %v4653, 2
      %v4909 = vpop.permute.xlu0 %4908
      %v4910 = vadd.f32 %v4814, %v4847
      %v4911 = vadd.f32 %v4815, %v4849
      %v4912 = vadd.f32 %v4816, %v4851
      %v4913 = vadd.f32 %v4817, %v4853
      %v4914 = vadd.f32 %v4818, %v4855
      %v4915 = vadd.f32 %v4819, %v4857
      %v4916 = vadd.f32 %v4820, %v4859
      %v4917 = vadd.f32 %v4821, %v4861
      %v4918 = vadd.f32 %v4822, %v4863
      %v4919 = vadd.f32 %v4823, %v4865
      %v4920 = vadd.f32 %v4824, %v4867
      %v4921 = vadd.f32 %v4825, %v4869
      %v4922 = vadd.f32 %v4826, %v4871
      %v4923 = vadd.f32 %v4827, %v4873
      %v4924 = vadd.f32 %v4828, %v4875
      %v4925 = vadd.f32 %v4829, %v4877
      %v4926 = vadd.f32 %v4830, %v4879
      %v4927 = vadd.f32 %v4831, %v4881
      %v4928 = vadd.f32 %v4832, %v4883
      %v4929 = vadd.f32 %v4833, %v4885
      %v4930 = vadd.f32 %v4834, %v4887
      %v4931 = vadd.f32 %v4835, %v4889
      %v4932 = vadd.f32 %v4836, %v4891
      %v4933 = vadd.f32 %v4837, %v4893
      %v4934 = vadd.f32 %v4838, %v4895
      %v4935 = vadd.f32 %v4839, %v4897
      %v4936 = vadd.f32 %v4840, %v4899
      %v4937 = vadd.f32 %v4841, %v4901
      %v4938 = vadd.f32 %v4842, %v4903
      %v4939 = vadd.f32 %v4843, %v4905
      %v4940 = vadd.f32 %v4844, %v4907
      %v4941 = vadd.f32 %v4845, %v4909
      %4942 = vrot.lane.b32.xlu0 %v4622, 126
      %v4943 = vpop.permute.xlu0 %4942
      %4944 = vrot.lane.b32.xlu0 %v4623, 126
      %v4945 = vpop.permute.xlu0 %4944
      %4946 = vrot.lane.b32.xlu0 %v4624, 126
      %v4947 = vpop.permute.xlu0 %4946
      %4948 = vrot.lane.b32.xlu0 %v4625, 126
      %v4949 = vpop.permute.xlu0 %4948
      %4950 = vrot.lane.b32.xlu0 %v4626, 126
      %v4951 = vpop.permute.xlu0 %4950
      %4952 = vrot.lane.b32.xlu0 %v4627, 126
      %v4953 = vpop.permute.xlu0 %4952
      %4954 = vrot.lane.b32.xlu0 %v4628, 126
      %v4955 = vpop.permute.xlu0 %4954
      %4956 = vrot.lane.b32.xlu0 %v4629, 126
      %v4957 = vpop.permute.xlu0 %4956
      %4958 = vrot.lane.b32.xlu0 %v4630, 126
      %v4959 = vpop.permute.xlu0 %4958
      %4960 = vrot.lane.b32.xlu0 %v4631, 126
      %v4961 = vpop.permute.xlu0 %4960
      %4962 = vrot.lane.b32.xlu0 %v4632, 126
      %v4963 = vpop.permute.xlu0 %4962
      %4964 = vrot.lane.b32.xlu0 %v4633, 126
      %v4965 = vpop.permute.xlu0 %4964
      %4966 = vrot.lane.b32.xlu0 %v4634, 126
      %v4967 = vpop.permute.xlu0 %4966
      %4968 = vrot.lane.b32.xlu0 %v4635, 126
      %v4969 = vpop.permute.xlu0 %4968
      %4970 = vrot.lane.b32.xlu0 %v4636, 126
      %v4971 = vpop.permute.xlu0 %4970
      %4972 = vrot.lane.b32.xlu0 %v4637, 126
      %v4973 = vpop.permute.xlu0 %4972
      %4974 = vrot.lane.b32.xlu0 %v4638, 126
      %v4975 = vpop.permute.xlu0 %4974
      %4976 = vrot.lane.b32.xlu0 %v4639, 126
      %v4977 = vpop.permute.xlu0 %4976
      %4978 = vrot.lane.b32.xlu0 %v4640, 126
      %v4979 = vpop.permute.xlu0 %4978
      %4980 = vrot.lane.b32.xlu0 %v4641, 126
      %v4981 = vpop.permute.xlu0 %4980
      %4982 = vrot.lane.b32.xlu0 %v4642, 126
      %v4983 = vpop.permute.xlu0 %4982
      %4984 = vrot.lane.b32.xlu0 %v4643, 126
      %v4985 = vpop.permute.xlu0 %4984
      %4986 = vrot.lane.b32.xlu0 %v4644, 126
      %v4987 = vpop.permute.xlu0 %4986
      %4988 = vrot.lane.b32.xlu0 %v4645, 126
      %v4989 = vpop.permute.xlu0 %4988
      %4990 = vrot.lane.b32.xlu0 %v4646, 126
      %v4991 = vpop.permute.xlu0 %4990
      %4992 = vrot.lane.b32.xlu0 %v4647, 126
      %v4993 = vpop.permute.xlu0 %4992
      %4994 = vrot.lane.b32.xlu0 %v4648, 126
      %v4995 = vpop.permute.xlu0 %4994
      %4996 = vrot.lane.b32.xlu0 %v4649, 126
      %v4997 = vpop.permute.xlu0 %4996
      %4998 = vrot.lane.b32.xlu0 %v4650, 126
      %v4999 = vpop.permute.xlu0 %4998
      %5000 = vrot.lane.b32.xlu0 %v4651, 126
      %v5001 = vpop.permute.xlu0 %5000
      %5002 = vrot.lane.b32.xlu0 %v4652, 126
      %v5003 = vpop.permute.xlu0 %5002
      %5004 = vrot.lane.b32.xlu0 %v4653, 126
      %v5005 = vpop.permute.xlu0 %5004
      %v5006 = vadd.f32 %v4910, %v4943
      %v5007 = vadd.f32 %v4911, %v4945
      %v5008 = vadd.f32 %v4912, %v4947
      %v5009 = vadd.f32 %v4913, %v4949
      %v5010 = vadd.f32 %v4914, %v4951
      %v5011 = vadd.f32 %v4915, %v4953
      %v5012 = vadd.f32 %v4916, %v4955
      %v5013 = vadd.f32 %v4917, %v4957
      %v5014 = vadd.f32 %v4918, %v4959
      %v5015 = vadd.f32 %v4919, %v4961
      %v5016 = vadd.f32 %v4920, %v4963
      %v5017 = vadd.f32 %v4921, %v4965
      %v5018 = vadd.f32 %v4922, %v4967
      %v5019 = vadd.f32 %v4923, %v4969
      %v5020 = vadd.f32 %v4924, %v4971
      %v5021 = vadd.f32 %v4925, %v4973
      %v5022 = vadd.f32 %v4926, %v4975
      %v5023 = vadd.f32 %v4927, %v4977
      %v5024 = vadd.f32 %v4928, %v4979
      %v5025 = vadd.f32 %v4929, %v4981
      %v5026 = vadd.f32 %v4930, %v4983
      %v5027 = vadd.f32 %v4931, %v4985
      %v5028 = vadd.f32 %v4932, %v4987
      %v5029 = vadd.f32 %v4933, %v4989
      %v5030 = vadd.f32 %v4934, %v4991
      %v5031 = vadd.f32 %v4935, %v4993
      %v5032 = vadd.f32 %v4936, %v4995
      %v5033 = vadd.f32 %v4937, %v4997
      %v5034 = vadd.f32 %v4938, %v4999
      %v5035 = vadd.f32 %v4939, %v5001
      %v5036 = vadd.f32 %v4940, %v5003
      %v5037 = vadd.f32 %v4941, %v5005
      %v5038 = vsub.f32 1.0, %v3427
      %v5039 = vperm.slane %v5038, 0
      %v5040 = vadd.f32 %v5006, %v5039
      %v5041 = vadd.f32 %v5007, %v5039
      %v5042 = vadd.f32 %v5008, %v5039
      %v5043 = vadd.f32 %v5009, %v5039
      %v5044 = vadd.f32 %v5010, %v5039
      %v5045 = vadd.f32 %v5011, %v5039
      %v5046 = vadd.f32 %v5012, %v5039
      %v5047 = vadd.f32 %v5013, %v5039
      %v5048 = vadd.f32 %v5014, %v5039
      %v5049 = vadd.f32 %v5015, %v5039
      %v5050 = vadd.f32 %v5016, %v5039
      %v5051 = vadd.f32 %v5017, %v5039
      %v5052 = vadd.f32 %v5018, %v5039
      %v5053 = vadd.f32 %v5019, %v5039
      %v5054 = vadd.f32 %v5020, %v5039
      %v5055 = vadd.f32 %v5021, %v5039
      %v5056 = vadd.f32 %v5022, %v5039
      %v5057 = vadd.f32 %v5023, %v5039
      %v5058 = vadd.f32 %v5024, %v5039
      %v5059 = vadd.f32 %v5025, %v5039
      %v5060 = vadd.f32 %v5026, %v5039
      %v5061 = vadd.f32 %v5027, %v5039
      %v5062 = vadd.f32 %v5028, %v5039
      %v5063 = vadd.f32 %v5029, %v5039
      %v5064 = vadd.f32 %v5030, %v5039
      %v5065 = vadd.f32 %v5031, %v5039
      %v5066 = vadd.f32 %v5032, %v5039
      %v5067 = vadd.f32 %v5033, %v5039
      %v5068 = vadd.f32 %v5034, %v5039
      %v5069 = vadd.f32 %v5035, %v5039
      %v5070 = vadd.f32 %v5036, %v5039
      %v5071 = vadd.f32 %v5037, %v5039
      %v5072 = vrcp.pop %v5040
      %v5073 = vrcp.pop %v5041
      %v5074 = vrcp.pop %v5042
      %v5075 = vrcp.pop %v5043
      %v5076 = vrcp.pop %v5044
      %v5077 = vrcp.pop %v5045
      %v5078 = vrcp.pop %v5046
      %v5079 = vrcp.pop %v5047
      %v5080 = vrcp.pop %v5048
      %v5081 = vrcp.pop %v5049
      %v5082 = vrcp.pop %v5050
      %v5083 = vrcp.pop %v5051
      %v5084 = vrcp.pop %v5052
      %v5085 = vrcp.pop %v5053
      %v5086 = vrcp.pop %v5054
      %v5087 = vrcp.pop %v5055
      %v5088 = vrcp.pop %v5056
      %v5089 = vrcp.pop %v5057
      %v5090 = vrcp.pop %v5058
      %v5091 = vrcp.pop %v5059
      %v5092 = vrcp.pop %v5060
      %v5093 = vrcp.pop %v5061
      %v5094 = vrcp.pop %v5062
      %v5095 = vrcp.pop %v5063
      %v5096 = vrcp.pop %v5064
      %v5097 = vrcp.pop %v5065
      %v5098 = vrcp.pop %v5066
      %v5099 = vrcp.pop %v5067
      %v5100 = vrcp.pop %v5068
      %v5101 = vrcp.pop %v5069
      %v5102 = vrcp.pop %v5070
      %v5103 = vrcp.pop %v5071
      %v5104 = vmul.f32 %v4622, %v5072
      %v5105 = vmul.f32 %v4623, %v5073
      %v5106 = vmul.f32 %v4624, %v5074
      %v5107 = vmul.f32 %v4625, %v5075
      %v5108 = vmul.f32 %v4626, %v5076
      %v5109 = vmul.f32 %v4627, %v5077
      %v5110 = vmul.f32 %v4628, %v5078
      %v5111 = vmul.f32 %v4629, %v5079
      %v5112 = vmul.f32 %v4630, %v5080
      %v5113 = vmul.f32 %v4631, %v5081
      %v5114 = vmul.f32 %v4632, %v5082
      %v5115 = vmul.f32 %v4633, %v5083
      %v5116 = vmul.f32 %v4634, %v5084
      %v5117 = vmul.f32 %v4635, %v5085
      %v5118 = vmul.f32 %v4636, %v5086
      %v5119 = vmul.f32 %v4637, %v5087
      %v5120 = vmul.f32 %v4638, %v5088
      %v5121 = vmul.f32 %v4639, %v5089
      %v5122 = vmul.f32 %v4640, %v5090
      %v5123 = vmul.f32 %v4641, %v5091
      %v5124 = vmul.f32 %v4642, %v5092
      %v5125 = vmul.f32 %v4643, %v5093
      %v5126 = vmul.f32 %v4644, %v5094
      %v5127 = vmul.f32 %v4645, %v5095
      %v5128 = vmul.f32 %v4646, %v5096
      %v5129 = vmul.f32 %v4647, %v5097
      %v5130 = vmul.f32 %v4648, %v5098
      %v5131 = vmul.f32 %v4649, %v5099
      %v5132 = vmul.f32 %v4650, %v5100
      %v5133 = vmul.f32 %v4651, %v5101
      %v5134 = vmul.f32 %v4652, %v5102
      %v5135 = vmul.f32 %v4653, %v5103
      %v5136 = vperm.slane %v3425, 0
      %v5137 = vmul.f32 %v5136, %v3571
      %v5138 = vmul.f32 %v5136, %v3586
      %v5139 = vmul.f32 %v5136, %v3601
      %v5140 = vmul.f32 %v5136, %v3616
      %v5141 = vmul.f32 %v5136, %v3631
      %v5142 = vmul.f32 %v5136, %v3646
      %v5143 = vmul.f32 %v5136, %v3661
      %v5144 = vmul.f32 %v5136, %v3676
      %v5145 = vmul.f32 %v5136, %v3691
      %v5146 = vmul.f32 %v5136, %v3706
      %v5147 = vmul.f32 %v5136, %v3721
      %v5148 = vmul.f32 %v5136, %v3736
      %v5149 = vmul.f32 %v5136, %v3751
      %v5150 = vmul.f32 %v5136, %v3766
      %v5151 = vmul.f32 %v5136, %v3781
      %v5152 = vmul.f32 %v5136, %v3796
      %v5153 = vmul.f32 %v5136, %v3811
      %v5154 = vmul.f32 %v5136, %v3826
      %v5155 = vmul.f32 %v5136, %v3841
      %v5156 = vmul.f32 %v5136, %v3856
      %v5157 = vmul.f32 %v5136, %v3871
      %v5158 = vmul.f32 %v5136, %v3886
      %v5159 = vmul.f32 %v5136, %v3901
      %v5160 = vmul.f32 %v5136, %v3916
      %v5161 = vmul.f32 %v5136, %v3931
      %v5162 = vmul.f32 %v5136, %v3946
      %v5163 = vmul.f32 %v5136, %v3961
      %v5164 = vmul.f32 %v5136, %v3976
      %v5165 = vmul.f32 %v5136, %v3991
      %v5166 = vmul.f32 %v5136, %v4006
      %v5167 = vmul.f32 %v5136, %v4021
      %v5168 = vmul.f32 %v5136, %v4036
      %v5169 = vperm.slane %v3426, 0
      %v5170 = vmul.f32 %v5169, %v4558
      %v5171 = vmul.f32 %v5169, %v4560
      %v5172 = vmul.f32 %v5169, %v4562
      %v5173 = vmul.f32 %v5169, %v4564
      %v5174 = vmul.f32 %v5169, %v4566
      %v5175 = vmul.f32 %v5169, %v4568
      %v5176 = vmul.f32 %v5169, %v4570
      %v5177 = vmul.f32 %v5169, %v4572
      %v5178 = vmul.f32 %v5169, %v4574
      %v5179 = vmul.f32 %v5169, %v4576
      %v5180 = vmul.f32 %v5169, %v4578
      %v5181 = vmul.f32 %v5169, %v4580
      %v5182 = vmul.f32 %v5169, %v4582
      %v5183 = vmul.f32 %v5169, %v4584
      %v5184 = vmul.f32 %v5169, %v4586
      %v5185 = vmul.f32 %v5169, %v4588
      %v5186 = vmul.f32 %v5169, %v4590
      %v5187 = vmul.f32 %v5169, %v4592
      %v5188 = vmul.f32 %v5169, %v4594
      %v5189 = vmul.f32 %v5169, %v4596
      %v5190 = vmul.f32 %v5169, %v4598
      %v5191 = vmul.f32 %v5169, %v4600
      %v5192 = vmul.f32 %v5169, %v4602
      %v5193 = vmul.f32 %v5169, %v4604
      %v5194 = vmul.f32 %v5169, %v4606
      %v5195 = vmul.f32 %v5169, %v4608
      %v5196 = vmul.f32 %v5169, %v4610
      %v5197 = vmul.f32 %v5169, %v4612
      %v5198 = vmul.f32 %v5169, %v4614
      %v5199 = vmul.f32 %v5169, %v4616
      %v5200 = vmul.f32 %v5169, %v4618
      %v5201 = vmul.f32 %v5169, %v4620
      %v5202 = vadd.f32 %v5137, %v5170
      %v5203 = vadd.f32 %v5138, %v5171
      %v5204 = vadd.f32 %v5139, %v5172
      %v5205 = vadd.f32 %v5140, %v5173
      %v5206 = vadd.f32 %v5141, %v5174
      %v5207 = vadd.f32 %v5142, %v5175
      %v5208 = vadd.f32 %v5143, %v5176
      %v5209 = vadd.f32 %v5144, %v5177
      %v5210 = vadd.f32 %v5145, %v5178
      %v5211 = vadd.f32 %v5146, %v5179
      %v5212 = vadd.f32 %v5147, %v5180
      %v5213 = vadd.f32 %v5148, %v5181
      %v5214 = vadd.f32 %v5149, %v5182
      %v5215 = vadd.f32 %v5150, %v5183
      %v5216 = vadd.f32 %v5151, %v5184
      %v5217 = vadd.f32 %v5152, %v5185
      %v5218 = vadd.f32 %v5153, %v5186
      %v5219 = vadd.f32 %v5154, %v5187
      %v5220 = vadd.f32 %v5155, %v5188
      %v5221 = vadd.f32 %v5156, %v5189
      %v5222 = vadd.f32 %v5157, %v5190
      %v5223 = vadd.f32 %v5158, %v5191
      %v5224 = vadd.f32 %v5159, %v5192
      %v5225 = vadd.f32 %v5160, %v5193
      %v5226 = vadd.f32 %v5161, %v5194
      %v5227 = vadd.f32 %v5162, %v5195
      %v5228 = vadd.f32 %v5163, %v5196
      %v5229 = vadd.f32 %v5164, %v5197
      %v5230 = vadd.f32 %v5165, %v5198
      %v5231 = vadd.f32 %v5166, %v5199
      %v5232 = vadd.f32 %v5167, %v5200
      %v5233 = vadd.f32 %v5168, %v5201
      %v5234 = vadd.f32 %v5202, %v5104
      %v5235 = vadd.f32 %v5203, %v5105
      %v5236 = vadd.f32 %v5204, %v5106
      %v5237 = vadd.f32 %v5205, %v5107
      %v5238 = vadd.f32 %v5206, %v5108
      %v5239 = vadd.f32 %v5207, %v5109
      %v5240 = vadd.f32 %v5208, %v5110
      %v5241 = vadd.f32 %v5209, %v5111
      %v5242 = vadd.f32 %v5210, %v5112
      %v5243 = vadd.f32 %v5211, %v5113
      %v5244 = vadd.f32 %v5212, %v5114
      %v5245 = vadd.f32 %v5213, %v5115
      %v5246 = vadd.f32 %v5214, %v5116
      %v5247 = vadd.f32 %v5215, %v5117
      %v5248 = vadd.f32 %v5216, %v5118
      %v5249 = vadd.f32 %v5217, %v5119
      %v5250 = vadd.f32 %v5218, %v5120
      %v5251 = vadd.f32 %v5219, %v5121
      %v5252 = vadd.f32 %v5220, %v5122
      %v5253 = vadd.f32 %v5221, %v5123
      %v5254 = vadd.f32 %v5222, %v5124
      %v5255 = vadd.f32 %v5223, %v5125
      %v5256 = vadd.f32 %v5224, %v5126
      %v5257 = vadd.f32 %v5225, %v5127
      %v5258 = vadd.f32 %v5226, %v5128
      %v5259 = vadd.f32 %v5227, %v5129
      %v5260 = vadd.f32 %v5228, %v5130
      %v5261 = vadd.f32 %v5229, %v5131
      %v5262 = vadd.f32 %v5230, %v5132
      %v5263 = vadd.f32 %v5231, %v5133
      %v5264 = vadd.f32 %v5232, %v5134
      %v5265 = vadd.f32 %v5233, %v5135
      %v5266 = vld [vmem:[%s318] sm:$0xff]
      %v5267 = vld [vmem:[%s318 + $0x8] sm:$0xff]
      %v5268 = vld [vmem:[%s318 + $0x10] sm:$0xff]
      %v5269 = vld [vmem:[%s318 + $0x18] sm:$0xff]
      %v5270 = vld [vmem:[%s318 + $0x20] sm:$0xff]
      %v5271 = vld [vmem:[%s318 + $0x28] sm:$0xff]
      %v5272 = vld [vmem:[%s318 + $0x30] sm:$0xff]
      %v5273 = vld [vmem:[%s318 + $0x38] sm:$0xff]
      %v5274 = vld [vmem:[%s318 + $0x40] sm:$0xff]
      %v5275 = vld [vmem:[%s318 + $0x48] sm:$0xff]
      %v5276 = vld [vmem:[%s318 + $0x50] sm:$0xff]
      %v5277 = vld [vmem:[%s318 + $0x58] sm:$0xff]
      %v5278 = vld [vmem:[%s318 + $0x60] sm:$0xff]
      %v5279 = vld [vmem:[%s318 + $0x68] sm:$0xff]
      %v5280 = vld [vmem:[%s318 + $0x70] sm:$0xff]
      %v5281 = vld [vmem:[%s318 + $0x78] sm:$0xff]
      %v5282 = vld [vmem:[%s318 + $0x80] sm:$0xff]
      %v5283 = vld [vmem:[%s318 + $0x88] sm:$0xff]
      %v5284 = vld [vmem:[%s318 + $0x90] sm:$0xff]
      %v5285 = vld [vmem:[%s318 + $0x98] sm:$0xff]
      %v5286 = vld [vmem:[%s318 + $0xa0] sm:$0xff]
      %v5287 = vld [vmem:[%s318 + $0xa8] sm:$0xff]
      %v5288 = vld [vmem:[%s318 + $0xb0] sm:$0xff]
      %v5289 = vld [vmem:[%s318 + $0xb8] sm:$0xff]
      %v5290 = vld [vmem:[%s318 + $0xc0] sm:$0xff]
      %v5291 = vld [vmem:[%s318 + $0xc8] sm:$0xff]
      %v5292 = vld [vmem:[%s318 + $0xd0] sm:$0xff]
      %v5293 = vld [vmem:[%s318 + $0xd8] sm:$0xff]
      %v5294 = vld [vmem:[%s318 + $0xe0] sm:$0xff]
      %v5295 = vld [vmem:[%s318 + $0xe8] sm:$0xff]
      %v5296 = vld [vmem:[%s318 + $0xf0] sm:$0xff]
      %v5297 = vld [vmem:[%s318 + $0xf8] sm:$0xff]
      %v5298 = vadd.f32 %v5234, %v5266
      %v5299 = vadd.f32 %v5235, %v5267
      %v5300 = vadd.f32 %v5236, %v5268
      %v5301 = vadd.f32 %v5237, %v5269
      %v5302 = vadd.f32 %v5238, %v5270
      %v5303 = vadd.f32 %v5239, %v5271
      %v5304 = vadd.f32 %v5240, %v5272
      %v5305 = vadd.f32 %v5241, %v5273
      %v5306 = vadd.f32 %v5242, %v5274
      %v5307 = vadd.f32 %v5243, %v5275
      %v5308 = vadd.f32 %v5244, %v5276
      %v5309 = vadd.f32 %v5245, %v5277
      %v5310 = vadd.f32 %v5246, %v5278
      %v5311 = vadd.f32 %v5247, %v5279
      %v5312 = vadd.f32 %v5248, %v5280
      %v5313 = vadd.f32 %v5249, %v5281
      %v5314 = vadd.f32 %v5250, %v5282
      %v5315 = vadd.f32 %v5251, %v5283
      %v5316 = vadd.f32 %v5252, %v5284
      %v5317 = vadd.f32 %v5253, %v5285
      %v5318 = vadd.f32 %v5254, %v5286
      %v5319 = vadd.f32 %v5255, %v5287
      %v5320 = vadd.f32 %v5256, %v5288
      %v5321 = vadd.f32 %v5257, %v5289
      %v5322 = vadd.f32 %v5258, %v5290
      %v5323 = vadd.f32 %v5259, %v5291
      %v5324 = vadd.f32 %v5260, %v5292
      %v5325 = vadd.f32 %v5261, %v5293
      %v5326 = vadd.f32 %v5262, %v5294
      %v5327 = vadd.f32 %v5263, %v5295
      %v5328 = vadd.f32 %v5264, %v5296
      %v5329 = vadd.f32 %v5265, %v5297
      %5330 = vst [vmem:[%s325] sm:$0xff] %v5298
      %5331 = vst [vmem:[%s325 + $0x8] sm:$0xff] %v5299
      %5332 = vst [vmem:[%s325 + $0x10] sm:$0xff] %v5300
      %5333 = vst [vmem:[%s325 + $0x18] sm:$0xff] %v5301
      %5334 = vst [vmem:[%s325 + $0x20] sm:$0xff] %v5302
      %5335 = vst [vmem:[%s325 + $0x28] sm:$0xff] %v5303
      %5336 = vst [vmem:[%s325 + $0x30] sm:$0xff] %v5304
      %5337 = vst [vmem:[%s325 + $0x38] sm:$0xff] %v5305
      %5338 = vst [vmem:[%s325 + $0x40] sm:$0xff] %v5306
      %5339 = vst [vmem:[%s325 + $0x48] sm:$0xff] %v5307
      %5340 = vst [vmem:[%s325 + $0x50] sm:$0xff] %v5308
      %5341 = vst [vmem:[%s325 + $0x58] sm:$0xff] %v5309
      %5342 = vst [vmem:[%s325 + $0x60] sm:$0xff] %v5310
      %5343 = vst [vmem:[%s325 + $0x68] sm:$0xff] %v5311
      %5344 = vst [vmem:[%s325 + $0x70] sm:$0xff] %v5312
      %5345 = vst [vmem:[%s325 + $0x78] sm:$0xff] %v5313
      %5346 = vst [vmem:[%s325 + $0x80] sm:$0xff] %v5314
      %5347 = vst [vmem:[%s325 + $0x88] sm:$0xff] %v5315
      %5348 = vst [vmem:[%s325 + $0x90] sm:$0xff] %v5316
      %5349 = vst [vmem:[%s325 + $0x98] sm:$0xff] %v5317
      %5350 = vst [vmem:[%s325 + $0xa0] sm:$0xff] %v5318
      %5351 = vst [vmem:[%s325 + $0xa8] sm:$0xff] %v5319
      %5352 = vst [vmem:[%s325 + $0xb0] sm:$0xff] %v5320
      %5353 = vst [vmem:[%s325 + $0xb8] sm:$0xff] %v5321
      %5354 = vst [vmem:[%s325 + $0xc0] sm:$0xff] %v5322
      %5355 = vst [vmem:[%s325 + $0xc8] sm:$0xff] %v5323
      %5356 = vst [vmem:[%s325 + $0xd0] sm:$0xff] %v5324
      %5357 = vst [vmem:[%s325 + $0xd8] sm:$0xff] %v5325
      %5358 = vst [vmem:[%s325 + $0xe0] sm:$0xff] %v5326
      %5359 = vst [vmem:[%s325 + $0xe8] sm:$0xff] %v5327
      %5360 = vst [vmem:[%s325 + $0xf0] sm:$0xff] %v5328
      %5361 = vst [vmem:[%s325 + $0xf8] sm:$0xff] %v5329
      %s5362 = sadd.s32 %s22, %s23
      %s5363 = smul.u32 32, %s5362
      %p5364 = scmp.lt.s32.totalorder %s5363, 63
      %s5365 = scalar_select %p5364, %s5363, 63
      %s5366 = smul.addr %s5365, 8
      %s5367 = scalar_lea.vmem %s7, %s5366
      // Predicated region
      $region49: #{region_output_layer.1} parent=47 // pred_check
        %p5368 = pneg %p209
      $region50: #{region_output_layer.1} parent=47 // pred_check_branch
        %5370 = sbr.rel (%p5368) target = $region52
      $region51: #{region_output_layer.1} parent=47 // pred_region
        %s5371 = sadd.s32 %s22, %s23
        %s5372 = smul.u32 32, %s5371
      $region52: #{region_output_layer.1} parent=47 // pred_fallthru
        _
    $region48: #{region_output_layer.1} parent=5 // pred_fallthru
      _
    %p5373 = scmp.le.s32.totalorder 2, %s13
    // Predicated region
    $region53: #{region_output_layer.1} parent=5 // pred_check
      %p5374 = pneg %p5373
    $region54: #{region_output_layer.1} parent=5 // pred_check_branch
      %5376 = sbr.rel (%p5374) target = $region56
    $region55: #{region_output_layer.1} parent=5 // pred_region
      %s5377 = ssub.s32 %s13, 2
      // Predicated region
      $region57: #{region_output_layer.1} parent=55 // pred_check
        %p5378 = pneg %p215
      $region58: #{region_output_layer.1} parent=55 // pred_check_branch
        %5380 = sbr.rel (%p5378) target = $region60
      $region59: #{region_output_layer.1} parent=55 // pred_region
        %s5381 = sadd.s32 %s24, %s25
        %s5382 = smul.u32 32, %s5381
        %p5383 = scmp.lt.s32.totalorder %s5382, 63
        %s5384 = scalar_select %p5383, %s5382, 63
        %s5385 = smul.addr %s5384, 8
        %s5386 = scalar_lea.vmem %s7, %s5385
      $region60: #{region_output_layer.1} parent=55 // pred_fallthru
        _
    $region56: #{region_output_layer.1} parent=5 // pred_fallthru
      _
  $region6: #{region_output_layer.1} parent=0 // loop_footer
    %s17 = sadd.s32 1, %s13
  $region7: #{region_output_layer.1} parent=0 // loop_footer_branch
    %12 = sbr.rel target = $region3
  $region8: #{region_output_layer.1} parent=0 // loop_exit
    _

</llo_original>
